<compile_context>
chip_gen: v5e
topology: v5e:2x2
jax: 0.10.0
libtpu: 0.0.40
codegen_flags: <defaults>
</compile_context>

<pallas_src>
import functools

import jax
import jax.numpy as jnp
from jax.experimental import pallas as pl
from jax.experimental.pallas import tpu as pltpu


def _ceil_to(x, m):
    return ((x + m - 1) // m) * m


# ----------------------------- Pallas kernel --------------------------------
def _res_bottleneck_kernel(x_ref, m_ref, w1_ref, b1_ref, w2_ref, b2_ref,
                           w3_ref, b3_ref, *rest, th, wpad, mm_dtype,
                           has_projection):
    """One (image, row-tile) step of the fused bottleneck.

    x_ref  : (1, (ho_pad+4)*wpad, cpi)  whole padded NHWC image, flat pixel rows
                                        (resident across the row-tile grid axis)
    m_ref  : ((ho_pad+4)*wpad, 1) f32   1.0 at interior pixels, 0.0 at the halo
    w1_ref : (cpi, cpm)   conv1 x BN1 folded            b1_ref: (1, cpm) f32
    w2_ref : (9, cpm, cpm) conv2 x BN2 folded (per tap) b2_ref: (1, cpm) f32
    w3_ref : (cpm, cpo)   conv3 x BN3 folded            b3_ref: (1, cpo) f32
    [wsc_ref: (cpi, cpo), bsc_ref: (1, cpo)]            projection shortcut only
    o_ref  : (1, th*wpad, cpo)          output row tile
    t_vmem : ((th+4)*wpad, cpm) f32     conv1 output for this tile + 4-row halo
    """
    if has_projection:
        wsc_ref, bsc_ref, o_ref, t_vmem = rest
    else:
        o_ref, t_vmem = rest

    cpo = o_ref.shape[-1]
    rows_out = th * wpad
    rows_win = (th + 4) * wpad
    tile = pl.program_id(1)
    start = pl.multiple_of(tile * rows_out, 8)       # window start (flat rows)

    # ---- conv1 (1x1; stride handled in the wrapper) + BN1 + ReLU --------------
    xin = x_ref[0, pl.ds(start, rows_win), :]
    z = jnp.dot(xin.astype(mm_dtype), w1_ref[...],
                preferred_element_type=jnp.float32) + b1_ref[...]
    # Zero the spatial halo explicitly (replaces the old indicator-channel
    # trick) so conv2's padding=1 sees exact zeros at the image border.
    t_vmem[...] = jnp.maximum(z, 0.0) * m_ref[pl.ds(start, rows_win), :]

    # ---- conv2 (3x3, padding=1): 9 shifted matmuls, f32 value accumulation ----
    # Shifts are static flat-row offsets into the VMEM-resident conv1 output
    # (no HBM im2col).  Statically unrolled so the LLO scheduler can interleave
    # MXU pushes with the VPU adds.
    # TODO(synk): for cmid=64 blocks, pack tap pairs along K to avoid the 64->128
    # padding waste; on v7x the taps could accumulate in the MRB via
    # pltpu.matmul_push_rhs / matmul_acc_lhs instead of VPU adds.
    acc = None
    for di in range(3):
        for dj in range(3):
            off = (di + 1) * wpad + (dj - 1)          # static python int
            win = t_vmem[off:off + rows_out, :].astype(mm_dtype)
            part = jnp.dot(win, w2_ref[3 * di + dj],
                           preferred_element_type=jnp.float32)
            acc = part if acc is None else acc + part
    y = jnp.maximum(acc + b2_ref[...], 0.0)           # BN2 bias + ReLU

    # ---- conv3 (1x1) + BN3 -----------------------------------------------------
    y = jnp.dot(y.astype(mm_dtype), w3_ref[...],
                preferred_element_type=jnp.float32) + b3_ref[...]

    # ---- shortcut + residual add + final ReLU ----------------------------------
    sc_start = pl.multiple_of(start + 2 * wpad, 8)    # interior rows of the tile
    xc = x_ref[0, pl.ds(sc_start, rows_out), :]
    if has_projection:
        sc = jnp.dot(xc.astype(mm_dtype), wsc_ref[...],
                     preferred_element_type=jnp.float32) + bsc_ref[...]
    else:
        # Identity shortcut: direct add of the input channels -- no MXU pass.
        sc = xc[:, :cpo].astype(jnp.float32)

    o_ref[...] = jnp.maximum(y + sc, 0.0).reshape(1, rows_out, cpo).astype(
        o_ref.dtype)


# ------------------------------- Glue / wrapper ------------------------------
def _fold_bn(w, b, bn, eps=1e-5):
    """Fold eval-mode BatchNorm into conv weight/bias (OIHW layout)."""
    gamma, beta, mean, var = bn
    s = gamma / jnp.sqrt(var + eps)
    return w * s[:, None, None, None], s * (b - mean) + beta


def _pick_vmem_limit():
    """Per-generation scoped-VMEM limit (review: don't cap at a flat 32 MB)."""
    try:
        kind = jax.devices()[0].device_kind.lower()
    except Exception:
        return 32 * 1024 * 1024
    if "v5" in kind or "v6" in kind:
        return 100 * 1024 * 1024          # 128 MiB physical
    return 48 * 1024 * 1024               # v7x (64 MiB physical) / unknown


@functools.partial(jax.jit, static_argnames=("stride", "compute_dtype"))
def res_bottleneck_forward(x_nchw, params, *, stride=1,
                           compute_dtype=jnp.bfloat16):
    conv1_w, conv1_b = params["conv1"]
    conv2_w, conv2_b = params["conv2"]
    conv3_w, conv3_b = params["conv3"]
    conv11 = params["conv11"]
    has_projection = conv11 is not None

    N, cin, _, _ = x_nchw.shape
    cmid = conv1_w.shape[0]
    cout = conv3_w.shape[0]

    # Lane-dense channel padding; no +1 indicator channel.
    cpi = _ceil_to(cin, 128)
    cpm = _ceil_to(cmid, 128)
    cpo = _ceil_to(cout, 128)

    # Fold eval-mode BatchNorm into the conv weights / biases.
    w1f, b1f = _fold_bn(conv1_w, conv1_b, params["bn1"])
    w2f, b2f = _fold_bn(conv2_w, conv2_b, params["bn2"])
    w3f, b3f = _fold_bn(conv3_w, conv3_b, params["bn3"])

    # conv1: (cmid, cin, 1, 1) -> (cpi, cpm);  bias is a separate (1, cpm) f32.
    w1_mat = jnp.zeros((cpi, cpm), jnp.float32).at[:cin, :cmid].set(
        w1f.reshape(cmid, cin).T).astype(compute_dtype)
    b1_vec = jnp.zeros((1, cpm), jnp.float32).at[0, :cmid].set(b1f)

    # conv2: (cmid, cmid, 3, 3) -> (9, cpm, cpm), one matrix per tap.
    w2_taps = jnp.transpose(w2f, (2, 3, 1, 0)).reshape(9, cmid, cmid)
    w2_mat = jnp.pad(w2_taps, ((0, 0), (0, cpm - cmid), (0, cpm - cmid))
                     ).astype(compute_dtype)
    b2_vec = jnp.zeros((1, cpm), jnp.float32).at[0, :cmid].set(b2f)

    # conv3: (cout, cmid, 1, 1) -> (cpm, cpo).
    w3_mat = jnp.zeros((cpm, cpo), jnp.float32).at[:cmid, :cout].set(
        w3f.reshape(cout, cmid).T).astype(compute_dtype)
    b3_vec = jnp.zeros((1, cpo), jnp.float32).at[0, :cout].set(b3f)

    if has_projection:
        wsc_w, wsc_b = conv11
        wsc_mat = jnp.zeros((cpi, cpo), jnp.float32).at[:cin, :cout].set(
            wsc_w.reshape(cout, cin).T).astype(compute_dtype)
        bsc_vec = jnp.zeros((1, cpo), jnp.float32).at[0, :cout].set(wsc_b)
    else:
        if cin != cout or stride != 1:
            raise ValueError("identity shortcut requires cin==cout, stride==1")

    # NCHW -> NHWC; the stride-s 1x1 convs only ever read the strided pixel
    # grid, so subsample once here and everything downstream is stride-1.
    x_nhwc = jnp.transpose(x_nchw, (0, 2, 3, 1))
    xs = x_nhwc[:, ::stride, ::stride, :]
    _, ho, wo, _ = xs.shape
    wpad = _ceil_to(wo + 2, 8)            # sublane-aligned padded width

    # Row-tile (M) size: ~256 pixel rows per grid step.  Keep tile starts
    # 16-row aligned so bf16 (packed) dynamic slices stay tile-aligned.
    th = max(1, min(ho, 256 // wpad))
    if (wpad % 16) and (th % 2) and th < ho:
        th += 1
    n_tiles = -(-ho // th)
    ho_pad = n_tiles * th

    # Zero padding: 2 halo rows top, 2 + (ho_pad-ho) bottom, 1 halo col left +
    # alignment cols right, channels -> cpi.  Flatten pixel rows for the kernel.
    xp = jnp.pad(xs, ((0, 0), (2, 2 + ho_pad - ho),
                      (1, wpad - wo - 1), (0, cpi - cin)))
    rows_in = (ho_pad + 4) * wpad
    xp = xp.reshape(N, rows_in, cpi).astype(compute_dtype)

    # Interior mask (1 at real pixels, 0 on the padded halo), built once on host
    # side of the kernel and kept VMEM-resident (constant index_map).
    pr = jnp.arange(ho_pad + 4)
    pc = jnp.arange(wpad)
    interior = (((pr >= 2) & (pr < ho + 2))[:, None]
                & ((pc >= 1) & (pc <= wo))[None, :])
    mask = interior.astype(jnp.float32).reshape(rows_in, 1)

    kernel = functools.partial(_res_bottleneck_kernel, th=th, wpad=wpad,
                               mm_dtype=compute_dtype,
                               has_projection=has_projection)

    const2 = lambda n, t: (0, 0)
    in_specs = [
        pl.BlockSpec((1, rows_in, cpi), lambda n, t: (n, 0, 0)),  # image
        pl.BlockSpec((rows_in, 1), const2),                       # halo mask
        pl.BlockSpec((cpi, cpm), const2),
        pl.BlockSpec((1, cpm), const2),
        pl.BlockSpec((9, cpm, cpm), lambda n, t: (0, 0, 0)),
        pl.BlockSpec((1, cpm), const2),
        pl.BlockSpec((cpm, cpo), const2),
        pl.BlockSpec((1, cpo), const2),
    ]
    args = [xp, mask, w1_mat, b1_vec, w2_mat, b2_vec, w3_mat, b3_vec]
    if has_projection:
        in_specs += [pl.BlockSpec((cpi, cpo), const2),
                     pl.BlockSpec((1, cpo), const2)]
        args += [wsc_mat, bsc_vec]

    out = pl.pallas_call(
        kernel,
        out_shape=jax.ShapeDtypeStruct((N, ho_pad * wpad, cpo), compute_dtype),
        grid=(N, n_tiles),
        in_specs=in_specs,
        out_specs=pl.BlockSpec((1, th * wpad, cpo), lambda n, t: (n, t, 0)),
        scratch_shapes=[
            pltpu.VMEM(((th + 4) * wpad, cpm), jnp.float32),  # conv1 out (tile)
        ],
        compiler_params=pltpu.CompilerParams(
            dimension_semantics=("parallel", "parallel"),
            vmem_limit_bytes=_pick_vmem_limit()),
    )(*args)

    # Drop halo columns / padded rows / channel padding, back to NCHW.
    out = out.reshape(N, ho_pad, wpad, cpo)[:, :ho, 1:1 + wo, :cout]
    return jnp.transpose(out, (0, 3, 1, 2)).astype(x_nchw.dtype)


# ------------------------------ Reference (JAX) ------------------------------
def res_bottleneck_reference(x, params, *, stride=1, eps=1e-5):
    def conv(inp, wb, s=1, p=0):
        w, b = wb
        dn = jax.lax.conv_dimension_numbers(inp.shape, w.shape,
                                            ("NCHW", "OIHW", "NCHW"))
        y = jax.lax.conv_general_dilated(
            inp, w, (s, s), [(p, p), (p, p)], dimension_numbers=dn,
            precision=jax.lax.Precision.HIGHEST)
        return y + b[None, :, None, None]

    def bn(y, prm):
        g, be, m, v = prm
        inv = g / jnp.sqrt(v + eps)
        return (inv[None, :, None, None] * (y - m[None, :, None, None])
                + be[None, :, None, None])

    y = jax.nn.relu(bn(conv(x, params["conv1"], stride, 0), params["bn1"]))
    y = jax.nn.relu(bn(conv(y, params["conv2"], 1, 1), params["bn2"]))
    y = bn(conv(y, params["conv3"], 1, 0), params["bn3"])
    sc = x if params["conv11"] is None else conv(x, params["conv11"], stride, 0)
    return jax.nn.relu(sc + y)


# ----------------------------------- Main ------------------------------------
if __name__ == "__main__":
    def make_params(key, cin, cmid, cout):
        ks = jax.random.split(key, 7)

        def conv_p(k, co, ci, kh, kw):
            kw_, kb_ = jax.random.split(k)
            return (0.1 * jax.random.normal(kw_, (co, ci, kh, kw), jnp.float32),
                    0.1 * jax.random.normal(kb_, (co,), jnp.float32))

        def bn_p(k, c):
            kg, kb, km, kv = jax.random.split(k, 4)
            return (1.0 + 0.1 * jax.random.normal(kg, (c,), jnp.float32),
                    0.1 * jax.random.normal(kb, (c,), jnp.float32),
                    0.1 * jax.random.normal(km, (c,), jnp.float32),
                    0.5 + jax.random.uniform(kv, (c,), jnp.float32))

        return {
            "conv1": conv_p(ks[0], cmid, cin, 1, 1),
            "bn1": bn_p(ks[1], cmid),
            "conv2": conv_p(ks[2], cmid, cmid, 3, 3),
            "bn2": bn_p(ks[3], cmid),
            "conv3": conv_p(ks[4], cout, cmid, 1, 1),
            "bn3": bn_p(ks[5], cout),
            "conv11": conv_p(ks[6], cout, cin, 1, 1) if cin != cout else None,
        }

    key = jax.random.PRNGKey(0)
    kx, kp = jax.random.split(key)

    # ResBottleNeck(in_channels=4, out_channels=8, median_channels=4), x:(2,4,16,16)
    x = jax.random.normal(kx, (2, 4, 16, 16), jnp.float32)

    configs = [
        # (cin, cmid, cout, stride, compute_dtype, tol)
        (4, 4, 8, 1, jnp.float32, 1e-3),    # projection shortcut, exact f32 path
        (4, 4, 4, 1, jnp.bfloat16, 5e-2),   # identity shortcut, bf16 MXU path
        (4, 4, 8, 2, jnp.bfloat16, 5e-2),   # strided projection, bf16 MXU path
    ]
    for i, (cin, cmid, cout, stride, cdt, tol) in enumerate(configs):
        params = make_params(jax.random.fold_in(kp, i), cin, cmid, cout)
        out = jax.block_until_ready(
            res_bottleneck_forward(x, params, stride=stride, compute_dtype=cdt))
        ref = jax.block_until_ready(
            res_bottleneck_reference(x, params, stride=stride))
        assert out.shape == ref.shape, (out.shape, ref.shape)
        err = float(jnp.max(jnp.abs(out - ref)))
        assert jnp.allclose(out, ref, atol=tol, rtol=tol), (
            f"mismatch in config {i}: max |err| = {err}")

    print("KERNEL_OK")
</pallas_src>

<mosaic_0001>
module attributes {stable_mosaic.version = 11 : i64} {
  func.func @_res_bottleneck_kernel(%arg0: i32, %arg1: i32, %arg2: memref<1x576x128xf32, #tpu.memory_space<vmem>>, %arg3: memref<576x1xf32, #tpu.memory_space<vmem>>, %arg4: memref<128x128xf32, #tpu.memory_space<vmem>>, %arg5: memref<1x128xf32, #tpu.memory_space<vmem>>, %arg6: memref<9x128x128xf32, #tpu.memory_space<vmem>>, %arg7: memref<1x128xf32, #tpu.memory_space<vmem>>, %arg8: memref<128x128xf32, #tpu.memory_space<vmem>>, %arg9: memref<1x128xf32, #tpu.memory_space<vmem>>, %arg10: memref<128x128xf32, #tpu.memory_space<vmem>>, %arg11: memref<1x128xf32, #tpu.memory_space<vmem>>, %arg12: memref<1x240x128xf32, #tpu.memory_space<vmem>>, %arg13: memref<336x128xf32, #tpu.memory_space<vmem>>) attributes {dimension_semantics = [#tpu.dimension_semantics<parallel>, #tpu.dimension_semantics<parallel>], iteration_bounds = array<i64: 2, 2>, scalar_prefetch = 0 : i64, scratch_operands = 1 : i64, tpu.core_type = #tpu.core_type<tc>, window_params = [{transform_indices = @transform_0, window_bounds = array<i64: 1, 576, 128>}, {pipeline_mode = #tpu.pipeline_mode<synchronous>, transform_indices = @transform_1, window_bounds = array<i64: 576, 1>}, {pipeline_mode = #tpu.pipeline_mode<synchronous>, transform_indices = @transform_2, window_bounds = array<i64: 128, 128>}, {pipeline_mode = #tpu.pipeline_mode<synchronous>, transform_indices = @transform_3, window_bounds = array<i64: 1, 128>}, {pipeline_mode = #tpu.pipeline_mode<synchronous>, transform_indices = @transform_4, window_bounds = array<i64: 9, 128, 128>}, {pipeline_mode = #tpu.pipeline_mode<synchronous>, transform_indices = @transform_5, window_bounds = array<i64: 1, 128>}, {pipeline_mode = #tpu.pipeline_mode<synchronous>, transform_indices = @transform_6, window_bounds = array<i64: 128, 128>}, {pipeline_mode = #tpu.pipeline_mode<synchronous>, transform_indices = @transform_7, window_bounds = array<i64: 1, 128>}, {pipeline_mode = #tpu.pipeline_mode<synchronous>, transform_indices = @transform_8, window_bounds = array<i64: 128, 128>}, {pipeline_mode = #tpu.pipeline_mode<synchronous>, transform_indices = @transform_9, window_bounds = array<i64: 1, 128>}, {transform_indices = @transform_10, window_bounds = array<i64: 1, 240, 128>}]} {
    %c240_i32 = arith.constant 240 : i32
    %0 = arith.muli %arg1, %c240_i32 : i32
    %1 = tpu.assume_multiple %0, 8 : i32
    %c0 = arith.constant 0 : index
    %2 = arith.index_cast %1 : i32 to index
    %c0_0 = arith.constant 0 : index
    %3 = vector.load %arg2[%c0, %2, %c0_0] : memref<1x576x128xf32, #tpu.memory_space<vmem>>, vector<1x336x128xf32>
    %4 = vector.shape_cast %3 : vector<1x336x128xf32> to vector<336x128xf32>
    %c0_1 = arith.constant 0 : index
    %c0_2 = arith.constant 0 : index
    %5 = vector.load %arg4[%c0_1, %c0_2] : memref<128x128xf32, #tpu.memory_space<vmem>>, vector<128x128xf32>
    %cst = arith.constant dense<0.000000e+00> : vector<336x128xf32>
    %6 = tpu.matmul %4, %5, %cst {dimension_numbers = #tpu.dot_dimension_numbers<[1], [0], [0], [1], [0, 0, 1, 1], [], []>} : vector<336x128xf32>, vector<128x128xf32>, vector<336x128xf32> -> vector<336x128xf32>
    %c0_3 = arith.constant 0 : index
    %c0_4 = arith.constant 0 : index
    %7 = vector.load %arg5[%c0_3, %c0_4] : memref<1x128xf32, #tpu.memory_space<vmem>>, vector<1x128xf32>
    %8 = vector.broadcast %7 : vector<1x128xf32> to vector<336x128xf32>
    %9 = arith.addf %6, %8 : vector<336x128xf32>
    %cst_5 = arith.constant 0.000000e+00 : f32
    %10 = vector.broadcast %cst_5 : f32 to vector<336x128xf32>
    %11 = arith.maximumf %9, %10 : vector<336x128xf32>
    %12 = arith.index_cast %1 : i32 to index
    %c0_6 = arith.constant 0 : index
    %13 = vector.load %arg3[%12, %c0_6] : memref<576x1xf32, #tpu.memory_space<vmem>>, vector<336x1xf32>
    %14 = vector.broadcast %13 : vector<336x1xf32> to vector<336x128xf32>
    %15 = arith.mulf %11, %14 : vector<336x128xf32>
    %c0_7 = arith.constant 0 : index
    %c0_8 = arith.constant 0 : index
    %16 = vector.load %arg13[%c0_7, %c0_8] : memref<336x128xf32, #tpu.memory_space<vmem>>, vector<336x128xf32>
    tpu.vector_store %arg13[%c0_7, %c0_8], %15 {strides = array<i32>} : memref<336x128xf32, #tpu.memory_space<vmem>>, vector<336x128xf32>,
    %c23 = arith.constant 23 : index
    %c0_9 = arith.constant 0 : index
    %17 = vector.load %arg13[%c23, %c0_9] : memref<336x128xf32, #tpu.memory_space<vmem>>, vector<240x128xf32>
    %c0_10 = arith.constant 0 : index
    %c0_11 = arith.constant 0 : index
    %c0_12 = arith.constant 0 : index
    %18 = vector.load %arg6[%c0_10, %c0_11, %c0_12] : memref<9x128x128xf32, #tpu.memory_space<vmem>>, vector<1x128x128xf32>
    %19 = vector.shape_cast %18 : vector<1x128x128xf32> to vector<128x128xf32>
    %cst_13 = arith.constant dense<0.000000e+00> : vector<240x128xf32>
    %20 = tpu.matmul %17, %19, %cst_13 {dimension_numbers = #tpu.dot_dimension_numbers<[1], [0], [0], [1], [0, 0, 1, 1], [], []>} : vector<240x128xf32>, vector<128x128xf32>, vector<240x128xf32> -> vector<240x128xf32>
    %c24 = arith.constant 24 : index
    %c0_14 = arith.constant 0 : index
    %21 = vector.load %arg13[%c24, %c0_14] : memref<336x128xf32, #tpu.memory_space<vmem>>, vector<240x128xf32>
    %c1 = arith.constant 1 : index
    %c0_15 = arith.constant 0 : index
    %c0_16 = arith.constant 0 : index
    %22 = vector.load %arg6[%c1, %c0_15, %c0_16] : memref<9x128x128xf32, #tpu.memory_space<vmem>>, vector<1x128x128xf32>
    %23 = vector.shape_cast %22 : vector<1x128x128xf32> to vector<128x128xf32>
    %cst_17 = arith.constant dense<0.000000e+00> : vector<240x128xf32>
    %24 = tpu.matmul %21, %23, %cst_17 {dimension_numbers = #tpu.dot_dimension_numbers<[1], [0], [0], [1], [0, 0, 1, 1], [], []>} : vector<240x128xf32>, vector<128x128xf32>, vector<240x128xf32> -> vector<240x128xf32>
    %25 = arith.addf %20, %24 : vector<240x128xf32>
    %c25 = arith.constant 25 : index
    %c0_18 = arith.constant 0 : index
    %26 = vector.load %arg13[%c25, %c0_18] : memref<336x128xf32, #tpu.memory_space<vmem>>, vector<240x128xf32>
    %c2 = arith.constant 2 : index
    %c0_19 = arith.constant 0 : index
    %c0_20 = arith.constant 0 : index
    %27 = vector.load %arg6[%c2, %c0_19, %c0_20] : memref<9x128x128xf32, #tpu.memory_space<vmem>>, vector<1x128x128xf32>
    %28 = vector.shape_cast %27 : vector<1x128x128xf32> to vector<128x128xf32>
    %cst_21 = arith.constant dense<0.000000e+00> : vector<240x128xf32>
    %29 = tpu.matmul %26, %28, %cst_21 {dimension_numbers = #tpu.dot_dimension_numbers<[1], [0], [0], [1], [0, 0, 1, 1], [], []>} : vector<240x128xf32>, vector<128x128xf32>, vector<240x128xf32> -> vector<240x128xf32>
    %30 = arith.addf %25, %29 : vector<240x128xf32>
    %c47 = arith.constant 47 : index
    %c0_22 = arith.constant 0 : index
    %31 = vector.load %arg13[%c47, %c0_22] : memref<336x128xf32, #tpu.memory_space<vmem>>, vector<240x128xf32>
    %c3 = arith.constant 3 : index
    %c0_23 = arith.constant 0 : index
    %c0_24 = arith.constant 0 : index
    %32 = vector.load %arg6[%c3, %c0_23, %c0_24] : memref<9x128x128xf32, #tpu.memory_space<vmem>>, vector<1x128x128xf32>
    %33 = vector.shape_cast %32 : vector<1x128x128xf32> to vector<128x128xf32>
    %cst_25 = arith.constant dense<0.000000e+00> : vector<240x128xf32>
    %34 = tpu.matmul %31, %33, %cst_25 {dimension_numbers = #tpu.dot_dimension_numbers<[1], [0], [0], [1], [0, 0, 1, 1], [], []>} : vector<240x128xf32>, vector<128x128xf32>, vector<240x128xf32> -> vector<240x128xf32>
    %35 = arith.addf %30, %34 : vector<240x128xf32>
    %c48 = arith.constant 48 : index
    %c0_26 = arith.constant 0 : index
    %36 = vector.load %arg13[%c48, %c0_26] : memref<336x128xf32, #tpu.memory_space<vmem>>, vector<240x128xf32>
    %c4 = arith.constant 4 : index
    %c0_27 = arith.constant 0 : index
    %c0_28 = arith.constant 0 : index
    %37 = vector.load %arg6[%c4, %c0_27, %c0_28] : memref<9x128x128xf32, #tpu.memory_space<vmem>>, vector<1x128x128xf32>
    %38 = vector.shape_cast %37 : vector<1x128x128xf32> to vector<128x128xf32>
    %cst_29 = arith.constant dense<0.000000e+00> : vector<240x128xf32>
    %39 = tpu.matmul %36, %38, %cst_29 {dimension_numbers = #tpu.dot_dimension_numbers<[1], [0], [0], [1], [0, 0, 1, 1], [], []>} : vector<240x128xf32>, vector<128x128xf32>, vector<240x128xf32> -> vector<240x128xf32>
    %40 = arith.addf %35, %39 : vector<240x128xf32>
    %c49 = arith.constant 49 : index
    %c0_30 = arith.constant 0 : index
    %41 = vector.load %arg13[%c49, %c0_30] : memref<336x128xf32, #tpu.memory_space<vmem>>, vector<240x128xf32>
    %c5 = arith.constant 5 : index
    %c0_31 = arith.constant 0 : index
    %c0_32 = arith.constant 0 : index
    %42 = vector.load %arg6[%c5, %c0_31, %c0_32] : memref<9x128x128xf32, #tpu.memory_space<vmem>>, vector<1x128x128xf32>
    %43 = vector.shape_cast %42 : vector<1x128x128xf32> to vector<128x128xf32>
    %cst_33 = arith.constant dense<0.000000e+00> : vector<240x128xf32>
    %44 = tpu.matmul %41, %43, %cst_33 {dimension_numbers = #tpu.dot_dimension_numbers<[1], [0], [0], [1], [0, 0, 1, 1], [], []>} : vector<240x128xf32>, vector<128x128xf32>, vector<240x128xf32> -> vector<240x128xf32>
    %45 = arith.addf %40, %44 : vector<240x128xf32>
    %c71 = arith.constant 71 : index
    %c0_34 = arith.constant 0 : index
    %46 = vector.load %arg13[%c71, %c0_34] : memref<336x128xf32, #tpu.memory_space<vmem>>, vector<240x128xf32>
    %c6 = arith.constant 6 : index
    %c0_35 = arith.constant 0 : index
    %c0_36 = arith.constant 0 : index
    %47 = vector.load %arg6[%c6, %c0_35, %c0_36] : memref<9x128x128xf32, #tpu.memory_space<vmem>>, vector<1x128x128xf32>
    %48 = vector.shape_cast %47 : vector<1x128x128xf32> to vector<128x128xf32>
    %cst_37 = arith.constant dense<0.000000e+00> : vector<240x128xf32>
    %49 = tpu.matmul %46, %48, %cst_37 {dimension_numbers = #tpu.dot_dimension_numbers<[1], [0], [0], [1], [0, 0, 1, 1], [], []>} : vector<240x128xf32>, vector<128x128xf32>, vector<240x128xf32> -> vector<240x128xf32>
    %50 = arith.addf %45, %49 : vector<240x128xf32>
    %c72 = arith.constant 72 : index
    %c0_38 = arith.constant 0 : index
    %51 = vector.load %arg13[%c72, %c0_38] : memref<336x128xf32, #tpu.memory_space<vmem>>, vector<240x128xf32>
    %c7 = arith.constant 7 : index
    %c0_39 = arith.constant 0 : index
    %c0_40 = arith.constant 0 : index
    %52 = vector.load %arg6[%c7, %c0_39, %c0_40] : memref<9x128x128xf32, #tpu.memory_space<vmem>>, vector<1x128x128xf32>
    %53 = vector.shape_cast %52 : vector<1x128x128xf32> to vector<128x128xf32>
    %cst_41 = arith.constant dense<0.000000e+00> : vector<240x128xf32>
    %54 = tpu.matmul %51, %53, %cst_41 {dimension_numbers = #tpu.dot_dimension_numbers<[1], [0], [0], [1], [0, 0, 1, 1], [], []>} : vector<240x128xf32>, vector<128x128xf32>, vector<240x128xf32> -> vector<240x128xf32>
    %55 = arith.addf %50, %54 : vector<240x128xf32>
    %c73 = arith.constant 73 : index
    %c0_42 = arith.constant 0 : index
    %56 = vector.load %arg13[%c73, %c0_42] : memref<336x128xf32, #tpu.memory_space<vmem>>, vector<240x128xf32>
    %c8 = arith.constant 8 : index
    %c0_43 = arith.constant 0 : index
    %c0_44 = arith.constant 0 : index
    %57 = vector.load %arg6[%c8, %c0_43, %c0_44] : memref<9x128x128xf32, #tpu.memory_space<vmem>>, vector<1x128x128xf32>
    %58 = vector.shape_cast %57 : vector<1x128x128xf32> to vector<128x128xf32>
    %cst_45 = arith.constant dense<0.000000e+00> : vector<240x128xf32>
    %59 = tpu.matmul %56, %58, %cst_45 {dimension_numbers = #tpu.dot_dimension_numbers<[1], [0], [0], [1], [0, 0, 1, 1], [], []>} : vector<240x128xf32>, vector<128x128xf32>, vector<240x128xf32> -> vector<240x128xf32>
    %60 = arith.addf %55, %59 : vector<240x128xf32>
    %c0_46 = arith.constant 0 : index
    %c0_47 = arith.constant 0 : index
    %61 = vector.load %arg7[%c0_46, %c0_47] : memref<1x128xf32, #tpu.memory_space<vmem>>, vector<1x128xf32>
    %62 = vector.broadcast %61 : vector<1x128xf32> to vector<240x128xf32>
    %63 = arith.addf %60, %62 : vector<240x128xf32>
    %cst_48 = arith.constant 0.000000e+00 : f32
    %64 = vector.broadcast %cst_48 : f32 to vector<240x128xf32>
    %65 = arith.maximumf %63, %64 : vector<240x128xf32>
    %c0_49 = arith.constant 0 : index
    %c0_50 = arith.constant 0 : index
    %66 = vector.load %arg8[%c0_49, %c0_50] : memref<128x128xf32, #tpu.memory_space<vmem>>, vector<128x128xf32>
    %cst_51 = arith.constant dense<0.000000e+00> : vector<240x128xf32>
    %67 = tpu.matmul %65, %66, %cst_51 {dimension_numbers = #tpu.dot_dimension_numbers<[1], [0], [0], [1], [0, 0, 1, 1], [], []>} : vector<240x128xf32>, vector<128x128xf32>, vector<240x128xf32> -> vector<240x128xf32>
    %c0_52 = arith.constant 0 : index
    %c0_53 = arith.constant 0 : index
    %68 = vector.load %arg9[%c0_52, %c0_53] : memref<1x128xf32, #tpu.memory_space<vmem>>, vector<1x128xf32>
    %69 = vector.broadcast %68 : vector<1x128xf32> to vector<240x128xf32>
    %70 = arith.addf %67, %69 : vector<240x128xf32>
    %c48_i32 = arith.constant 48 : i32
    %71 = arith.addi %1, %c48_i32 : i32
    %72 = tpu.assume_multiple %71, 8 : i32
    %c0_54 = arith.constant 0 : index
    %73 = arith.index_cast %72 : i32 to index
    %c0_55 = arith.constant 0 : index
    %74 = vector.load %arg2[%c0_54, %73, %c0_55] : memref<1x576x128xf32, #tpu.memory_space<vmem>>, vector<1x240x128xf32>
    %75 = vector.shape_cast %74 : vector<1x240x128xf32> to vector<240x128xf32>
    %c0_56 = arith.constant 0 : index
    %c0_57 = arith.constant 0 : index
    %76 = vector.load %arg10[%c0_56, %c0_57] : memref<128x128xf32, #tpu.memory_space<vmem>>, vector<128x128xf32>
    %cst_58 = arith.constant dense<0.000000e+00> : vector<240x128xf32>
    %77 = tpu.matmul %75, %76, %cst_58 {dimension_numbers = #tpu.dot_dimension_numbers<[1], [0], [0], [1], [0, 0, 1, 1], [], []>} : vector<240x128xf32>, vector<128x128xf32>, vector<240x128xf32> -> vector<240x128xf32>
    %c0_59 = arith.constant 0 : index
    %c0_60 = arith.constant 0 : index
    %78 = vector.load %arg11[%c0_59, %c0_60] : memref<1x128xf32, #tpu.memory_space<vmem>>, vector<1x128xf32>
    %79 = vector.broadcast %78 : vector<1x128xf32> to vector<240x128xf32>
    %80 = arith.addf %77, %79 : vector<240x128xf32>
    %81 = arith.addf %70, %80 : vector<240x128xf32>
    %cst_61 = arith.constant 0.000000e+00 : f32
    %82 = vector.broadcast %cst_61 : f32 to vector<240x128xf32>
    %83 = arith.maximumf %81, %82 : vector<240x128xf32>
    %84 = vector.shape_cast %83 : vector<240x128xf32> to vector<1x240x128xf32>
    %c0_62 = arith.constant 0 : index
    %c0_63 = arith.constant 0 : index
    %c0_64 = arith.constant 0 : index
    %85 = vector.load %arg12[%c0_62, %c0_63, %c0_64] : memref<1x240x128xf32, #tpu.memory_space<vmem>>, vector<1x240x128xf32>
    tpu.vector_store %arg12[%c0_62, %c0_63, %c0_64], %84 {strides = array<i32>} : memref<1x240x128xf32, #tpu.memory_space<vmem>>, vector<1x240x128xf32>,
    return
  }
  func.func @transform_0(%arg0: i32, %arg1: i32) -> (i32, i32, i32) {
    %c0_i32 = arith.constant 0 : i32
    %c0_i32_0 = arith.constant 0 : i32
    %c0_i32_1 = arith.constant 0 : i32
    return %arg0, %c0_i32, %c0_i32_0 : i32, i32, i32
  }
  func.func @transform_1(%arg0: i32, %arg1: i32) -> (i32, i32) {
    %c0_i32 = arith.constant 0 : i32
    %c0_i32_0 = arith.constant 0 : i32
    %c0_i32_1 = arith.constant 0 : i32
    return %c0_i32, %c0_i32_0 : i32, i32
  }
  func.func @transform_2(%arg0: i32, %arg1: i32) -> (i32, i32) {
    %c0_i32 = arith.constant 0 : i32
    %c0_i32_0 = arith.constant 0 : i32
    %c0_i32_1 = arith.constant 0 : i32
    return %c0_i32, %c0_i32_0 : i32, i32
  }
  func.func @transform_3(%arg0: i32, %arg1: i32) -> (i32, i32) {
    %c0_i32 = arith.constant 0 : i32
    %c0_i32_0 = arith.constant 0 : i32
    %c0_i32_1 = arith.constant 0 : i32
    return %c0_i32, %c0_i32_0 : i32, i32
  }
  func.func @transform_4(%arg0: i32, %arg1: i32) -> (i32, i32, i32) {
    %c0_i32 = arith.constant 0 : i32
    %c0_i32_0 = arith.constant 0 : i32
    %c0_i32_1 = arith.constant 0 : i32
    %c0_i32_2 = arith.constant 0 : i32
    return %c0_i32, %c0_i32_0, %c0_i32_1 : i32, i32, i32
  }
  func.func @transform_5(%arg0: i32, %arg1: i32) -> (i32, i32) {
    %c0_i32 = arith.constant 0 : i32
    %c0_i32_0 = arith.constant 0 : i32
    %c0_i32_1 = arith.constant 0 : i32
    return %c0_i32, %c0_i32_0 : i32, i32
  }
  func.func @transform_6(%arg0: i32, %arg1: i32) -> (i32, i32) {
    %c0_i32 = arith.constant 0 : i32
    %c0_i32_0 = arith.constant 0 : i32
    %c0_i32_1 = arith.constant 0 : i32
    return %c0_i32, %c0_i32_0 : i32, i32
  }
  func.func @transform_7(%arg0: i32, %arg1: i32) -> (i32, i32) {
    %c0_i32 = arith.constant 0 : i32
    %c0_i32_0 = arith.constant 0 : i32
    %c0_i32_1 = arith.constant 0 : i32
    return %c0_i32, %c0_i32_0 : i32, i32
  }
  func.func @transform_8(%arg0: i32, %arg1: i32) -> (i32, i32) {
    %c0_i32 = arith.constant 0 : i32
    %c0_i32_0 = arith.constant 0 : i32
    %c0_i32_1 = arith.constant 0 : i32
    return %c0_i32, %c0_i32_0 : i32, i32
  }
  func.func @transform_9(%arg0: i32, %arg1: i32) -> (i32, i32) {
    %c0_i32 = arith.constant 0 : i32
    %c0_i32_0 = arith.constant 0 : i32
    %c0_i32_1 = arith.constant 0 : i32
    return %c0_i32, %c0_i32_0 : i32, i32
  }
  func.func @transform_10(%arg0: i32, %arg1: i32) -> (i32, i32, i32) {
    %c0_i32 = arith.constant 0 : i32
    %c0_i32_0 = arith.constant 0 : i32
    return %arg0, %arg1, %c0_i32 : i32, i32, i32
  }
}

</mosaic_0001>

<llo_original>
// kernel: res_bottleneck_forward.1
$region0: #{res_bottleneck_forward.1}
  #allocation0 [shape = 'u32[]', space=smem, size = 0x4, offset = 0x4, fixed_abs, tag = 'smem constant byte address 0x4 - core index']
  #allocation1 [shape = 'u32[72,128]{1,0:T(1,128)}', space=vmem, size = 0x9000, scoped, tag = 'internal scratch']
  #allocation2 [shape = 'f32[336,128]{1,0:T(8,128)}', space=vmem, size = 0x2a000, scoped, tag = 'scratch operand']
  %s0 = inlined_call_operand.vmem [shape: f32[2,576,128], index: 0, kind: input, shape index: {}]
  %s1 = inlined_call_operand.vmem [shape: f32[576,1], index: 1, kind: input, shape index: {}]
  %s2 = inlined_call_operand.vmem [shape: f32[128,128], index: 2, kind: input, shape index: {}]
  %s3 = inlined_call_operand.vmem [shape: f32[1,128], index: 3, kind: input, shape index: {}]
  %s4 = inlined_call_operand.vmem [shape: f32[9,128,128], index: 4, kind: input, shape index: {}]
  %s5 = inlined_call_operand.vmem [shape: f32[1,128], index: 5, kind: input, shape index: {}]
  %s6 = inlined_call_operand.vmem [shape: f32[128,128], index: 6, kind: input, shape index: {}]
  %s7 = inlined_call_operand.vmem [shape: f32[1,128], index: 7, kind: input, shape index: {}]
  %s8 = inlined_call_operand.vmem [shape: f32[128,128], index: 8, kind: input, shape index: {}]
  %s9 = inlined_call_operand.vmem [shape: f32[1,128], index: 9, kind: input, shape index: {}]
  %s10 = inlined_call_operand.vmem [shape: f32[2,480,128], index: 10, kind: output, shape index: {}]
  %s11 = sld [smem:[#allocation0]]
  $region73: #{res_bottleneck_forward.1} parent=0
    _
  %s13 = ssub.s32 1, %s11
  %s14 = scalar_select 0, %s13, %s11
  loop: start=0, step=1, limit=6
  $region2: #{res_bottleneck_forward.1} parent=0 // loop_pre_header
    _
  $region3: #{res_bottleneck_forward.1} parent=0 // loop_header
    %s16 = sphi 0, %s20
    %p17 = scmp.ge.s32.totalorder %s16, 6
    %s23 = sphi 0, %s35
    %s24 = sphi 0, %s31
    %s25 = sphi 0, %s23
    %s26 = sphi 0, %s24
    %s27 = sphi 0, %s25
    %s28 = sphi 0, %s26
    %s38 = sphi 0, %s40
    %s41 = sphi 0, %s38
    %s42 = sphi 0, %s41
    %s58 = sphi 0, %s42
    %s62 = sphi 0, %s62
    %s64 = sphi 0, %s62
    %s65 = sphi 0, %s64
    %s79 = sphi 0, %s65
    %s83 = sphi 0, %s83
    %s85 = sphi 0, %s83
    %s86 = sphi 0, %s85
    %s100 = sphi 0, %s86
    %s104 = sphi 0, %s104
    %s106 = sphi 0, %s104
    %s107 = sphi 0, %s106
    %s121 = sphi 0, %s107
    %s125 = sphi 0, %s125
    %s127 = sphi 0, %s125
    %s128 = sphi 0, %s127
    %s142 = sphi 0, %s128
    %s146 = sphi 0, %s146
    %s148 = sphi 0, %s146
    %s149 = sphi 0, %s148
    %s163 = sphi 0, %s149
    %s167 = sphi 0, %s167
    %s169 = sphi 0, %s167
    %s170 = sphi 0, %s169
    %s184 = sphi 0, %s170
    %s188 = sphi 0, %s188
    %s190 = sphi 0, %s188
    %s191 = sphi 0, %s190
    %s205 = sphi 0, %s191
    %s209 = sphi 0, %s209
    %s211 = sphi 0, %s209
    %s212 = sphi 0, %s211
    %s226 = sphi 0, %s212
    %s230 = sphi 0, %s230
    %s232 = sphi 0, %s230
    %s233 = sphi 0, %s232
    %s247 = sphi 0, %s233
    %s255 = sphi 0, %s257
    %s258 = sphi 0, %s255
    %s259 = sphi 0, %s258
    %s275 = sphi 0, %s259
  $region4: #{res_bottleneck_forward.1} parent=0 // loop_header_branch
    %19 = sbr.rel (%p17) target = $region8
  $region5: #{res_bottleneck_forward.1} parent=0 // loop_body
    %s21 = ssub.s32 %s16, 1
    %s22 = ssub.s32 %s16, 2
    %s29 = sadd.s32 1, %s24
    %p30 = scmp.ge.s32.totalorder %s29, 2
    %s31 = scalar_select %p30, 0, %s29
    %s32 = sadd.s32 1, %s23
    %s33 = scalar_select %p30, %s32, %s23
    %p34 = scmp.ge.s32.totalorder %s33, 2
    %s35 = scalar_select %p34, 0, %s33
    %s36 = ssub.s32 %s23, %s35
    %p37 = scmp.eq.s32.totalorder %s36, 0
    %s39 = sadd.s32 %s38, 1
    %s40 = scalar_select %p37, %s38, %s39
    %p43 = pneg %p37
    %p44 = scmp.eq.s32.totalorder %s16, 3
    %p45 = por %p43, %p44
    %p46 = scmp.ne.s32.totalorder %s38, %s41
    %p47 = scmp.eq.s32.totalorder %s16, 0
    %p48 = por %p46, %p47
    %p49 = scmp.ne.s32.totalorder %s38, %s41
    %p50 = scmp.eq.s32.totalorder %s21, 3
    %p51 = por %p49, %p50
    %p52 = scmp.ne.s32.totalorder %s41, %s42
    %p53 = scmp.eq.s32.totalorder %s21, 0
    %p54 = por %p52, %p53
    %p55 = scmp.ne.s32.totalorder %s41, %s42
    %p56 = scmp.eq.s32.totalorder %s22, 3
    %p57 = por %p55, %p56
    %p59 = scmp.ne.s32.totalorder %s42, %s58
    %p60 = scmp.eq.s32.totalorder %s22, 0
    %p61 = por %p59, %p60
    %s63 = sadd.s32 %s62, 1
    %p66 = scmp.eq.s32.totalorder %s16, 3
    %p67 = scmp.ne.s32.totalorder %s62, %s64
    %p68 = scmp.eq.s32.totalorder %s16, 0
    %p69 = por %p67, %p68
    %p70 = scmp.ne.s32.totalorder %s62, %s64
    %p71 = scmp.eq.s32.totalorder %s21, 3
    %p72 = por %p70, %p71
    %p73 = scmp.ne.s32.totalorder %s64, %s65
    %p74 = scmp.eq.s32.totalorder %s21, 0
    %p75 = por %p73, %p74
    %p76 = scmp.ne.s32.totalorder %s64, %s65
    %p77 = scmp.eq.s32.totalorder %s22, 3
    %p78 = por %p76, %p77
    %p80 = scmp.ne.s32.totalorder %s65, %s79
    %p81 = scmp.eq.s32.totalorder %s22, 0
    %p82 = por %p80, %p81
    %s84 = sadd.s32 %s83, 1
    %p87 = scmp.eq.s32.totalorder %s16, 3
    %p88 = scmp.ne.s32.totalorder %s83, %s85
    %p89 = scmp.eq.s32.totalorder %s16, 0
    %p90 = por %p88, %p89
    %p91 = scmp.ne.s32.totalorder %s83, %s85
    %p92 = scmp.eq.s32.totalorder %s21, 3
    %p93 = por %p91, %p92
    %p94 = scmp.ne.s32.totalorder %s85, %s86
    %p95 = scmp.eq.s32.totalorder %s21, 0
    %p96 = por %p94, %p95
    %p97 = scmp.ne.s32.totalorder %s85, %s86
    %p98 = scmp.eq.s32.totalorder %s22, 3
    %p99 = por %p97, %p98
    %p101 = scmp.ne.s32.totalorder %s86, %s100
    %p102 = scmp.eq.s32.totalorder %s22, 0
    %p103 = por %p101, %p102
    %s105 = sadd.s32 %s104, 1
    %p108 = scmp.eq.s32.totalorder %s16, 3
    %p109 = scmp.ne.s32.totalorder %s104, %s106
    %p110 = scmp.eq.s32.totalorder %s16, 0
    %p111 = por %p109, %p110
    %p112 = scmp.ne.s32.totalorder %s104, %s106
    %p113 = scmp.eq.s32.totalorder %s21, 3
    %p114 = por %p112, %p113
    %p115 = scmp.ne.s32.totalorder %s106, %s107
    %p116 = scmp.eq.s32.totalorder %s21, 0
    %p117 = por %p115, %p116
    %p118 = scmp.ne.s32.totalorder %s106, %s107
    %p119 = scmp.eq.s32.totalorder %s22, 3
    %p120 = por %p118, %p119
    %p122 = scmp.ne.s32.totalorder %s107, %s121
    %p123 = scmp.eq.s32.totalorder %s22, 0
    %p124 = por %p122, %p123
    %s126 = sadd.s32 %s125, 1
    %p129 = scmp.eq.s32.totalorder %s16, 3
    %p130 = scmp.ne.s32.totalorder %s125, %s127
    %p131 = scmp.eq.s32.totalorder %s16, 0
    %p132 = por %p130, %p131
    %p133 = scmp.ne.s32.totalorder %s125, %s127
    %p134 = scmp.eq.s32.totalorder %s21, 3
    %p135 = por %p133, %p134
    %p136 = scmp.ne.s32.totalorder %s127, %s128
    %p137 = scmp.eq.s32.totalorder %s21, 0
    %p138 = por %p136, %p137
    %p139 = scmp.ne.s32.totalorder %s127, %s128
    %p140 = scmp.eq.s32.totalorder %s22, 3
    %p141 = por %p139, %p140
    %p143 = scmp.ne.s32.totalorder %s128, %s142
    %p144 = scmp.eq.s32.totalorder %s22, 0
    %p145 = por %p143, %p144
    %s147 = sadd.s32 %s146, 1
    %p150 = scmp.eq.s32.totalorder %s16, 3
    %p151 = scmp.ne.s32.totalorder %s146, %s148
    %p152 = scmp.eq.s32.totalorder %s16, 0
    %p153 = por %p151, %p152
    %p154 = scmp.ne.s32.totalorder %s146, %s148
    %p155 = scmp.eq.s32.totalorder %s21, 3
    %p156 = por %p154, %p155
    %p157 = scmp.ne.s32.totalorder %s148, %s149
    %p158 = scmp.eq.s32.totalorder %s21, 0
    %p159 = por %p157, %p158
    %p160 = scmp.ne.s32.totalorder %s148, %s149
    %p161 = scmp.eq.s32.totalorder %s22, 3
    %p162 = por %p160, %p161
    %p164 = scmp.ne.s32.totalorder %s149, %s163
    %p165 = scmp.eq.s32.totalorder %s22, 0
    %p166 = por %p164, %p165
    %s168 = sadd.s32 %s167, 1
    %p171 = scmp.eq.s32.totalorder %s16, 3
    %p172 = scmp.ne.s32.totalorder %s167, %s169
    %p173 = scmp.eq.s32.totalorder %s16, 0
    %p174 = por %p172, %p173
    %p175 = scmp.ne.s32.totalorder %s167, %s169
    %p176 = scmp.eq.s32.totalorder %s21, 3
    %p177 = por %p175, %p176
    %p178 = scmp.ne.s32.totalorder %s169, %s170
    %p179 = scmp.eq.s32.totalorder %s21, 0
    %p180 = por %p178, %p179
    %p181 = scmp.ne.s32.totalorder %s169, %s170
    %p182 = scmp.eq.s32.totalorder %s22, 3
    %p183 = por %p181, %p182
    %p185 = scmp.ne.s32.totalorder %s170, %s184
    %p186 = scmp.eq.s32.totalorder %s22, 0
    %p187 = por %p185, %p186
    %s189 = sadd.s32 %s188, 1
    %p192 = scmp.eq.s32.totalorder %s16, 3
    %p193 = scmp.ne.s32.totalorder %s188, %s190
    %p194 = scmp.eq.s32.totalorder %s16, 0
    %p195 = por %p193, %p194
    %p196 = scmp.ne.s32.totalorder %s188, %s190
    %p197 = scmp.eq.s32.totalorder %s21, 3
    %p198 = por %p196, %p197
    %p199 = scmp.ne.s32.totalorder %s190, %s191
    %p200 = scmp.eq.s32.totalorder %s21, 0
    %p201 = por %p199, %p200
    %p202 = scmp.ne.s32.totalorder %s190, %s191
    %p203 = scmp.eq.s32.totalorder %s22, 3
    %p204 = por %p202, %p203
    %p206 = scmp.ne.s32.totalorder %s191, %s205
    %p207 = scmp.eq.s32.totalorder %s22, 0
    %p208 = por %p206, %p207
    %s210 = sadd.s32 %s209, 1
    %p213 = scmp.eq.s32.totalorder %s16, 3
    %p214 = scmp.ne.s32.totalorder %s209, %s211
    %p215 = scmp.eq.s32.totalorder %s16, 0
    %p216 = por %p214, %p215
    %p217 = scmp.ne.s32.totalorder %s209, %s211
    %p218 = scmp.eq.s32.totalorder %s21, 3
    %p219 = por %p217, %p218
    %p220 = scmp.ne.s32.totalorder %s211, %s212
    %p221 = scmp.eq.s32.totalorder %s21, 0
    %p222 = por %p220, %p221
    %p223 = scmp.ne.s32.totalorder %s211, %s212
    %p224 = scmp.eq.s32.totalorder %s22, 3
    %p225 = por %p223, %p224
    %p227 = scmp.ne.s32.totalorder %s212, %s226
    %p228 = scmp.eq.s32.totalorder %s22, 0
    %p229 = por %p227, %p228
    %s231 = sadd.s32 %s230, 1
    %p234 = scmp.eq.s32.totalorder %s16, 3
    %p235 = scmp.ne.s32.totalorder %s230, %s232
    %p236 = scmp.eq.s32.totalorder %s16, 0
    %p237 = por %p235, %p236
    %p238 = scmp.ne.s32.totalorder %s230, %s232
    %p239 = scmp.eq.s32.totalorder %s21, 3
    %p240 = por %p238, %p239
    %p241 = scmp.ne.s32.totalorder %s232, %s233
    %p242 = scmp.eq.s32.totalorder %s21, 0
    %p243 = por %p241, %p242
    %p244 = scmp.ne.s32.totalorder %s232, %s233
    %p245 = scmp.eq.s32.totalorder %s22, 3
    %p246 = por %p244, %p245
    %p248 = scmp.ne.s32.totalorder %s233, %s247
    %p249 = scmp.eq.s32.totalorder %s22, 0
    %p250 = por %p248, %p249
    %s251 = ssub.s32 %s23, %s35
    %s252 = ssub.s32 %s24, %s31
    %s253 = sor.u32 %s251, %s252
    %p254 = scmp.eq.s32.totalorder %s253, 0
    %s256 = sadd.s32 %s255, 1
    %s257 = scalar_select %p254, %s255, %s256
    %p260 = pneg %p254
    %p261 = scmp.eq.s32.totalorder %s16, 3
    %p262 = por %p260, %p261
    %p263 = scmp.ne.s32.totalorder %s255, %s258
    %p264 = scmp.eq.s32.totalorder %s16, 0
    %p265 = por %p263, %p264
    %p266 = scmp.ne.s32.totalorder %s255, %s258
    %p267 = scmp.eq.s32.totalorder %s21, 3
    %p268 = por %p266, %p267
    %p269 = scmp.ne.s32.totalorder %s258, %s259
    %p270 = scmp.eq.s32.totalorder %s21, 0
    %p271 = por %p269, %p270
    %p272 = scmp.ne.s32.totalorder %s258, %s259
    %p273 = scmp.eq.s32.totalorder %s22, 3
    %p274 = por %p272, %p273
    %p276 = scmp.ne.s32.totalorder %s259, %s275
    %p277 = scmp.eq.s32.totalorder %s22, 0
    %p278 = por %p276, %p277
    %p279 = scmp.le.s32.totalorder 1, %s16
    %p280 = scmp.lt.s32.totalorder %s16, 5
    %p281 = pnand %p279, %p280
    %p282 = pneg %p281
    // Predicated region
    $region9: #{res_bottleneck_forward.1} parent=5 // pred_check
      _
    $region10: #{res_bottleneck_forward.1} parent=5 // pred_check_branch
      %284 = sbr.rel (%p281) target = $region12
    $region11: #{res_bottleneck_forward.1} parent=5 // pred_region
      %s285 = ssub.s32 %s16, 1
      // Predicated region
      $region13: #{res_bottleneck_forward.1} parent=11 // pred_check
        %p286 = pneg %p75
      $region14: #{res_bottleneck_forward.1} parent=11 // pred_check_branch
        %288 = sbr.rel (%p286) target = $region16
      $region15: #{res_bottleneck_forward.1} parent=11 // pred_region
        _
      $region16: #{res_bottleneck_forward.1} parent=11 // pred_fallthru
        _
      // Predicated region
      $region17: #{res_bottleneck_forward.1} parent=11 // pred_check
        %p289 = pneg %p96
      $region18: #{res_bottleneck_forward.1} parent=11 // pred_check_branch
        %291 = sbr.rel (%p289) target = $region20
      $region19: #{res_bottleneck_forward.1} parent=11 // pred_region
        _
      $region20: #{res_bottleneck_forward.1} parent=11 // pred_fallthru
        _
      // Predicated region
      $region21: #{res_bottleneck_forward.1} parent=11 // pred_check
        %p292 = pneg %p117
      $region22: #{res_bottleneck_forward.1} parent=11 // pred_check_branch
        %294 = sbr.rel (%p292) target = $region24
      $region23: #{res_bottleneck_forward.1} parent=11 // pred_region
        _
      $region24: #{res_bottleneck_forward.1} parent=11 // pred_fallthru
        _
      // Predicated region
      $region25: #{res_bottleneck_forward.1} parent=11 // pred_check
        %p295 = pneg %p138
      $region26: #{res_bottleneck_forward.1} parent=11 // pred_check_branch
        %297 = sbr.rel (%p295) target = $region28
      $region27: #{res_bottleneck_forward.1} parent=11 // pred_region
        _
      $region28: #{res_bottleneck_forward.1} parent=11 // pred_fallthru
        _
      // Predicated region
      $region29: #{res_bottleneck_forward.1} parent=11 // pred_check
        %p298 = pneg %p159
      $region30: #{res_bottleneck_forward.1} parent=11 // pred_check_branch
        %300 = sbr.rel (%p298) target = $region32
      $region31: #{res_bottleneck_forward.1} parent=11 // pred_region
        _
      $region32: #{res_bottleneck_forward.1} parent=11 // pred_fallthru
        _
      // Predicated region
      $region33: #{res_bottleneck_forward.1} parent=11 // pred_check
        %p301 = pneg %p180
      $region34: #{res_bottleneck_forward.1} parent=11 // pred_check_branch
        %303 = sbr.rel (%p301) target = $region36
      $region35: #{res_bottleneck_forward.1} parent=11 // pred_region
        _
      $region36: #{res_bottleneck_forward.1} parent=11 // pred_fallthru
        _
      // Predicated region
      $region37: #{res_bottleneck_forward.1} parent=11 // pred_check
        %p304 = pneg %p201
      $region38: #{res_bottleneck_forward.1} parent=11 // pred_check_branch
        %306 = sbr.rel (%p304) target = $region40
      $region39: #{res_bottleneck_forward.1} parent=11 // pred_region
        _
      $region40: #{res_bottleneck_forward.1} parent=11 // pred_fallthru
        _
      // Predicated region
      $region41: #{res_bottleneck_forward.1} parent=11 // pred_check
        %p307 = pneg %p222
      $region42: #{res_bottleneck_forward.1} parent=11 // pred_check_branch
        %309 = sbr.rel (%p307) target = $region44
      $region43: #{res_bottleneck_forward.1} parent=11 // pred_region
        _
      $region44: #{res_bottleneck_forward.1} parent=11 // pred_fallthru
        _
      // Predicated region
      $region45: #{res_bottleneck_forward.1} parent=11 // pred_check
        %p310 = pneg %p243
      $region46: #{res_bottleneck_forward.1} parent=11 // pred_check_branch
        %312 = sbr.rel (%p310) target = $region48
      $region47: #{res_bottleneck_forward.1} parent=11 // pred_region
        _
      $region48: #{res_bottleneck_forward.1} parent=11 // pred_fallthru
        _
    $region12: #{res_bottleneck_forward.1} parent=5 // pred_fallthru
      _
    %p313 = scmp.lt.s32.totalorder %s16, 4
    // Predicated region
    $region49: #{res_bottleneck_forward.1} parent=5 // pred_check
      %p314 = pneg %p313
    $region50: #{res_bottleneck_forward.1} parent=5 // pred_check_branch
      %316 = sbr.rel (%p314) target = $region52
    $region51: #{res_bottleneck_forward.1} parent=5 // pred_region
      // Predicated region
      $region53: #{res_bottleneck_forward.1} parent=51 // pred_check
        %p317 = pneg %p48
      $region54: #{res_bottleneck_forward.1} parent=51 // pred_check_branch
        %319 = sbr.rel (%p317) target = $region56
      $region55: #{res_bottleneck_forward.1} parent=51 // pred_region
        %p320 = scmp.lt.s32.totalorder %s23, 1
        %s321 = scalar_select %p320, %s23, 1
        %s322 = smul.addr %s321, 72
        %s323 = smul.addr %s322, 8
        %s324 = scalar_lea.vmem %s0, %s323
      $region56: #{res_bottleneck_forward.1} parent=51 // pred_fallthru
        _
    $region52: #{res_bottleneck_forward.1} parent=5 // pred_fallthru
      _
    %p325 = scmp.le.s32.totalorder 1, %s16
    %p326 = scmp.lt.s32.totalorder %s16, 5
    %p327 = pnand %p325, %p326
    %p328 = pneg %p327
    // Predicated region
    $region57: #{res_bottleneck_forward.1} parent=5 // pred_check
      _
    $region58: #{res_bottleneck_forward.1} parent=5 // pred_check_branch
      %330 = sbr.rel (%p327) target = $region60
    $region59: #{res_bottleneck_forward.1} parent=5 // pred_region
      %s331 = ssub.s32 %s16, 1
      %p332 = scmp.lt.s32.totalorder %s25, 1
      %s333 = scalar_select %p332, %s25, 1
      %s334 = smul.addr %s333, 72
      %s335 = smul.addr %s334, 8
      %s336 = scalar_lea.vmem %s0, %s335
      %p337 = pneg %p54
      %p338 = pneg %p51
      %p339 = pneg %p75
      %p340 = pneg %p72
      %p341 = pneg %p96
      %p342 = pneg %p93
      %p343 = pneg %p117
      %p344 = pneg %p114
      %p345 = pneg %p138
      %p346 = pneg %p135
      %p347 = pneg %p159
      %p348 = pneg %p156
      %p349 = pneg %p180
      %p350 = pneg %p177
      %p351 = pneg %p201
      %p352 = pneg %p198
      %p353 = pneg %p222
      %p354 = pneg %p219
      %p355 = pneg %p243
      %p356 = pneg %p240
      %p357 = pneg %p271
      %p358 = pneg %p268
      %s359 = smul.u32 30, %s26
      %p360 = scmp.lt.s32.totalorder %s25, 1
      %s361 = scalar_select %p360, %s25, 1
      %p362 = scmp.lt.s32.totalorder %s359, 59
      %s363 = scalar_select %p362, %s359, 59
      %s364 = smul.addr %s361, 60
      %s365 = sadd.s32 %s363, %s364
      %s366 = smul.addr %s365, 8
      %s367 = scalar_lea.vmem %s10, %s366
      %p368 = scmp.lt.s32.totalorder %s25, 1
      %s369 = scalar_select %p368, %s25, 1
      %s370 = smul.addr %s369, 72
      %s371 = smul.addr %s370, 8
      %s372 = scalar_lea.vmem %s0, %s371
      %s373 = smul.u32 30, %s26
      %p374 = scmp.lt.s32.totalorder %s25, 1
      %s375 = scalar_select %p374, %s25, 1
      %p376 = scmp.lt.s32.totalorder %s373, 59
      %s377 = scalar_select %p376, %s373, 59
      %s378 = smul.addr %s375, 60
      %s379 = sadd.s32 %s377, %s378
      %s380 = smul.addr %s379, 8
      %s381 = scalar_lea.vmem %s10, %s380
      %s382 = smul.u32 30, %s26
      %s383 = smul.u32 %s26, 240
      %s384 = scalar_lea.vmem %s372, %s383
      %v385 = vld [vmem:[%s384] sm:$0xff]
      %v386 = vld [vmem:[%s384 + $0x8] sm:$0xff]
      %v387 = vld [vmem:[%s384 + $0x10] sm:$0xff]
      %v388 = vld [vmem:[%s384 + $0x18] sm:$0xff]
      %v389 = vld [vmem:[%s384 + $0x20] sm:$0xff]
      %v390 = vld [vmem:[%s384 + $0x28] sm:$0xff]
      %v391 = vld [vmem:[%s384 + $0x30] sm:$0xff]
      %v392 = vld [vmem:[%s384 + $0x38] sm:$0xff]
      %v393 = vld [vmem:[%s384 + $0x40] sm:$0xff]
      %v394 = vld [vmem:[%s384 + $0x48] sm:$0xff]
      %v395 = vld [vmem:[%s384 + $0x50] sm:$0xff]
      %v396 = vld [vmem:[%s384 + $0x58] sm:$0xff]
      %v397 = vld [vmem:[%s384 + $0x60] sm:$0xff]
      %v398 = vld [vmem:[%s384 + $0x68] sm:$0xff]
      %v399 = vld [vmem:[%s384 + $0x70] sm:$0xff]
      %v400 = vld [vmem:[%s384 + $0x78] sm:$0xff]
      %v401 = vld [vmem:[%s384 + $0x80] sm:$0xff]
      %v402 = vld [vmem:[%s384 + $0x88] sm:$0xff]
      %v403 = vld [vmem:[%s384 + $0x90] sm:$0xff]
      %v404 = vld [vmem:[%s384 + $0x98] sm:$0xff]
      %v405 = vld [vmem:[%s384 + $0xa0] sm:$0xff]
      %v406 = vld [vmem:[%s384 + $0xa8] sm:$0xff]
      %v407 = vld [vmem:[%s384 + $0xb0] sm:$0xff]
      %v408 = vld [vmem:[%s384 + $0xb8] sm:$0xff]
      %v409 = vld [vmem:[%s384 + $0xc0] sm:$0xff]
      %v410 = vld [vmem:[%s384 + $0xc8] sm:$0xff]
      %v411 = vld [vmem:[%s384 + $0xd0] sm:$0xff]
      %v412 = vld [vmem:[%s384 + $0xd8] sm:$0xff]
      %v413 = vld [vmem:[%s384 + $0xe0] sm:$0xff]
      %v414 = vld [vmem:[%s384 + $0xe8] sm:$0xff]
      %v415 = vld [vmem:[%s384 + $0xf0] sm:$0xff]
      %v416 = vld [vmem:[%s384 + $0xf8] sm:$0xff]
      %v417 = vld [vmem:[%s384 + $0x100] sm:$0xff]
      %v418 = vld [vmem:[%s384 + $0x108] sm:$0xff]
      %v419 = vld [vmem:[%s384 + $0x110] sm:$0xff]
      %v420 = vld [vmem:[%s384 + $0x118] sm:$0xff]
      %v421 = vld [vmem:[%s384 + $0x120] sm:$0xff]
      %v422 = vld [vmem:[%s384 + $0x128] sm:$0xff]
      %v423 = vld [vmem:[%s384 + $0x130] sm:$0xff]
      %v424 = vld [vmem:[%s384 + $0x138] sm:$0xff]
      %v425 = vld [vmem:[%s384 + $0x140] sm:$0xff]
      %v426 = vld [vmem:[%s384 + $0x148] sm:$0xff]
      %v427 = vld [vmem:[%s2] sm:$0xff]
      %v428 = vld [vmem:[%s2 + $0x8] sm:$0xff]
      %v429 = vld [vmem:[%s2 + $0x10] sm:$0xff]
      %v430 = vld [vmem:[%s2 + $0x18] sm:$0xff]
      %v431 = vld [vmem:[%s2 + $0x20] sm:$0xff]
      %v432 = vld [vmem:[%s2 + $0x28] sm:$0xff]
      %v433 = vld [vmem:[%s2 + $0x30] sm:$0xff]
      %v434 = vld [vmem:[%s2 + $0x38] sm:$0xff]
      %v435 = vld [vmem:[%s2 + $0x40] sm:$0xff]
      %v436 = vld [vmem:[%s2 + $0x48] sm:$0xff]
      %v437 = vld [vmem:[%s2 + $0x50] sm:$0xff]
      %v438 = vld [vmem:[%s2 + $0x58] sm:$0xff]
      %v439 = vld [vmem:[%s2 + $0x60] sm:$0xff]
      %v440 = vld [vmem:[%s2 + $0x68] sm:$0xff]
      %v441 = vld [vmem:[%s2 + $0x70] sm:$0xff]
      %v442 = vld [vmem:[%s2 + $0x78] sm:$0xff]
      %v443 = vld [vmem:[%s3] sm:$0x1]
      %v445 = vperm.slane %v443, 0
      %447 = vmatpush.msra.mxu0 %v442
      %448 = vmatpush.msra.mxu0 %v441
      %449 = vmatpush.msra.mxu0 %v440
      %450 = vmatpush.msra.mxu0 %v439
      %451 = vmatpush.msra.mxu0 %v438
      %452 = vmatpush.msra.mxu0 %v437
      %453 = vmatpush.msra.mxu0 %v436
      %454 = vmatpush.msra.mxu0 %v435
      %455 = vmatpush.msra.mxu0 %v434
      %456 = vmatpush.msra.mxu0 %v433
      %457 = vmatpush.msra.mxu0 %v432
      %458 = vmatpush.msra.mxu0 %v431
      %459 = vmatpush.msra.mxu0 %v430
      %460 = vmatpush.msra.mxu0 %v429
      %461 = vmatpush.msra.mxu0 %v428
      %462 = vmatpush.msra.mxu0 %v427
      %463 = vmatmul.f32.gmra.mxu0 %v385
      %v464 = vpop.f32.mrf.mxu0
      %v465 = vadd.f32 %v445, %v464
      %466 = vmatmul.f32.gmra.mxu0 %v386
      %v467 = vpop.f32.mrf.mxu0
      %v468 = vadd.f32 %v445, %v467
      %469 = vmatmul.f32.gmra.mxu0 %v387
      %v470 = vpop.f32.mrf.mxu0
      %v471 = vadd.f32 %v445, %v470
      %472 = vmatmul.f32.gmra.mxu0 %v388
      %v473 = vpop.f32.mrf.mxu0
      %v474 = vadd.f32 %v445, %v473
      %475 = vmatmul.f32.gmra.mxu0 %v389
      %v476 = vpop.f32.mrf.mxu0
      %v477 = vadd.f32 %v445, %v476
      %478 = vmatmul.f32.gmra.mxu0 %v390
      %v479 = vpop.f32.mrf.mxu0
      %v480 = vadd.f32 %v445, %v479
      %481 = vmatmul.f32.gmra.mxu0 %v391
      %v482 = vpop.f32.mrf.mxu0
      %v483 = vadd.f32 %v445, %v482
      %484 = vmatmul.f32.gmra.mxu0 %v392
      %v485 = vpop.f32.mrf.mxu0
      %v486 = vadd.f32 %v445, %v485
      %487 = vmatmul.f32.gmra.mxu0 %v393
      %v488 = vpop.f32.mrf.mxu0
      %v489 = vadd.f32 %v445, %v488
      %490 = vmatmul.f32.gmra.mxu0 %v394
      %v491 = vpop.f32.mrf.mxu0
      %v492 = vadd.f32 %v445, %v491
      %493 = vmatmul.f32.gmra.mxu0 %v395
      %v494 = vpop.f32.mrf.mxu0
      %v495 = vadd.f32 %v445, %v494
      %496 = vmatmul.f32.gmra.mxu0 %v396
      %v497 = vpop.f32.mrf.mxu0
      %v498 = vadd.f32 %v445, %v497
      %499 = vmatmul.f32.gmra.mxu0 %v397
      %v500 = vpop.f32.mrf.mxu0
      %v501 = vadd.f32 %v445, %v500
      %502 = vmatmul.f32.gmra.mxu0 %v398
      %v503 = vpop.f32.mrf.mxu0
      %v504 = vadd.f32 %v445, %v503
      %505 = vmatmul.f32.gmra.mxu0 %v399
      %v506 = vpop.f32.mrf.mxu0
      %v507 = vadd.f32 %v445, %v506
      %508 = vmatmul.f32.gmra.mxu0 %v400
      %v509 = vpop.f32.mrf.mxu0
      %v510 = vadd.f32 %v445, %v509
      %511 = vmatmul.f32.gmra.mxu0 %v401
      %v512 = vpop.f32.mrf.mxu0
      %v513 = vadd.f32 %v445, %v512
      %514 = vmatmul.f32.gmra.mxu0 %v402
      %v515 = vpop.f32.mrf.mxu0
      %v516 = vadd.f32 %v445, %v515
      %517 = vmatmul.f32.gmra.mxu0 %v403
      %v518 = vpop.f32.mrf.mxu0
      %v519 = vadd.f32 %v445, %v518
      %520 = vmatmul.f32.gmra.mxu0 %v404
      %v521 = vpop.f32.mrf.mxu0
      %v522 = vadd.f32 %v445, %v521
      %523 = vmatmul.f32.gmra.mxu0 %v405
      %v524 = vpop.f32.mrf.mxu0
      %v525 = vadd.f32 %v445, %v524
      %526 = vmatmul.f32.gmra.mxu0 %v406
      %v527 = vpop.f32.mrf.mxu0
      %v528 = vadd.f32 %v445, %v527
      %529 = vmatmul.f32.gmra.mxu0 %v407
      %v530 = vpop.f32.mrf.mxu0
      %v531 = vadd.f32 %v445, %v530
      %532 = vmatmul.f32.gmra.mxu0 %v408
      %v533 = vpop.f32.mrf.mxu0
      %v534 = vadd.f32 %v445, %v533
      %535 = vmatmul.f32.gmra.mxu0 %v409
      %v536 = vpop.f32.mrf.mxu0
      %v537 = vadd.f32 %v445, %v536
      %538 = vmatmul.f32.gmra.mxu0 %v410
      %v539 = vpop.f32.mrf.mxu0
      %v540 = vadd.f32 %v445, %v539
      %541 = vmatmul.f32.gmra.mxu0 %v411
      %v542 = vpop.f32.mrf.mxu0
      %v543 = vadd.f32 %v445, %v542
      %544 = vmatmul.f32.gmra.mxu0 %v412
      %v545 = vpop.f32.mrf.mxu0
      %v546 = vadd.f32 %v445, %v545
      %547 = vmatmul.f32.gmra.mxu0 %v413
      %v548 = vpop.f32.mrf.mxu0
      %v549 = vadd.f32 %v445, %v548
      %550 = vmatmul.f32.gmra.mxu0 %v414
      %v551 = vpop.f32.mrf.mxu0
      %v552 = vadd.f32 %v445, %v551
      %553 = vmatmul.f32.gmra.mxu0 %v415
      %v554 = vpop.f32.mrf.mxu0
      %v555 = vadd.f32 %v445, %v554
      %556 = vmatmul.f32.gmra.mxu0 %v416
      %v557 = vpop.f32.mrf.mxu0
      %v558 = vadd.f32 %v445, %v557
      %559 = vmatmul.f32.gmra.mxu0 %v417
      %v560 = vpop.f32.mrf.mxu0
      %v561 = vadd.f32 %v445, %v560
      %562 = vmatmul.f32.gmra.mxu0 %v418
      %v563 = vpop.f32.mrf.mxu0
      %v564 = vadd.f32 %v445, %v563
      %565 = vmatmul.f32.gmra.mxu0 %v419
      %v566 = vpop.f32.mrf.mxu0
      %v567 = vadd.f32 %v445, %v566
      %568 = vmatmul.f32.gmra.mxu0 %v420
      %v569 = vpop.f32.mrf.mxu0
      %v570 = vadd.f32 %v445, %v569
      %571 = vmatmul.f32.gmra.mxu0 %v421
      %v572 = vpop.f32.mrf.mxu0
      %v573 = vadd.f32 %v445, %v572
      %574 = vmatmul.f32.gmra.mxu0 %v422
      %v575 = vpop.f32.mrf.mxu0
      %v576 = vadd.f32 %v445, %v575
      %577 = vmatmul.f32.gmra.mxu0 %v423
      %v578 = vpop.f32.mrf.mxu0
      %v579 = vadd.f32 %v445, %v578
      %580 = vmatmul.f32.gmra.mxu0 %v424
      %v581 = vpop.f32.mrf.mxu0
      %v582 = vadd.f32 %v445, %v581
      %583 = vmatmul.f32.gmra.mxu0 %v425
      %v584 = vpop.f32.mrf.mxu0
      %v585 = vadd.f32 %v445, %v584
      %586 = vmatmul.f32.gmra.mxu0 %v426
      %v587 = vpop.f32.mrf.mxu0
      %v588 = vadd.f32 %v445, %v587
      %589 = vdwg.mxu0
      %v590 = vmax.f32 %v465, 0.0
      %v591 = vmax.f32 %v468, 0.0
      %v592 = vmax.f32 %v471, 0.0
      %v593 = vmax.f32 %v474, 0.0
      %v594 = vmax.f32 %v477, 0.0
      %v595 = vmax.f32 %v480, 0.0
      %v596 = vmax.f32 %v483, 0.0
      %v597 = vmax.f32 %v486, 0.0
      %v598 = vmax.f32 %v489, 0.0
      %v599 = vmax.f32 %v492, 0.0
      %v600 = vmax.f32 %v495, 0.0
      %v601 = vmax.f32 %v498, 0.0
      %v602 = vmax.f32 %v501, 0.0
      %v603 = vmax.f32 %v504, 0.0
      %v604 = vmax.f32 %v507, 0.0
      %v605 = vmax.f32 %v510, 0.0
      %v606 = vmax.f32 %v513, 0.0
      %v607 = vmax.f32 %v516, 0.0
      %v608 = vmax.f32 %v519, 0.0
      %v609 = vmax.f32 %v522, 0.0
      %v610 = vmax.f32 %v525, 0.0
      %v611 = vmax.f32 %v528, 0.0
      %v612 = vmax.f32 %v531, 0.0
      %v613 = vmax.f32 %v534, 0.0
      %v614 = vmax.f32 %v537, 0.0
      %v615 = vmax.f32 %v540, 0.0
      %v616 = vmax.f32 %v543, 0.0
      %v617 = vmax.f32 %v546, 0.0
      %v618 = vmax.f32 %v549, 0.0
      %v619 = vmax.f32 %v552, 0.0
      %v620 = vmax.f32 %v555, 0.0
      %v621 = vmax.f32 %v558, 0.0
      %v622 = vmax.f32 %v561, 0.0
      %v623 = vmax.f32 %v564, 0.0
      %v624 = vmax.f32 %v567, 0.0
      %v625 = vmax.f32 %v570, 0.0
      %v626 = vmax.f32 %v573, 0.0
      %v627 = vmax.f32 %v576, 0.0
      %v628 = vmax.f32 %v579, 0.0
      %v629 = vmax.f32 %v582, 0.0
      %v630 = vmax.f32 %v585, 0.0
      %v631 = vmax.f32 %v588, 0.0
      %s632 = scalar_lea.vmem %s1, %s383
      %v633 = vld [vmem:[%s632] sm:$0xff]
      %v634 = vld [vmem:[%s632 + $0x8] sm:$0xff]
      %v635 = vld [vmem:[%s632 + $0x10] sm:$0xff]
      %v636 = vld [vmem:[%s632 + $0x18] sm:$0xff]
      %v637 = vld [vmem:[%s632 + $0x20] sm:$0xff]
      %v638 = vld [vmem:[%s632 + $0x28] sm:$0xff]
      %v639 = vld [vmem:[%s632 + $0x30] sm:$0xff]
      %v640 = vld [vmem:[%s632 + $0x38] sm:$0xff]
      %v641 = vld [vmem:[%s632 + $0x40] sm:$0xff]
      %v642 = vld [vmem:[%s632 + $0x48] sm:$0xff]
      %v643 = vld [vmem:[%s632 + $0x50] sm:$0xff]
      %v644 = vld [vmem:[%s632 + $0x58] sm:$0xff]
      %v645 = vld [vmem:[%s632 + $0x60] sm:$0xff]
      %v646 = vld [vmem:[%s632 + $0x68] sm:$0xff]
      %v647 = vld [vmem:[%s632 + $0x70] sm:$0xff]
      %v648 = vld [vmem:[%s632 + $0x78] sm:$0xff]
      %v649 = vld [vmem:[%s632 + $0x80] sm:$0xff]
      %v650 = vld [vmem:[%s632 + $0x88] sm:$0xff]
      %v651 = vld [vmem:[%s632 + $0x90] sm:$0xff]
      %v652 = vld [vmem:[%s632 + $0x98] sm:$0xff]
      %v653 = vld [vmem:[%s632 + $0xa0] sm:$0xff]
      %v654 = vld [vmem:[%s632 + $0xa8] sm:$0xff]
      %v655 = vld [vmem:[%s632 + $0xb0] sm:$0xff]
      %v656 = vld [vmem:[%s632 + $0xb8] sm:$0xff]
      %v657 = vld [vmem:[%s632 + $0xc0] sm:$0xff]
      %v658 = vld [vmem:[%s632 + $0xc8] sm:$0xff]
      %v659 = vld [vmem:[%s632 + $0xd0] sm:$0xff]
      %v660 = vld [vmem:[%s632 + $0xd8] sm:$0xff]
      %v661 = vld [vmem:[%s632 + $0xe0] sm:$0xff]
      %v662 = vld [vmem:[%s632 + $0xe8] sm:$0xff]
      %v663 = vld [vmem:[%s632 + $0xf0] sm:$0xff]
      %v664 = vld [vmem:[%s632 + $0xf8] sm:$0xff]
      %v665 = vld [vmem:[%s632 + $0x100] sm:$0xff]
      %v666 = vld [vmem:[%s632 + $0x108] sm:$0xff]
      %v667 = vld [vmem:[%s632 + $0x110] sm:$0xff]
      %v668 = vld [vmem:[%s632 + $0x118] sm:$0xff]
      %v669 = vld [vmem:[%s632 + $0x120] sm:$0xff]
      %v670 = vld [vmem:[%s632 + $0x128] sm:$0xff]
      %v671 = vld [vmem:[%s632 + $0x130] sm:$0xff]
      %v672 = vld [vmem:[%s632 + $0x138] sm:$0xff]
      %v673 = vld [vmem:[%s632 + $0x140] sm:$0xff]
      %v674 = vld [vmem:[%s632 + $0x148] sm:$0xff]
      %676 = vset.pattern.permute.xlu0 0
      %677 = vperm.xlu0 %676, %v633
      %v678 = vpop.permute.xlu0 %677
      %681 = vset.pattern.permute.xlu0 0
      %682 = vperm.xlu0 %681, %v634
      %v683 = vpop.permute.xlu0 %682
      %686 = vset.pattern.permute.xlu0 0
      %687 = vperm.xlu0 %686, %v635
      %v688 = vpop.permute.xlu0 %687
      %691 = vset.pattern.permute.xlu0 0
      %692 = vperm.xlu0 %691, %v636
      %v693 = vpop.permute.xlu0 %692
      %696 = vset.pattern.permute.xlu0 0
      %697 = vperm.xlu0 %696, %v637
      %v698 = vpop.permute.xlu0 %697
      %701 = vset.pattern.permute.xlu0 0
      %702 = vperm.xlu0 %701, %v638
      %v703 = vpop.permute.xlu0 %702
      %706 = vset.pattern.permute.xlu0 0
      %707 = vperm.xlu0 %706, %v639
      %v708 = vpop.permute.xlu0 %707
      %711 = vset.pattern.permute.xlu0 0
      %712 = vperm.xlu0 %711, %v640
      %v713 = vpop.permute.xlu0 %712
      %716 = vset.pattern.permute.xlu0 0
      %717 = vperm.xlu0 %716, %v641
      %v718 = vpop.permute.xlu0 %717
      %721 = vset.pattern.permute.xlu0 0
      %722 = vperm.xlu0 %721, %v642
      %v723 = vpop.permute.xlu0 %722
      %726 = vset.pattern.permute.xlu0 0
      %727 = vperm.xlu0 %726, %v643
      %v728 = vpop.permute.xlu0 %727
      %731 = vset.pattern.permute.xlu0 0
      %732 = vperm.xlu0 %731, %v644
      %v733 = vpop.permute.xlu0 %732
      %736 = vset.pattern.permute.xlu0 0
      %737 = vperm.xlu0 %736, %v645
      %v738 = vpop.permute.xlu0 %737
      %741 = vset.pattern.permute.xlu0 0
      %742 = vperm.xlu0 %741, %v646
      %v743 = vpop.permute.xlu0 %742
      %746 = vset.pattern.permute.xlu0 0
      %747 = vperm.xlu0 %746, %v647
      %v748 = vpop.permute.xlu0 %747
      %751 = vset.pattern.permute.xlu0 0
      %752 = vperm.xlu0 %751, %v648
      %v753 = vpop.permute.xlu0 %752
      %756 = vset.pattern.permute.xlu0 0
      %757 = vperm.xlu0 %756, %v649
      %v758 = vpop.permute.xlu0 %757
      %761 = vset.pattern.permute.xlu0 0
      %762 = vperm.xlu0 %761, %v650
      %v763 = vpop.permute.xlu0 %762
      %766 = vset.pattern.permute.xlu0 0
      %767 = vperm.xlu0 %766, %v651
      %v768 = vpop.permute.xlu0 %767
      %771 = vset.pattern.permute.xlu0 0
      %772 = vperm.xlu0 %771, %v652
      %v773 = vpop.permute.xlu0 %772
      %776 = vset.pattern.permute.xlu0 0
      %777 = vperm.xlu0 %776, %v653
      %v778 = vpop.permute.xlu0 %777
      %781 = vset.pattern.permute.xlu0 0
      %782 = vperm.xlu0 %781, %v654
      %v783 = vpop.permute.xlu0 %782
      %786 = vset.pattern.permute.xlu0 0
      %787 = vperm.xlu0 %786, %v655
      %v788 = vpop.permute.xlu0 %787
      %791 = vset.pattern.permute.xlu0 0
      %792 = vperm.xlu0 %791, %v656
      %v793 = vpop.permute.xlu0 %792
      %796 = vset.pattern.permute.xlu0 0
      %797 = vperm.xlu0 %796, %v657
      %v798 = vpop.permute.xlu0 %797
      %801 = vset.pattern.permute.xlu0 0
      %802 = vperm.xlu0 %801, %v658
      %v803 = vpop.permute.xlu0 %802
      %806 = vset.pattern.permute.xlu0 0
      %807 = vperm.xlu0 %806, %v659
      %v808 = vpop.permute.xlu0 %807
      %811 = vset.pattern.permute.xlu0 0
      %812 = vperm.xlu0 %811, %v660
      %v813 = vpop.permute.xlu0 %812
      %816 = vset.pattern.permute.xlu0 0
      %817 = vperm.xlu0 %816, %v661
      %v818 = vpop.permute.xlu0 %817
      %821 = vset.pattern.permute.xlu0 0
      %822 = vperm.xlu0 %821, %v662
      %v823 = vpop.permute.xlu0 %822
      %826 = vset.pattern.permute.xlu0 0
      %827 = vperm.xlu0 %826, %v663
      %v828 = vpop.permute.xlu0 %827
      %831 = vset.pattern.permute.xlu0 0
      %832 = vperm.xlu0 %831, %v664
      %v833 = vpop.permute.xlu0 %832
      %836 = vset.pattern.permute.xlu0 0
      %837 = vperm.xlu0 %836, %v665
      %v838 = vpop.permute.xlu0 %837
      %841 = vset.pattern.permute.xlu0 0
      %842 = vperm.xlu0 %841, %v666
      %v843 = vpop.permute.xlu0 %842
      %846 = vset.pattern.permute.xlu0 0
      %847 = vperm.xlu0 %846, %v667
      %v848 = vpop.permute.xlu0 %847
      %851 = vset.pattern.permute.xlu0 0
      %852 = vperm.xlu0 %851, %v668
      %v853 = vpop.permute.xlu0 %852
      %856 = vset.pattern.permute.xlu0 0
      %857 = vperm.xlu0 %856, %v669
      %v858 = vpop.permute.xlu0 %857
      %861 = vset.pattern.permute.xlu0 0
      %862 = vperm.xlu0 %861, %v670
      %v863 = vpop.permute.xlu0 %862
      %866 = vset.pattern.permute.xlu0 0
      %867 = vperm.xlu0 %866, %v671
      %v868 = vpop.permute.xlu0 %867
      %871 = vset.pattern.permute.xlu0 0
      %872 = vperm.xlu0 %871, %v672
      %v873 = vpop.permute.xlu0 %872
      %876 = vset.pattern.permute.xlu0 0
      %877 = vperm.xlu0 %876, %v673
      %v878 = vpop.permute.xlu0 %877
      %881 = vset.pattern.permute.xlu0 0
      %882 = vperm.xlu0 %881, %v674
      %v883 = vpop.permute.xlu0 %882
      %v885 = vmul.f32 %v590, %v678
      %v886 = vmul.f32 %v591, %v683
      %v887 = vmul.f32 %v592, %v688
      %v888 = vmul.f32 %v593, %v693
      %v889 = vmul.f32 %v594, %v698
      %v890 = vmul.f32 %v595, %v703
      %v891 = vmul.f32 %v596, %v708
      %v892 = vmul.f32 %v597, %v713
      %v893 = vmul.f32 %v598, %v718
      %v894 = vmul.f32 %v599, %v723
      %v895 = vmul.f32 %v600, %v728
      %v896 = vmul.f32 %v601, %v733
      %v897 = vmul.f32 %v602, %v738
      %v898 = vmul.f32 %v603, %v743
      %v899 = vmul.f32 %v604, %v748
      %v900 = vmul.f32 %v605, %v753
      %v901 = vmul.f32 %v606, %v758
      %v902 = vmul.f32 %v607, %v763
      %v903 = vmul.f32 %v608, %v768
      %v904 = vmul.f32 %v609, %v773
      %v905 = vmul.f32 %v610, %v778
      %v906 = vmul.f32 %v611, %v783
      %v907 = vmul.f32 %v612, %v788
      %v908 = vmul.f32 %v613, %v793
      %v909 = vmul.f32 %v614, %v798
      %v910 = vmul.f32 %v615, %v803
      %v911 = vmul.f32 %v616, %v808
      %v912 = vmul.f32 %v617, %v813
      %v913 = vmul.f32 %v618, %v818
      %v914 = vmul.f32 %v619, %v823
      %v915 = vmul.f32 %v620, %v828
      %v916 = vmul.f32 %v621, %v833
      %v917 = vmul.f32 %v622, %v838
      %v918 = vmul.f32 %v623, %v843
      %v919 = vmul.f32 %v624, %v848
      %v920 = vmul.f32 %v625, %v853
      %v921 = vmul.f32 %v626, %v858
      %v922 = vmul.f32 %v627, %v863
      %v923 = vmul.f32 %v628, %v868
      %v924 = vmul.f32 %v629, %v873
      %v925 = vmul.f32 %v630, %v878
      %v926 = vmul.f32 %v631, %v883
      %927 = vst [vmem:[#allocation2] sm:$0xff] %v885
      %928 = vst [vmem:[#allocation2 + $0x8] sm:$0xff] %v886
      %929 = vst [vmem:[#allocation2 + $0x10] sm:$0xff] %v887
      %930 = vst [vmem:[#allocation2 + $0x18] sm:$0xff] %v888
      %931 = vst [vmem:[#allocation2 + $0x20] sm:$0xff] %v889
      %932 = vst [vmem:[#allocation2 + $0x28] sm:$0xff] %v890
      %933 = vst [vmem:[#allocation2 + $0x30] sm:$0xff] %v891
      %934 = vst [vmem:[#allocation2 + $0x38] sm:$0xff] %v892
      %935 = vst [vmem:[#allocation2 + $0x40] sm:$0xff] %v893
      %936 = vst [vmem:[#allocation2 + $0x48] sm:$0xff] %v894
      %937 = vst [vmem:[#allocation2 + $0x50] sm:$0xff] %v895
      %938 = vst [vmem:[#allocation2 + $0x58] sm:$0xff] %v896
      %939 = vst [vmem:[#allocation2 + $0x60] sm:$0xff] %v897
      %940 = vst [vmem:[#allocation2 + $0x68] sm:$0xff] %v898
      %941 = vst [vmem:[#allocation2 + $0x70] sm:$0xff] %v899
      %942 = vst [vmem:[#allocation2 + $0x78] sm:$0xff] %v900
      %943 = vst [vmem:[#allocation2 + $0x80] sm:$0xff] %v901
      %944 = vst [vmem:[#allocation2 + $0x88] sm:$0xff] %v902
      %945 = vst [vmem:[#allocation2 + $0x90] sm:$0xff] %v903
      %946 = vst [vmem:[#allocation2 + $0x98] sm:$0xff] %v904
      %947 = vst [vmem:[#allocation2 + $0xa0] sm:$0xff] %v905
      %948 = vst [vmem:[#allocation2 + $0xa8] sm:$0xff] %v906
      %949 = vst [vmem:[#allocation2 + $0xb0] sm:$0xff] %v907
      %950 = vst [vmem:[#allocation2 + $0xb8] sm:$0xff] %v908
      %951 = vst [vmem:[#allocation2 + $0xc0] sm:$0xff] %v909
      %952 = vst [vmem:[#allocation2 + $0xc8] sm:$0xff] %v910
      %953 = vst [vmem:[#allocation2 + $0xd0] sm:$0xff] %v911
      %954 = vst [vmem:[#allocation2 + $0xd8] sm:$0xff] %v912
      %955 = vst [vmem:[#allocation2 + $0xe0] sm:$0xff] %v913
      %956 = vst [vmem:[#allocation2 + $0xe8] sm:$0xff] %v914
      %957 = vst [vmem:[#allocation2 + $0xf0] sm:$0xff] %v915
      %958 = vst [vmem:[#allocation2 + $0xf8] sm:$0xff] %v916
      %959 = vst [vmem:[#allocation2 + $0x100] sm:$0xff] %v917
      %960 = vst [vmem:[#allocation2 + $0x108] sm:$0xff] %v918
      %961 = vst [vmem:[#allocation2 + $0x110] sm:$0xff] %v919
      %962 = vst [vmem:[#allocation2 + $0x118] sm:$0xff] %v920
      %963 = vst [vmem:[#allocation2 + $0x120] sm:$0xff] %v921
      %964 = vst [vmem:[#allocation2 + $0x128] sm:$0xff] %v922
      %965 = vst [vmem:[#allocation2 + $0x130] sm:$0xff] %v923
      %966 = vst [vmem:[#allocation2 + $0x138] sm:$0xff] %v924
      %967 = vst [vmem:[#allocation2 + $0x140] sm:$0xff] %v925
      %968 = vst [vmem:[#allocation2 + $0x148] sm:$0xff] %v926
      %v969 = vld [vmem:[#allocation2 + $0x17] sm:$0xff]
      %v970 = vld [vmem:[#allocation2 + $0x1f] sm:$0xff]
      %v971 = vld [vmem:[#allocation2 + $0x27] sm:$0xff]
      %v972 = vld [vmem:[#allocation2 + $0x2f] sm:$0xff]
      %v973 = vld [vmem:[#allocation2 + $0x37] sm:$0xff]
      %v974 = vld [vmem:[#allocation2 + $0x3f] sm:$0xff]
      %v975 = vld [vmem:[#allocation2 + $0x47] sm:$0xff]
      %v976 = vld [vmem:[#allocation2 + $0x4f] sm:$0xff]
      %v977 = vld [vmem:[#allocation2 + $0x57] sm:$0xff]
      %v978 = vld [vmem:[#allocation2 + $0x5f] sm:$0xff]
      %v979 = vld [vmem:[#allocation2 + $0x67] sm:$0xff]
      %v980 = vld [vmem:[#allocation2 + $0x6f] sm:$0xff]
      %v981 = vld [vmem:[#allocation2 + $0x77] sm:$0xff]
      %v982 = vld [vmem:[#allocation2 + $0x7f] sm:$0xff]
      %v983 = vld [vmem:[#allocation2 + $0x87] sm:$0xff]
      %v984 = vld [vmem:[#allocation2 + $0x8f] sm:$0xff]
      %v985 = vld [vmem:[#allocation2 + $0x97] sm:$0xff]
      %v986 = vld [vmem:[#allocation2 + $0x9f] sm:$0xff]
      %v987 = vld [vmem:[#allocation2 + $0xa7] sm:$0xff]
      %v988 = vld [vmem:[#allocation2 + $0xaf] sm:$0xff]
      %v989 = vld [vmem:[#allocation2 + $0xb7] sm:$0xff]
      %v990 = vld [vmem:[#allocation2 + $0xbf] sm:$0xff]
      %v991 = vld [vmem:[#allocation2 + $0xc7] sm:$0xff]
      %v992 = vld [vmem:[#allocation2 + $0xcf] sm:$0xff]
      %v993 = vld [vmem:[#allocation2 + $0xd7] sm:$0xff]
      %v994 = vld [vmem:[#allocation2 + $0xdf] sm:$0xff]
      %v995 = vld [vmem:[#allocation2 + $0xe7] sm:$0xff]
      %v996 = vld [vmem:[#allocation2 + $0xef] sm:$0xff]
      %v997 = vld [vmem:[#allocation2 + $0xf7] sm:$0xff]
      %v998 = vld [vmem:[#allocation2 + $0xff] sm:$0xff]
      %v999 = vld [vmem:[%s4] sm:$0xff]
      %v1000 = vld [vmem:[%s4 + $0x8] sm:$0xff]
      %v1001 = vld [vmem:[%s4 + $0x10] sm:$0xff]
      %v1002 = vld [vmem:[%s4 + $0x18] sm:$0xff]
      %v1003 = vld [vmem:[%s4 + $0x20] sm:$0xff]
      %v1004 = vld [vmem:[%s4 + $0x28] sm:$0xff]
      %v1005 = vld [vmem:[%s4 + $0x30] sm:$0xff]
      %v1006 = vld [vmem:[%s4 + $0x38] sm:$0xff]
      %v1007 = vld [vmem:[%s4 + $0x40] sm:$0xff]
      %v1008 = vld [vmem:[%s4 + $0x48] sm:$0xff]
      %v1009 = vld [vmem:[%s4 + $0x50] sm:$0xff]
      %v1010 = vld [vmem:[%s4 + $0x58] sm:$0xff]
      %v1011 = vld [vmem:[%s4 + $0x60] sm:$0xff]
      %v1012 = vld [vmem:[%s4 + $0x68] sm:$0xff]
      %v1013 = vld [vmem:[%s4 + $0x70] sm:$0xff]
      %v1014 = vld [vmem:[%s4 + $0x78] sm:$0xff]
      %v1015 = vld [vmem:[#allocation2 + $0x18] sm:$0xff]
      %v1016 = vld [vmem:[#allocation2 + $0x20] sm:$0xff]
      %v1017 = vld [vmem:[#allocation2 + $0x28] sm:$0xff]
      %v1018 = vld [vmem:[#allocation2 + $0x30] sm:$0xff]
      %v1019 = vld [vmem:[#allocation2 + $0x38] sm:$0xff]
      %v1020 = vld [vmem:[#allocation2 + $0x40] sm:$0xff]
      %v1021 = vld [vmem:[#allocation2 + $0x48] sm:$0xff]
      %v1022 = vld [vmem:[#allocation2 + $0x50] sm:$0xff]
      %v1023 = vld [vmem:[#allocation2 + $0x58] sm:$0xff]
      %v1024 = vld [vmem:[#allocation2 + $0x60] sm:$0xff]
      %v1025 = vld [vmem:[#allocation2 + $0x68] sm:$0xff]
      %v1026 = vld [vmem:[#allocation2 + $0x70] sm:$0xff]
      %v1027 = vld [vmem:[#allocation2 + $0x78] sm:$0xff]
      %v1028 = vld [vmem:[#allocation2 + $0x80] sm:$0xff]
      %v1029 = vld [vmem:[#allocation2 + $0x88] sm:$0xff]
      %v1030 = vld [vmem:[#allocation2 + $0x90] sm:$0xff]
      %v1031 = vld [vmem:[#allocation2 + $0x98] sm:$0xff]
      %v1032 = vld [vmem:[#allocation2 + $0xa0] sm:$0xff]
      %v1033 = vld [vmem:[#allocation2 + $0xa8] sm:$0xff]
      %v1034 = vld [vmem:[#allocation2 + $0xb0] sm:$0xff]
      %v1035 = vld [vmem:[#allocation2 + $0xb8] sm:$0xff]
      %v1036 = vld [vmem:[#allocation2 + $0xc0] sm:$0xff]
      %v1037 = vld [vmem:[#allocation2 + $0xc8] sm:$0xff]
      %v1038 = vld [vmem:[#allocation2 + $0xd0] sm:$0xff]
      %v1039 = vld [vmem:[#allocation2 + $0xd8] sm:$0xff]
      %v1040 = vld [vmem:[#allocation2 + $0xe0] sm:$0xff]
      %v1041 = vld [vmem:[#allocation2 + $0xe8] sm:$0xff]
      %v1042 = vld [vmem:[#allocation2 + $0xf0] sm:$0xff]
      %v1043 = vld [vmem:[#allocation2 + $0xf8] sm:$0xff]
      %v1044 = vld [vmem:[#allocation2 + $0x100] sm:$0xff]
      %s1045 = scalar_lea.vmem %s4, 128
      %v1046 = vld [vmem:[%s1045] sm:$0xff]
      %v1047 = vld [vmem:[%s1045 + $0x8] sm:$0xff]
      %v1048 = vld [vmem:[%s1045 + $0x10] sm:$0xff]
      %v1049 = vld [vmem:[%s1045 + $0x18] sm:$0xff]
      %v1050 = vld [vmem:[%s1045 + $0x20] sm:$0xff]
      %v1051 = vld [vmem:[%s1045 + $0x28] sm:$0xff]
      %v1052 = vld [vmem:[%s1045 + $0x30] sm:$0xff]
      %v1053 = vld [vmem:[%s1045 + $0x38] sm:$0xff]
      %v1054 = vld [vmem:[%s1045 + $0x40] sm:$0xff]
      %v1055 = vld [vmem:[%s1045 + $0x48] sm:$0xff]
      %v1056 = vld [vmem:[%s1045 + $0x50] sm:$0xff]
      %v1057 = vld [vmem:[%s1045 + $0x58] sm:$0xff]
      %v1058 = vld [vmem:[%s1045 + $0x60] sm:$0xff]
      %v1059 = vld [vmem:[%s1045 + $0x68] sm:$0xff]
      %v1060 = vld [vmem:[%s1045 + $0x70] sm:$0xff]
      %v1061 = vld [vmem:[%s1045 + $0x78] sm:$0xff]
      %1062 = vmatpush.msra.mxu0 %v1061
      %1063 = vmatpush.msra.mxu0 %v1060
      %1064 = vmatpush.msra.mxu0 %v1059
      %1065 = vmatpush.msra.mxu0 %v1058
      %1066 = vmatpush.msra.mxu0 %v1057
      %1067 = vmatpush.msra.mxu0 %v1056
      %1068 = vmatpush.msra.mxu0 %v1055
      %1069 = vmatpush.msra.mxu0 %v1054
      %1070 = vmatpush.msra.mxu0 %v1053
      %1071 = vmatpush.msra.mxu0 %v1052
      %1072 = vmatpush.msra.mxu0 %v1051
      %1073 = vmatpush.msra.mxu0 %v1050
      %1074 = vmatpush.msra.mxu0 %v1049
      %1075 = vmatpush.msra.mxu0 %v1048
      %1076 = vmatpush.msra.mxu0 %v1047
      %1077 = vmatpush.msra.mxu0 %v1046
      %1078 = vmatmul.f32.gmra.mxu0 %v1015
      %v1079 = vpop.f32.mrf.mxu0
      %v1080 = vadd.f32 0.0, %v1079
      %1081 = vmatmul.f32.gmra.mxu0 %v1016
      %v1082 = vpop.f32.mrf.mxu0
      %v1083 = vadd.f32 0.0, %v1082
      %1084 = vmatmul.f32.gmra.mxu0 %v1017
      %v1085 = vpop.f32.mrf.mxu0
      %v1086 = vadd.f32 0.0, %v1085
      %1087 = vmatmul.f32.gmra.mxu0 %v1018
      %v1088 = vpop.f32.mrf.mxu0
      %v1089 = vadd.f32 0.0, %v1088
      %1090 = vmatmul.f32.gmra.mxu0 %v1019
      %v1091 = vpop.f32.mrf.mxu0
      %v1092 = vadd.f32 0.0, %v1091
      %1093 = vmatmul.f32.gmra.mxu0 %v1020
      %v1094 = vpop.f32.mrf.mxu0
      %v1095 = vadd.f32 0.0, %v1094
      %1096 = vmatmul.f32.gmra.mxu0 %v1021
      %v1097 = vpop.f32.mrf.mxu0
      %v1098 = vadd.f32 0.0, %v1097
      %1099 = vmatmul.f32.gmra.mxu0 %v1022
      %v1100 = vpop.f32.mrf.mxu0
      %v1101 = vadd.f32 0.0, %v1100
      %1102 = vmatmul.f32.gmra.mxu0 %v1023
      %v1103 = vpop.f32.mrf.mxu0
      %v1104 = vadd.f32 0.0, %v1103
      %1105 = vmatmul.f32.gmra.mxu0 %v1024
      %v1106 = vpop.f32.mrf.mxu0
      %v1107 = vadd.f32 0.0, %v1106
      %1108 = vmatmul.f32.gmra.mxu0 %v1025
      %v1109 = vpop.f32.mrf.mxu0
      %v1110 = vadd.f32 0.0, %v1109
      %1111 = vmatmul.f32.gmra.mxu0 %v1026
      %v1112 = vpop.f32.mrf.mxu0
      %v1113 = vadd.f32 0.0, %v1112
      %1114 = vmatmul.f32.gmra.mxu0 %v1027
      %v1115 = vpop.f32.mrf.mxu0
      %v1116 = vadd.f32 0.0, %v1115
      %1117 = vmatmul.f32.gmra.mxu0 %v1028
      %v1118 = vpop.f32.mrf.mxu0
      %v1119 = vadd.f32 0.0, %v1118
      %1120 = vmatmul.f32.gmra.mxu0 %v1029
      %v1121 = vpop.f32.mrf.mxu0
      %v1122 = vadd.f32 0.0, %v1121
      %1123 = vmatmul.f32.gmra.mxu0 %v1030
      %v1124 = vpop.f32.mrf.mxu0
      %v1125 = vadd.f32 0.0, %v1124
      %1126 = vmatmul.f32.gmra.mxu0 %v1031
      %v1127 = vpop.f32.mrf.mxu0
      %v1128 = vadd.f32 0.0, %v1127
      %1129 = vmatmul.f32.gmra.mxu0 %v1032
      %v1130 = vpop.f32.mrf.mxu0
      %v1131 = vadd.f32 0.0, %v1130
      %1132 = vmatmul.f32.gmra.mxu0 %v1033
      %v1133 = vpop.f32.mrf.mxu0
      %v1134 = vadd.f32 0.0, %v1133
      %1135 = vmatmul.f32.gmra.mxu0 %v1034
      %v1136 = vpop.f32.mrf.mxu0
      %v1137 = vadd.f32 0.0, %v1136
      %1138 = vmatmul.f32.gmra.mxu0 %v1035
      %v1139 = vpop.f32.mrf.mxu0
      %v1140 = vadd.f32 0.0, %v1139
      %1141 = vmatmul.f32.gmra.mxu0 %v1036
      %v1142 = vpop.f32.mrf.mxu0
      %v1143 = vadd.f32 0.0, %v1142
      %1144 = vmatmul.f32.gmra.mxu0 %v1037
      %v1145 = vpop.f32.mrf.mxu0
      %v1146 = vadd.f32 0.0, %v1145
      %1147 = vmatmul.f32.gmra.mxu0 %v1038
      %v1148 = vpop.f32.mrf.mxu0
      %v1149 = vadd.f32 0.0, %v1148
      %1150 = vmatmul.f32.gmra.mxu0 %v1039
      %v1151 = vpop.f32.mrf.mxu0
      %v1152 = vadd.f32 0.0, %v1151
      %1153 = vmatmul.f32.gmra.mxu0 %v1040
      %v1154 = vpop.f32.mrf.mxu0
      %v1155 = vadd.f32 0.0, %v1154
      %1156 = vmatmul.f32.gmra.mxu0 %v1041
      %v1157 = vpop.f32.mrf.mxu0
      %v1158 = vadd.f32 0.0, %v1157
      %1159 = vmatmul.f32.gmra.mxu0 %v1042
      %v1160 = vpop.f32.mrf.mxu0
      %v1161 = vadd.f32 0.0, %v1160
      %1162 = vmatmul.f32.gmra.mxu0 %v1043
      %v1163 = vpop.f32.mrf.mxu0
      %v1164 = vadd.f32 0.0, %v1163
      %1165 = vmatmul.f32.gmra.mxu0 %v1044
      %v1166 = vpop.f32.mrf.mxu0
      %v1167 = vadd.f32 0.0, %v1166
      %1168 = vdwg.mxu0
      %1169 = vmatpush.msra.mxu0 %v1014
      %1170 = vmatpush.msra.mxu0 %v1013
      %1171 = vmatpush.msra.mxu0 %v1012
      %1172 = vmatpush.msra.mxu0 %v1011
      %1173 = vmatpush.msra.mxu0 %v1010
      %1174 = vmatpush.msra.mxu0 %v1009
      %1175 = vmatpush.msra.mxu0 %v1008
      %1176 = vmatpush.msra.mxu0 %v1007
      %1177 = vmatpush.msra.mxu0 %v1006
      %1178 = vmatpush.msra.mxu0 %v1005
      %1179 = vmatpush.msra.mxu0 %v1004
      %1180 = vmatpush.msra.mxu0 %v1003
      %1181 = vmatpush.msra.mxu0 %v1002
      %1182 = vmatpush.msra.mxu0 %v1001
      %1183 = vmatpush.msra.mxu0 %v1000
      %1184 = vmatpush.msra.mxu0 %v999
      %1185 = vmatmul.f32.gmra.mxu0 %v969
      %v1186 = vpop.f32.mrf.mxu0
      %v1187 = vadd.f32 %v1080, %v1186
      %1188 = vmatmul.f32.gmra.mxu0 %v970
      %v1189 = vpop.f32.mrf.mxu0
      %v1190 = vadd.f32 %v1083, %v1189
      %1191 = vmatmul.f32.gmra.mxu0 %v971
      %v1192 = vpop.f32.mrf.mxu0
      %v1193 = vadd.f32 %v1086, %v1192
      %1194 = vmatmul.f32.gmra.mxu0 %v972
      %v1195 = vpop.f32.mrf.mxu0
      %v1196 = vadd.f32 %v1089, %v1195
      %1197 = vmatmul.f32.gmra.mxu0 %v973
      %v1198 = vpop.f32.mrf.mxu0
      %v1199 = vadd.f32 %v1092, %v1198
      %1200 = vmatmul.f32.gmra.mxu0 %v974
      %v1201 = vpop.f32.mrf.mxu0
      %v1202 = vadd.f32 %v1095, %v1201
      %1203 = vmatmul.f32.gmra.mxu0 %v975
      %v1204 = vpop.f32.mrf.mxu0
      %v1205 = vadd.f32 %v1098, %v1204
      %1206 = vmatmul.f32.gmra.mxu0 %v976
      %v1207 = vpop.f32.mrf.mxu0
      %v1208 = vadd.f32 %v1101, %v1207
      %1209 = vmatmul.f32.gmra.mxu0 %v977
      %v1210 = vpop.f32.mrf.mxu0
      %v1211 = vadd.f32 %v1104, %v1210
      %1212 = vmatmul.f32.gmra.mxu0 %v978
      %v1213 = vpop.f32.mrf.mxu0
      %v1214 = vadd.f32 %v1107, %v1213
      %1215 = vmatmul.f32.gmra.mxu0 %v979
      %v1216 = vpop.f32.mrf.mxu0
      %v1217 = vadd.f32 %v1110, %v1216
      %1218 = vmatmul.f32.gmra.mxu0 %v980
      %v1219 = vpop.f32.mrf.mxu0
      %v1220 = vadd.f32 %v1113, %v1219
      %1221 = vmatmul.f32.gmra.mxu0 %v981
      %v1222 = vpop.f32.mrf.mxu0
      %v1223 = vadd.f32 %v1116, %v1222
      %1224 = vmatmul.f32.gmra.mxu0 %v982
      %v1225 = vpop.f32.mrf.mxu0
      %v1226 = vadd.f32 %v1119, %v1225
      %1227 = vmatmul.f32.gmra.mxu0 %v983
      %v1228 = vpop.f32.mrf.mxu0
      %v1229 = vadd.f32 %v1122, %v1228
      %1230 = vmatmul.f32.gmra.mxu0 %v984
      %v1231 = vpop.f32.mrf.mxu0
      %v1232 = vadd.f32 %v1125, %v1231
      %1233 = vmatmul.f32.gmra.mxu0 %v985
      %v1234 = vpop.f32.mrf.mxu0
      %v1235 = vadd.f32 %v1128, %v1234
      %1236 = vmatmul.f32.gmra.mxu0 %v986
      %v1237 = vpop.f32.mrf.mxu0
      %v1238 = vadd.f32 %v1131, %v1237
      %1239 = vmatmul.f32.gmra.mxu0 %v987
      %v1240 = vpop.f32.mrf.mxu0
      %v1241 = vadd.f32 %v1134, %v1240
      %1242 = vmatmul.f32.gmra.mxu0 %v988
      %v1243 = vpop.f32.mrf.mxu0
      %v1244 = vadd.f32 %v1137, %v1243
      %1245 = vmatmul.f32.gmra.mxu0 %v989
      %v1246 = vpop.f32.mrf.mxu0
      %v1247 = vadd.f32 %v1140, %v1246
      %1248 = vmatmul.f32.gmra.mxu0 %v990
      %v1249 = vpop.f32.mrf.mxu0
      %v1250 = vadd.f32 %v1143, %v1249
      %1251 = vmatmul.f32.gmra.mxu0 %v991
      %v1252 = vpop.f32.mrf.mxu0
      %v1253 = vadd.f32 %v1146, %v1252
      %1254 = vmatmul.f32.gmra.mxu0 %v992
      %v1255 = vpop.f32.mrf.mxu0
      %v1256 = vadd.f32 %v1149, %v1255
      %1257 = vmatmul.f32.gmra.mxu0 %v993
      %v1258 = vpop.f32.mrf.mxu0
      %v1259 = vadd.f32 %v1152, %v1258
      %1260 = vmatmul.f32.gmra.mxu0 %v994
      %v1261 = vpop.f32.mrf.mxu0
      %v1262 = vadd.f32 %v1155, %v1261
      %1263 = vmatmul.f32.gmra.mxu0 %v995
      %v1264 = vpop.f32.mrf.mxu0
      %v1265 = vadd.f32 %v1158, %v1264
      %1266 = vmatmul.f32.gmra.mxu0 %v996
      %v1267 = vpop.f32.mrf.mxu0
      %v1268 = vadd.f32 %v1161, %v1267
      %1269 = vmatmul.f32.gmra.mxu0 %v997
      %v1270 = vpop.f32.mrf.mxu0
      %v1271 = vadd.f32 %v1164, %v1270
      %1272 = vmatmul.f32.gmra.mxu0 %v998
      %v1273 = vpop.f32.mrf.mxu0
      %v1274 = vadd.f32 %v1167, %v1273
      %1275 = vdwg.mxu0
      %v1276 = vld [vmem:[#allocation2 + $0x19] sm:$0xff]
      %v1277 = vld [vmem:[#allocation2 + $0x21] sm:$0xff]
      %v1278 = vld [vmem:[#allocation2 + $0x29] sm:$0xff]
      %v1279 = vld [vmem:[#allocation2 + $0x31] sm:$0xff]
      %v1280 = vld [vmem:[#allocation2 + $0x39] sm:$0xff]
      %v1281 = vld [vmem:[#allocation2 + $0x41] sm:$0xff]
      %v1282 = vld [vmem:[#allocation2 + $0x49] sm:$0xff]
      %v1283 = vld [vmem:[#allocation2 + $0x51] sm:$0xff]
      %v1284 = vld [vmem:[#allocation2 + $0x59] sm:$0xff]
      %v1285 = vld [vmem:[#allocation2 + $0x61] sm:$0xff]
      %v1286 = vld [vmem:[#allocation2 + $0x69] sm:$0xff]
      %v1287 = vld [vmem:[#allocation2 + $0x71] sm:$0xff]
      %v1288 = vld [vmem:[#allocation2 + $0x79] sm:$0xff]
      %v1289 = vld [vmem:[#allocation2 + $0x81] sm:$0xff]
      %v1290 = vld [vmem:[#allocation2 + $0x89] sm:$0xff]
      %v1291 = vld [vmem:[#allocation2 + $0x91] sm:$0xff]
      %v1292 = vld [vmem:[#allocation2 + $0x99] sm:$0xff]
      %v1293 = vld [vmem:[#allocation2 + $0xa1] sm:$0xff]
      %v1294 = vld [vmem:[#allocation2 + $0xa9] sm:$0xff]
      %v1295 = vld [vmem:[#allocation2 + $0xb1] sm:$0xff]
      %v1296 = vld [vmem:[#allocation2 + $0xb9] sm:$0xff]
      %v1297 = vld [vmem:[#allocation2 + $0xc1] sm:$0xff]
      %v1298 = vld [vmem:[#allocation2 + $0xc9] sm:$0xff]
      %v1299 = vld [vmem:[#allocation2 + $0xd1] sm:$0xff]
      %v1300 = vld [vmem:[#allocation2 + $0xd9] sm:$0xff]
      %v1301 = vld [vmem:[#allocation2 + $0xe1] sm:$0xff]
      %v1302 = vld [vmem:[#allocation2 + $0xe9] sm:$0xff]
      %v1303 = vld [vmem:[#allocation2 + $0xf1] sm:$0xff]
      %v1304 = vld [vmem:[#allocation2 + $0xf9] sm:$0xff]
      %v1305 = vld [vmem:[#allocation2 + $0x101] sm:$0xff]
      %s1306 = scalar_lea.vmem %s4, 256
      %v1307 = vld [vmem:[%s1306] sm:$0xff]
      %v1308 = vld [vmem:[%s1306 + $0x8] sm:$0xff]
      %v1309 = vld [vmem:[%s1306 + $0x10] sm:$0xff]
      %v1310 = vld [vmem:[%s1306 + $0x18] sm:$0xff]
      %v1311 = vld [vmem:[%s1306 + $0x20] sm:$0xff]
      %v1312 = vld [vmem:[%s1306 + $0x28] sm:$0xff]
      %v1313 = vld [vmem:[%s1306 + $0x30] sm:$0xff]
      %v1314 = vld [vmem:[%s1306 + $0x38] sm:$0xff]
      %v1315 = vld [vmem:[%s1306 + $0x40] sm:$0xff]
      %v1316 = vld [vmem:[%s1306 + $0x48] sm:$0xff]
      %v1317 = vld [vmem:[%s1306 + $0x50] sm:$0xff]
      %v1318 = vld [vmem:[%s1306 + $0x58] sm:$0xff]
      %v1319 = vld [vmem:[%s1306 + $0x60] sm:$0xff]
      %v1320 = vld [vmem:[%s1306 + $0x68] sm:$0xff]
      %v1321 = vld [vmem:[%s1306 + $0x70] sm:$0xff]
      %v1322 = vld [vmem:[%s1306 + $0x78] sm:$0xff]
      %1323 = vmatpush.msra.mxu0 %v1322
      %1324 = vmatpush.msra.mxu0 %v1321
      %1325 = vmatpush.msra.mxu0 %v1320
      %1326 = vmatpush.msra.mxu0 %v1319
      %1327 = vmatpush.msra.mxu0 %v1318
      %1328 = vmatpush.msra.mxu0 %v1317
      %1329 = vmatpush.msra.mxu0 %v1316
      %1330 = vmatpush.msra.mxu0 %v1315
      %1331 = vmatpush.msra.mxu0 %v1314
      %1332 = vmatpush.msra.mxu0 %v1313
      %1333 = vmatpush.msra.mxu0 %v1312
      %1334 = vmatpush.msra.mxu0 %v1311
      %1335 = vmatpush.msra.mxu0 %v1310
      %1336 = vmatpush.msra.mxu0 %v1309
      %1337 = vmatpush.msra.mxu0 %v1308
      %1338 = vmatpush.msra.mxu0 %v1307
      %1339 = vmatmul.f32.gmra.mxu0 %v1276
      %v1340 = vpop.f32.mrf.mxu0
      %v1341 = vadd.f32 0.0, %v1340
      %1342 = vmatmul.f32.gmra.mxu0 %v1277
      %v1343 = vpop.f32.mrf.mxu0
      %v1344 = vadd.f32 0.0, %v1343
      %1345 = vmatmul.f32.gmra.mxu0 %v1278
      %v1346 = vpop.f32.mrf.mxu0
      %v1347 = vadd.f32 0.0, %v1346
      %1348 = vmatmul.f32.gmra.mxu0 %v1279
      %v1349 = vpop.f32.mrf.mxu0
      %v1350 = vadd.f32 0.0, %v1349
      %1351 = vmatmul.f32.gmra.mxu0 %v1280
      %v1352 = vpop.f32.mrf.mxu0
      %v1353 = vadd.f32 0.0, %v1352
      %1354 = vmatmul.f32.gmra.mxu0 %v1281
      %v1355 = vpop.f32.mrf.mxu0
      %v1356 = vadd.f32 0.0, %v1355
      %1357 = vmatmul.f32.gmra.mxu0 %v1282
      %v1358 = vpop.f32.mrf.mxu0
      %v1359 = vadd.f32 0.0, %v1358
      %1360 = vmatmul.f32.gmra.mxu0 %v1283
      %v1361 = vpop.f32.mrf.mxu0
      %v1362 = vadd.f32 0.0, %v1361
      %1363 = vmatmul.f32.gmra.mxu0 %v1284
      %v1364 = vpop.f32.mrf.mxu0
      %v1365 = vadd.f32 0.0, %v1364
      %1366 = vmatmul.f32.gmra.mxu0 %v1285
      %v1367 = vpop.f32.mrf.mxu0
      %v1368 = vadd.f32 0.0, %v1367
      %1369 = vmatmul.f32.gmra.mxu0 %v1286
      %v1370 = vpop.f32.mrf.mxu0
      %v1371 = vadd.f32 0.0, %v1370
      %1372 = vmatmul.f32.gmra.mxu0 %v1287
      %v1373 = vpop.f32.mrf.mxu0
      %v1374 = vadd.f32 0.0, %v1373
      %1375 = vmatmul.f32.gmra.mxu0 %v1288
      %v1376 = vpop.f32.mrf.mxu0
      %v1377 = vadd.f32 0.0, %v1376
      %1378 = vmatmul.f32.gmra.mxu0 %v1289
      %v1379 = vpop.f32.mrf.mxu0
      %v1380 = vadd.f32 0.0, %v1379
      %1381 = vmatmul.f32.gmra.mxu0 %v1290
      %v1382 = vpop.f32.mrf.mxu0
      %v1383 = vadd.f32 0.0, %v1382
      %1384 = vmatmul.f32.gmra.mxu0 %v1291
      %v1385 = vpop.f32.mrf.mxu0
      %v1386 = vadd.f32 0.0, %v1385
      %1387 = vmatmul.f32.gmra.mxu0 %v1292
      %v1388 = vpop.f32.mrf.mxu0
      %v1389 = vadd.f32 0.0, %v1388
      %1390 = vmatmul.f32.gmra.mxu0 %v1293
      %v1391 = vpop.f32.mrf.mxu0
      %v1392 = vadd.f32 0.0, %v1391
      %1393 = vmatmul.f32.gmra.mxu0 %v1294
      %v1394 = vpop.f32.mrf.mxu0
      %v1395 = vadd.f32 0.0, %v1394
      %1396 = vmatmul.f32.gmra.mxu0 %v1295
      %v1397 = vpop.f32.mrf.mxu0
      %v1398 = vadd.f32 0.0, %v1397
      %1399 = vmatmul.f32.gmra.mxu0 %v1296
      %v1400 = vpop.f32.mrf.mxu0
      %v1401 = vadd.f32 0.0, %v1400
      %1402 = vmatmul.f32.gmra.mxu0 %v1297
      %v1403 = vpop.f32.mrf.mxu0
      %v1404 = vadd.f32 0.0, %v1403
      %1405 = vmatmul.f32.gmra.mxu0 %v1298
      %v1406 = vpop.f32.mrf.mxu0
      %v1407 = vadd.f32 0.0, %v1406
      %1408 = vmatmul.f32.gmra.mxu0 %v1299
      %v1409 = vpop.f32.mrf.mxu0
      %v1410 = vadd.f32 0.0, %v1409
      %1411 = vmatmul.f32.gmra.mxu0 %v1300
      %v1412 = vpop.f32.mrf.mxu0
      %v1413 = vadd.f32 0.0, %v1412
      %1414 = vmatmul.f32.gmra.mxu0 %v1301
      %v1415 = vpop.f32.mrf.mxu0
      %v1416 = vadd.f32 0.0, %v1415
      %1417 = vmatmul.f32.gmra.mxu0 %v1302
      %v1418 = vpop.f32.mrf.mxu0
      %v1419 = vadd.f32 0.0, %v1418
      %1420 = vmatmul.f32.gmra.mxu0 %v1303
      %v1421 = vpop.f32.mrf.mxu0
      %v1422 = vadd.f32 0.0, %v1421
      %1423 = vmatmul.f32.gmra.mxu0 %v1304
      %v1424 = vpop.f32.mrf.mxu0
      %v1425 = vadd.f32 0.0, %v1424
      %1426 = vmatmul.f32.gmra.mxu0 %v1305
      %v1427 = vpop.f32.mrf.mxu0
      %v1428 = vadd.f32 0.0, %v1427
      %1429 = vdwg.mxu0
      %v1430 = vadd.f32 %v1187, %v1341
      %v1431 = vadd.f32 %v1190, %v1344
      %v1432 = vadd.f32 %v1193, %v1347
      %v1433 = vadd.f32 %v1196, %v1350
      %v1434 = vadd.f32 %v1199, %v1353
      %v1435 = vadd.f32 %v1202, %v1356
      %v1436 = vadd.f32 %v1205, %v1359
      %v1437 = vadd.f32 %v1208, %v1362
      %v1438 = vadd.f32 %v1211, %v1365
      %v1439 = vadd.f32 %v1214, %v1368
      %v1440 = vadd.f32 %v1217, %v1371
      %v1441 = vadd.f32 %v1220, %v1374
      %v1442 = vadd.f32 %v1223, %v1377
      %v1443 = vadd.f32 %v1226, %v1380
      %v1444 = vadd.f32 %v1229, %v1383
      %v1445 = vadd.f32 %v1232, %v1386
      %v1446 = vadd.f32 %v1235, %v1389
      %v1447 = vadd.f32 %v1238, %v1392
      %v1448 = vadd.f32 %v1241, %v1395
      %v1449 = vadd.f32 %v1244, %v1398
      %v1450 = vadd.f32 %v1247, %v1401
      %v1451 = vadd.f32 %v1250, %v1404
      %v1452 = vadd.f32 %v1253, %v1407
      %v1453 = vadd.f32 %v1256, %v1410
      %v1454 = vadd.f32 %v1259, %v1413
      %v1455 = vadd.f32 %v1262, %v1416
      %v1456 = vadd.f32 %v1265, %v1419
      %v1457 = vadd.f32 %v1268, %v1422
      %v1458 = vadd.f32 %v1271, %v1425
      %v1459 = vadd.f32 %v1274, %v1428
      %v1460 = vld [vmem:[#allocation2 + $0x2f] sm:$0xff]
      %v1461 = vld [vmem:[#allocation2 + $0x37] sm:$0xff]
      %v1462 = vld [vmem:[#allocation2 + $0x3f] sm:$0xff]
      %v1463 = vld [vmem:[#allocation2 + $0x47] sm:$0xff]
      %v1464 = vld [vmem:[#allocation2 + $0x4f] sm:$0xff]
      %v1465 = vld [vmem:[#allocation2 + $0x57] sm:$0xff]
      %v1466 = vld [vmem:[#allocation2 + $0x5f] sm:$0xff]
      %v1467 = vld [vmem:[#allocation2 + $0x67] sm:$0xff]
      %v1468 = vld [vmem:[#allocation2 + $0x6f] sm:$0xff]
      %v1469 = vld [vmem:[#allocation2 + $0x77] sm:$0xff]
      %v1470 = vld [vmem:[#allocation2 + $0x7f] sm:$0xff]
      %v1471 = vld [vmem:[#allocation2 + $0x87] sm:$0xff]
      %v1472 = vld [vmem:[#allocation2 + $0x8f] sm:$0xff]
      %v1473 = vld [vmem:[#allocation2 + $0x97] sm:$0xff]
      %v1474 = vld [vmem:[#allocation2 + $0x9f] sm:$0xff]
      %v1475 = vld [vmem:[#allocation2 + $0xa7] sm:$0xff]
      %v1476 = vld [vmem:[#allocation2 + $0xaf] sm:$0xff]
      %v1477 = vld [vmem:[#allocation2 + $0xb7] sm:$0xff]
      %v1478 = vld [vmem:[#allocation2 + $0xbf] sm:$0xff]
      %v1479 = vld [vmem:[#allocation2 + $0xc7] sm:$0xff]
      %v1480 = vld [vmem:[#allocation2 + $0xcf] sm:$0xff]
      %v1481 = vld [vmem:[#allocation2 + $0xd7] sm:$0xff]
      %v1482 = vld [vmem:[#allocation2 + $0xdf] sm:$0xff]
      %v1483 = vld [vmem:[#allocation2 + $0xe7] sm:$0xff]
      %v1484 = vld [vmem:[#allocation2 + $0xef] sm:$0xff]
      %v1485 = vld [vmem:[#allocation2 + $0xf7] sm:$0xff]
      %v1486 = vld [vmem:[#allocation2 + $0xff] sm:$0xff]
      %v1487 = vld [vmem:[#allocation2 + $0x107] sm:$0xff]
      %v1488 = vld [vmem:[#allocation2 + $0x10f] sm:$0xff]
      %v1489 = vld [vmem:[#allocation2 + $0x117] sm:$0xff]
      %s1490 = scalar_lea.vmem %s4, 384
      %v1491 = vld [vmem:[%s1490] sm:$0xff]
      %v1492 = vld [vmem:[%s1490 + $0x8] sm:$0xff]
      %v1493 = vld [vmem:[%s1490 + $0x10] sm:$0xff]
      %v1494 = vld [vmem:[%s1490 + $0x18] sm:$0xff]
      %v1495 = vld [vmem:[%s1490 + $0x20] sm:$0xff]
      %v1496 = vld [vmem:[%s1490 + $0x28] sm:$0xff]
      %v1497 = vld [vmem:[%s1490 + $0x30] sm:$0xff]
      %v1498 = vld [vmem:[%s1490 + $0x38] sm:$0xff]
      %v1499 = vld [vmem:[%s1490 + $0x40] sm:$0xff]
      %v1500 = vld [vmem:[%s1490 + $0x48] sm:$0xff]
      %v1501 = vld [vmem:[%s1490 + $0x50] sm:$0xff]
      %v1502 = vld [vmem:[%s1490 + $0x58] sm:$0xff]
      %v1503 = vld [vmem:[%s1490 + $0x60] sm:$0xff]
      %v1504 = vld [vmem:[%s1490 + $0x68] sm:$0xff]
      %v1505 = vld [vmem:[%s1490 + $0x70] sm:$0xff]
      %v1506 = vld [vmem:[%s1490 + $0x78] sm:$0xff]
      %1507 = vmatpush.msra.mxu0 %v1506
      %1508 = vmatpush.msra.mxu0 %v1505
      %1509 = vmatpush.msra.mxu0 %v1504
      %1510 = vmatpush.msra.mxu0 %v1503
      %1511 = vmatpush.msra.mxu0 %v1502
      %1512 = vmatpush.msra.mxu0 %v1501
      %1513 = vmatpush.msra.mxu0 %v1500
      %1514 = vmatpush.msra.mxu0 %v1499
      %1515 = vmatpush.msra.mxu0 %v1498
      %1516 = vmatpush.msra.mxu0 %v1497
      %1517 = vmatpush.msra.mxu0 %v1496
      %1518 = vmatpush.msra.mxu0 %v1495
      %1519 = vmatpush.msra.mxu0 %v1494
      %1520 = vmatpush.msra.mxu0 %v1493
      %1521 = vmatpush.msra.mxu0 %v1492
      %1522 = vmatpush.msra.mxu0 %v1491
      %1523 = vmatmul.f32.gmra.mxu0 %v1460
      %v1524 = vpop.f32.mrf.mxu0
      %v1525 = vadd.f32 0.0, %v1524
      %1526 = vmatmul.f32.gmra.mxu0 %v1461
      %v1527 = vpop.f32.mrf.mxu0
      %v1528 = vadd.f32 0.0, %v1527
      %1529 = vmatmul.f32.gmra.mxu0 %v1462
      %v1530 = vpop.f32.mrf.mxu0
      %v1531 = vadd.f32 0.0, %v1530
      %1532 = vmatmul.f32.gmra.mxu0 %v1463
      %v1533 = vpop.f32.mrf.mxu0
      %v1534 = vadd.f32 0.0, %v1533
      %1535 = vmatmul.f32.gmra.mxu0 %v1464
      %v1536 = vpop.f32.mrf.mxu0
      %v1537 = vadd.f32 0.0, %v1536
      %1538 = vmatmul.f32.gmra.mxu0 %v1465
      %v1539 = vpop.f32.mrf.mxu0
      %v1540 = vadd.f32 0.0, %v1539
      %1541 = vmatmul.f32.gmra.mxu0 %v1466
      %v1542 = vpop.f32.mrf.mxu0
      %v1543 = vadd.f32 0.0, %v1542
      %1544 = vmatmul.f32.gmra.mxu0 %v1467
      %v1545 = vpop.f32.mrf.mxu0
      %v1546 = vadd.f32 0.0, %v1545
      %1547 = vmatmul.f32.gmra.mxu0 %v1468
      %v1548 = vpop.f32.mrf.mxu0
      %v1549 = vadd.f32 0.0, %v1548
      %1550 = vmatmul.f32.gmra.mxu0 %v1469
      %v1551 = vpop.f32.mrf.mxu0
      %v1552 = vadd.f32 0.0, %v1551
      %1553 = vmatmul.f32.gmra.mxu0 %v1470
      %v1554 = vpop.f32.mrf.mxu0
      %v1555 = vadd.f32 0.0, %v1554
      %1556 = vmatmul.f32.gmra.mxu0 %v1471
      %v1557 = vpop.f32.mrf.mxu0
      %v1558 = vadd.f32 0.0, %v1557
      %1559 = vmatmul.f32.gmra.mxu0 %v1472
      %v1560 = vpop.f32.mrf.mxu0
      %v1561 = vadd.f32 0.0, %v1560
      %1562 = vmatmul.f32.gmra.mxu0 %v1473
      %v1563 = vpop.f32.mrf.mxu0
      %v1564 = vadd.f32 0.0, %v1563
      %1565 = vmatmul.f32.gmra.mxu0 %v1474
      %v1566 = vpop.f32.mrf.mxu0
      %v1567 = vadd.f32 0.0, %v1566
      %1568 = vmatmul.f32.gmra.mxu0 %v1475
      %v1569 = vpop.f32.mrf.mxu0
      %v1570 = vadd.f32 0.0, %v1569
      %1571 = vmatmul.f32.gmra.mxu0 %v1476
      %v1572 = vpop.f32.mrf.mxu0
      %v1573 = vadd.f32 0.0, %v1572
      %1574 = vmatmul.f32.gmra.mxu0 %v1477
      %v1575 = vpop.f32.mrf.mxu0
      %v1576 = vadd.f32 0.0, %v1575
      %1577 = vmatmul.f32.gmra.mxu0 %v1478
      %v1578 = vpop.f32.mrf.mxu0
      %v1579 = vadd.f32 0.0, %v1578
      %1580 = vmatmul.f32.gmra.mxu0 %v1479
      %v1581 = vpop.f32.mrf.mxu0
      %v1582 = vadd.f32 0.0, %v1581
      %1583 = vmatmul.f32.gmra.mxu0 %v1480
      %v1584 = vpop.f32.mrf.mxu0
      %v1585 = vadd.f32 0.0, %v1584
      %1586 = vmatmul.f32.gmra.mxu0 %v1481
      %v1587 = vpop.f32.mrf.mxu0
      %v1588 = vadd.f32 0.0, %v1587
      %1589 = vmatmul.f32.gmra.mxu0 %v1482
      %v1590 = vpop.f32.mrf.mxu0
      %v1591 = vadd.f32 0.0, %v1590
      %1592 = vmatmul.f32.gmra.mxu0 %v1483
      %v1593 = vpop.f32.mrf.mxu0
      %v1594 = vadd.f32 0.0, %v1593
      %1595 = vmatmul.f32.gmra.mxu0 %v1484
      %v1596 = vpop.f32.mrf.mxu0
      %v1597 = vadd.f32 0.0, %v1596
      %1598 = vmatmul.f32.gmra.mxu0 %v1485
      %v1599 = vpop.f32.mrf.mxu0
      %v1600 = vadd.f32 0.0, %v1599
      %1601 = vmatmul.f32.gmra.mxu0 %v1486
      %v1602 = vpop.f32.mrf.mxu0
      %v1603 = vadd.f32 0.0, %v1602
      %1604 = vmatmul.f32.gmra.mxu0 %v1487
      %v1605 = vpop.f32.mrf.mxu0
      %v1606 = vadd.f32 0.0, %v1605
      %1607 = vmatmul.f32.gmra.mxu0 %v1488
      %v1608 = vpop.f32.mrf.mxu0
      %v1609 = vadd.f32 0.0, %v1608
      %1610 = vmatmul.f32.gmra.mxu0 %v1489
      %v1611 = vpop.f32.mrf.mxu0
      %v1612 = vadd.f32 0.0, %v1611
      %1613 = vdwg.mxu0
      %v1614 = vadd.f32 %v1430, %v1525
      %v1615 = vadd.f32 %v1431, %v1528
      %v1616 = vadd.f32 %v1432, %v1531
      %v1617 = vadd.f32 %v1433, %v1534
      %v1618 = vadd.f32 %v1434, %v1537
      %v1619 = vadd.f32 %v1435, %v1540
      %v1620 = vadd.f32 %v1436, %v1543
      %v1621 = vadd.f32 %v1437, %v1546
      %v1622 = vadd.f32 %v1438, %v1549
      %v1623 = vadd.f32 %v1439, %v1552
      %v1624 = vadd.f32 %v1440, %v1555
      %v1625 = vadd.f32 %v1441, %v1558
      %v1626 = vadd.f32 %v1442, %v1561
      %v1627 = vadd.f32 %v1443, %v1564
      %v1628 = vadd.f32 %v1444, %v1567
      %v1629 = vadd.f32 %v1445, %v1570
      %v1630 = vadd.f32 %v1446, %v1573
      %v1631 = vadd.f32 %v1447, %v1576
      %v1632 = vadd.f32 %v1448, %v1579
      %v1633 = vadd.f32 %v1449, %v1582
      %v1634 = vadd.f32 %v1450, %v1585
      %v1635 = vadd.f32 %v1451, %v1588
      %v1636 = vadd.f32 %v1452, %v1591
      %v1637 = vadd.f32 %v1453, %v1594
      %v1638 = vadd.f32 %v1454, %v1597
      %v1639 = vadd.f32 %v1455, %v1600
      %v1640 = vadd.f32 %v1456, %v1603
      %v1641 = vadd.f32 %v1457, %v1606
      %v1642 = vadd.f32 %v1458, %v1609
      %v1643 = vadd.f32 %v1459, %v1612
      %v1644 = vld [vmem:[#allocation2 + $0x30] sm:$0xff]
      %v1645 = vld [vmem:[#allocation2 + $0x38] sm:$0xff]
      %v1646 = vld [vmem:[#allocation2 + $0x40] sm:$0xff]
      %v1647 = vld [vmem:[#allocation2 + $0x48] sm:$0xff]
      %v1648 = vld [vmem:[#allocation2 + $0x50] sm:$0xff]
      %v1649 = vld [vmem:[#allocation2 + $0x58] sm:$0xff]
      %v1650 = vld [vmem:[#allocation2 + $0x60] sm:$0xff]
      %v1651 = vld [vmem:[#allocation2 + $0x68] sm:$0xff]
      %v1652 = vld [vmem:[#allocation2 + $0x70] sm:$0xff]
      %v1653 = vld [vmem:[#allocation2 + $0x78] sm:$0xff]
      %v1654 = vld [vmem:[#allocation2 + $0x80] sm:$0xff]
      %v1655 = vld [vmem:[#allocation2 + $0x88] sm:$0xff]
      %v1656 = vld [vmem:[#allocation2 + $0x90] sm:$0xff]
      %v1657 = vld [vmem:[#allocation2 + $0x98] sm:$0xff]
      %v1658 = vld [vmem:[#allocation2 + $0xa0] sm:$0xff]
      %v1659 = vld [vmem:[#allocation2 + $0xa8] sm:$0xff]
      %v1660 = vld [vmem:[#allocation2 + $0xb0] sm:$0xff]
      %v1661 = vld [vmem:[#allocation2 + $0xb8] sm:$0xff]
      %v1662 = vld [vmem:[#allocation2 + $0xc0] sm:$0xff]
      %v1663 = vld [vmem:[#allocation2 + $0xc8] sm:$0xff]
      %v1664 = vld [vmem:[#allocation2 + $0xd0] sm:$0xff]
      %v1665 = vld [vmem:[#allocation2 + $0xd8] sm:$0xff]
      %v1666 = vld [vmem:[#allocation2 + $0xe0] sm:$0xff]
      %v1667 = vld [vmem:[#allocation2 + $0xe8] sm:$0xff]
      %v1668 = vld [vmem:[#allocation2 + $0xf0] sm:$0xff]
      %v1669 = vld [vmem:[#allocation2 + $0xf8] sm:$0xff]
      %v1670 = vld [vmem:[#allocation2 + $0x100] sm:$0xff]
      %v1671 = vld [vmem:[#allocation2 + $0x108] sm:$0xff]
      %v1672 = vld [vmem:[#allocation2 + $0x110] sm:$0xff]
      %v1673 = vld [vmem:[#allocation2 + $0x118] sm:$0xff]
      %s1674 = scalar_lea.vmem %s4, 512
      %v1675 = vld [vmem:[%s1674] sm:$0xff]
      %v1676 = vld [vmem:[%s1674 + $0x8] sm:$0xff]
      %v1677 = vld [vmem:[%s1674 + $0x10] sm:$0xff]
      %v1678 = vld [vmem:[%s1674 + $0x18] sm:$0xff]
      %v1679 = vld [vmem:[%s1674 + $0x20] sm:$0xff]
      %v1680 = vld [vmem:[%s1674 + $0x28] sm:$0xff]
      %v1681 = vld [vmem:[%s1674 + $0x30] sm:$0xff]
      %v1682 = vld [vmem:[%s1674 + $0x38] sm:$0xff]
      %v1683 = vld [vmem:[%s1674 + $0x40] sm:$0xff]
      %v1684 = vld [vmem:[%s1674 + $0x48] sm:$0xff]
      %v1685 = vld [vmem:[%s1674 + $0x50] sm:$0xff]
      %v1686 = vld [vmem:[%s1674 + $0x58] sm:$0xff]
      %v1687 = vld [vmem:[%s1674 + $0x60] sm:$0xff]
      %v1688 = vld [vmem:[%s1674 + $0x68] sm:$0xff]
      %v1689 = vld [vmem:[%s1674 + $0x70] sm:$0xff]
      %v1690 = vld [vmem:[%s1674 + $0x78] sm:$0xff]
      %1691 = vmatpush.msra.mxu0 %v1690
      %1692 = vmatpush.msra.mxu0 %v1689
      %1693 = vmatpush.msra.mxu0 %v1688
      %1694 = vmatpush.msra.mxu0 %v1687
      %1695 = vmatpush.msra.mxu0 %v1686
      %1696 = vmatpush.msra.mxu0 %v1685
      %1697 = vmatpush.msra.mxu0 %v1684
      %1698 = vmatpush.msra.mxu0 %v1683
      %1699 = vmatpush.msra.mxu0 %v1682
      %1700 = vmatpush.msra.mxu0 %v1681
      %1701 = vmatpush.msra.mxu0 %v1680
      %1702 = vmatpush.msra.mxu0 %v1679
      %1703 = vmatpush.msra.mxu0 %v1678
      %1704 = vmatpush.msra.mxu0 %v1677
      %1705 = vmatpush.msra.mxu0 %v1676
      %1706 = vmatpush.msra.mxu0 %v1675
      %1707 = vmatmul.f32.gmra.mxu0 %v1644
      %v1708 = vpop.f32.mrf.mxu0
      %v1709 = vadd.f32 0.0, %v1708
      %1710 = vmatmul.f32.gmra.mxu0 %v1645
      %v1711 = vpop.f32.mrf.mxu0
      %v1712 = vadd.f32 0.0, %v1711
      %1713 = vmatmul.f32.gmra.mxu0 %v1646
      %v1714 = vpop.f32.mrf.mxu0
      %v1715 = vadd.f32 0.0, %v1714
      %1716 = vmatmul.f32.gmra.mxu0 %v1647
      %v1717 = vpop.f32.mrf.mxu0
      %v1718 = vadd.f32 0.0, %v1717
      %1719 = vmatmul.f32.gmra.mxu0 %v1648
      %v1720 = vpop.f32.mrf.mxu0
      %v1721 = vadd.f32 0.0, %v1720
      %1722 = vmatmul.f32.gmra.mxu0 %v1649
      %v1723 = vpop.f32.mrf.mxu0
      %v1724 = vadd.f32 0.0, %v1723
      %1725 = vmatmul.f32.gmra.mxu0 %v1650
      %v1726 = vpop.f32.mrf.mxu0
      %v1727 = vadd.f32 0.0, %v1726
      %1728 = vmatmul.f32.gmra.mxu0 %v1651
      %v1729 = vpop.f32.mrf.mxu0
      %v1730 = vadd.f32 0.0, %v1729
      %1731 = vmatmul.f32.gmra.mxu0 %v1652
      %v1732 = vpop.f32.mrf.mxu0
      %v1733 = vadd.f32 0.0, %v1732
      %1734 = vmatmul.f32.gmra.mxu0 %v1653
      %v1735 = vpop.f32.mrf.mxu0
      %v1736 = vadd.f32 0.0, %v1735
      %1737 = vmatmul.f32.gmra.mxu0 %v1654
      %v1738 = vpop.f32.mrf.mxu0
      %v1739 = vadd.f32 0.0, %v1738
      %1740 = vmatmul.f32.gmra.mxu0 %v1655
      %v1741 = vpop.f32.mrf.mxu0
      %v1742 = vadd.f32 0.0, %v1741
      %1743 = vmatmul.f32.gmra.mxu0 %v1656
      %v1744 = vpop.f32.mrf.mxu0
      %v1745 = vadd.f32 0.0, %v1744
      %1746 = vmatmul.f32.gmra.mxu0 %v1657
      %v1747 = vpop.f32.mrf.mxu0
      %v1748 = vadd.f32 0.0, %v1747
      %1749 = vmatmul.f32.gmra.mxu0 %v1658
      %v1750 = vpop.f32.mrf.mxu0
      %v1751 = vadd.f32 0.0, %v1750
      %1752 = vmatmul.f32.gmra.mxu0 %v1659
      %v1753 = vpop.f32.mrf.mxu0
      %v1754 = vadd.f32 0.0, %v1753
      %1755 = vmatmul.f32.gmra.mxu0 %v1660
      %v1756 = vpop.f32.mrf.mxu0
      %v1757 = vadd.f32 0.0, %v1756
      %1758 = vmatmul.f32.gmra.mxu0 %v1661
      %v1759 = vpop.f32.mrf.mxu0
      %v1760 = vadd.f32 0.0, %v1759
      %1761 = vmatmul.f32.gmra.mxu0 %v1662
      %v1762 = vpop.f32.mrf.mxu0
      %v1763 = vadd.f32 0.0, %v1762
      %1764 = vmatmul.f32.gmra.mxu0 %v1663
      %v1765 = vpop.f32.mrf.mxu0
      %v1766 = vadd.f32 0.0, %v1765
      %1767 = vmatmul.f32.gmra.mxu0 %v1664
      %v1768 = vpop.f32.mrf.mxu0
      %v1769 = vadd.f32 0.0, %v1768
      %1770 = vmatmul.f32.gmra.mxu0 %v1665
      %v1771 = vpop.f32.mrf.mxu0
      %v1772 = vadd.f32 0.0, %v1771
      %1773 = vmatmul.f32.gmra.mxu0 %v1666
      %v1774 = vpop.f32.mrf.mxu0
      %v1775 = vadd.f32 0.0, %v1774
      %1776 = vmatmul.f32.gmra.mxu0 %v1667
      %v1777 = vpop.f32.mrf.mxu0
      %v1778 = vadd.f32 0.0, %v1777
      %1779 = vmatmul.f32.gmra.mxu0 %v1668
      %v1780 = vpop.f32.mrf.mxu0
      %v1781 = vadd.f32 0.0, %v1780
      %1782 = vmatmul.f32.gmra.mxu0 %v1669
      %v1783 = vpop.f32.mrf.mxu0
      %v1784 = vadd.f32 0.0, %v1783
      %1785 = vmatmul.f32.gmra.mxu0 %v1670
      %v1786 = vpop.f32.mrf.mxu0
      %v1787 = vadd.f32 0.0, %v1786
      %1788 = vmatmul.f32.gmra.mxu0 %v1671
      %v1789 = vpop.f32.mrf.mxu0
      %v1790 = vadd.f32 0.0, %v1789
      %1791 = vmatmul.f32.gmra.mxu0 %v1672
      %v1792 = vpop.f32.mrf.mxu0
      %v1793 = vadd.f32 0.0, %v1792
      %1794 = vmatmul.f32.gmra.mxu0 %v1673
      %v1795 = vpop.f32.mrf.mxu0
      %v1796 = vadd.f32 0.0, %v1795
      %1797 = vdwg.mxu0
      %v1798 = vadd.f32 %v1614, %v1709
      %v1799 = vadd.f32 %v1615, %v1712
      %v1800 = vadd.f32 %v1616, %v1715
      %v1801 = vadd.f32 %v1617, %v1718
      %v1802 = vadd.f32 %v1618, %v1721
      %v1803 = vadd.f32 %v1619, %v1724
      %v1804 = vadd.f32 %v1620, %v1727
      %v1805 = vadd.f32 %v1621, %v1730
      %v1806 = vadd.f32 %v1622, %v1733
      %v1807 = vadd.f32 %v1623, %v1736
      %v1808 = vadd.f32 %v1624, %v1739
      %v1809 = vadd.f32 %v1625, %v1742
      %v1810 = vadd.f32 %v1626, %v1745
      %v1811 = vadd.f32 %v1627, %v1748
      %v1812 = vadd.f32 %v1628, %v1751
      %v1813 = vadd.f32 %v1629, %v1754
      %v1814 = vadd.f32 %v1630, %v1757
      %v1815 = vadd.f32 %v1631, %v1760
      %v1816 = vadd.f32 %v1632, %v1763
      %v1817 = vadd.f32 %v1633, %v1766
      %v1818 = vadd.f32 %v1634, %v1769
      %v1819 = vadd.f32 %v1635, %v1772
      %v1820 = vadd.f32 %v1636, %v1775
      %v1821 = vadd.f32 %v1637, %v1778
      %v1822 = vadd.f32 %v1638, %v1781
      %v1823 = vadd.f32 %v1639, %v1784
      %v1824 = vadd.f32 %v1640, %v1787
      %v1825 = vadd.f32 %v1641, %v1790
      %v1826 = vadd.f32 %v1642, %v1793
      %v1827 = vadd.f32 %v1643, %v1796
      %v1828 = vld [vmem:[#allocation2 + $0x31] sm:$0xff]
      %v1829 = vld [vmem:[#allocation2 + $0x39] sm:$0xff]
      %v1830 = vld [vmem:[#allocation2 + $0x41] sm:$0xff]
      %v1831 = vld [vmem:[#allocation2 + $0x49] sm:$0xff]
      %v1832 = vld [vmem:[#allocation2 + $0x51] sm:$0xff]
      %v1833 = vld [vmem:[#allocation2 + $0x59] sm:$0xff]
      %v1834 = vld [vmem:[#allocation2 + $0x61] sm:$0xff]
      %v1835 = vld [vmem:[#allocation2 + $0x69] sm:$0xff]
      %v1836 = vld [vmem:[#allocation2 + $0x71] sm:$0xff]
      %v1837 = vld [vmem:[#allocation2 + $0x79] sm:$0xff]
      %v1838 = vld [vmem:[#allocation2 + $0x81] sm:$0xff]
      %v1839 = vld [vmem:[#allocation2 + $0x89] sm:$0xff]
      %v1840 = vld [vmem:[#allocation2 + $0x91] sm:$0xff]
      %v1841 = vld [vmem:[#allocation2 + $0x99] sm:$0xff]
      %v1842 = vld [vmem:[#allocation2 + $0xa1] sm:$0xff]
      %v1843 = vld [vmem:[#allocation2 + $0xa9] sm:$0xff]
      %v1844 = vld [vmem:[#allocation2 + $0xb1] sm:$0xff]
      %v1845 = vld [vmem:[#allocation2 + $0xb9] sm:$0xff]
      %v1846 = vld [vmem:[#allocation2 + $0xc1] sm:$0xff]
      %v1847 = vld [vmem:[#allocation2 + $0xc9] sm:$0xff]
      %v1848 = vld [vmem:[#allocation2 + $0xd1] sm:$0xff]
      %v1849 = vld [vmem:[#allocation2 + $0xd9] sm:$0xff]
      %v1850 = vld [vmem:[#allocation2 + $0xe1] sm:$0xff]
      %v1851 = vld [vmem:[#allocation2 + $0xe9] sm:$0xff]
      %v1852 = vld [vmem:[#allocation2 + $0xf1] sm:$0xff]
      %v1853 = vld [vmem:[#allocation2 + $0xf9] sm:$0xff]
      %v1854 = vld [vmem:[#allocation2 + $0x101] sm:$0xff]
      %v1855 = vld [vmem:[#allocation2 + $0x109] sm:$0xff]
      %v1856 = vld [vmem:[#allocation2 + $0x111] sm:$0xff]
      %v1857 = vld [vmem:[#allocation2 + $0x119] sm:$0xff]
      %s1858 = scalar_lea.vmem %s4, 640
      %v1859 = vld [vmem:[%s1858] sm:$0xff]
      %v1860 = vld [vmem:[%s1858 + $0x8] sm:$0xff]
      %v1861 = vld [vmem:[%s1858 + $0x10] sm:$0xff]
      %v1862 = vld [vmem:[%s1858 + $0x18] sm:$0xff]
      %v1863 = vld [vmem:[%s1858 + $0x20] sm:$0xff]
      %v1864 = vld [vmem:[%s1858 + $0x28] sm:$0xff]
      %v1865 = vld [vmem:[%s1858 + $0x30] sm:$0xff]
      %v1866 = vld [vmem:[%s1858 + $0x38] sm:$0xff]
      %v1867 = vld [vmem:[%s1858 + $0x40] sm:$0xff]
      %v1868 = vld [vmem:[%s1858 + $0x48] sm:$0xff]
      %v1869 = vld [vmem:[%s1858 + $0x50] sm:$0xff]
      %v1870 = vld [vmem:[%s1858 + $0x58] sm:$0xff]
      %v1871 = vld [vmem:[%s1858 + $0x60] sm:$0xff]
      %v1872 = vld [vmem:[%s1858 + $0x68] sm:$0xff]
      %v1873 = vld [vmem:[%s1858 + $0x70] sm:$0xff]
      %v1874 = vld [vmem:[%s1858 + $0x78] sm:$0xff]
      %1875 = vmatpush.msra.mxu0 %v1874
      %1876 = vmatpush.msra.mxu0 %v1873
      %1877 = vmatpush.msra.mxu0 %v1872
      %1878 = vmatpush.msra.mxu0 %v1871
      %1879 = vmatpush.msra.mxu0 %v1870
      %1880 = vmatpush.msra.mxu0 %v1869
      %1881 = vmatpush.msra.mxu0 %v1868
      %1882 = vmatpush.msra.mxu0 %v1867
      %1883 = vmatpush.msra.mxu0 %v1866
      %1884 = vmatpush.msra.mxu0 %v1865
      %1885 = vmatpush.msra.mxu0 %v1864
      %1886 = vmatpush.msra.mxu0 %v1863
      %1887 = vmatpush.msra.mxu0 %v1862
      %1888 = vmatpush.msra.mxu0 %v1861
      %1889 = vmatpush.msra.mxu0 %v1860
      %1890 = vmatpush.msra.mxu0 %v1859
      %1891 = vmatmul.f32.gmra.mxu0 %v1828
      %v1892 = vpop.f32.mrf.mxu0
      %v1893 = vadd.f32 0.0, %v1892
      %1894 = vmatmul.f32.gmra.mxu0 %v1829
      %v1895 = vpop.f32.mrf.mxu0
      %v1896 = vadd.f32 0.0, %v1895
      %1897 = vmatmul.f32.gmra.mxu0 %v1830
      %v1898 = vpop.f32.mrf.mxu0
      %v1899 = vadd.f32 0.0, %v1898
      %1900 = vmatmul.f32.gmra.mxu0 %v1831
      %v1901 = vpop.f32.mrf.mxu0
      %v1902 = vadd.f32 0.0, %v1901
      %1903 = vmatmul.f32.gmra.mxu0 %v1832
      %v1904 = vpop.f32.mrf.mxu0
      %v1905 = vadd.f32 0.0, %v1904
      %1906 = vmatmul.f32.gmra.mxu0 %v1833
      %v1907 = vpop.f32.mrf.mxu0
      %v1908 = vadd.f32 0.0, %v1907
      %1909 = vmatmul.f32.gmra.mxu0 %v1834
      %v1910 = vpop.f32.mrf.mxu0
      %v1911 = vadd.f32 0.0, %v1910
      %1912 = vmatmul.f32.gmra.mxu0 %v1835
      %v1913 = vpop.f32.mrf.mxu0
      %v1914 = vadd.f32 0.0, %v1913
      %1915 = vmatmul.f32.gmra.mxu0 %v1836
      %v1916 = vpop.f32.mrf.mxu0
      %v1917 = vadd.f32 0.0, %v1916
      %1918 = vmatmul.f32.gmra.mxu0 %v1837
      %v1919 = vpop.f32.mrf.mxu0
      %v1920 = vadd.f32 0.0, %v1919
      %1921 = vmatmul.f32.gmra.mxu0 %v1838
      %v1922 = vpop.f32.mrf.mxu0
      %v1923 = vadd.f32 0.0, %v1922
      %1924 = vmatmul.f32.gmra.mxu0 %v1839
      %v1925 = vpop.f32.mrf.mxu0
      %v1926 = vadd.f32 0.0, %v1925
      %1927 = vmatmul.f32.gmra.mxu0 %v1840
      %v1928 = vpop.f32.mrf.mxu0
      %v1929 = vadd.f32 0.0, %v1928
      %1930 = vmatmul.f32.gmra.mxu0 %v1841
      %v1931 = vpop.f32.mrf.mxu0
      %v1932 = vadd.f32 0.0, %v1931
      %1933 = vmatmul.f32.gmra.mxu0 %v1842
      %v1934 = vpop.f32.mrf.mxu0
      %v1935 = vadd.f32 0.0, %v1934
      %1936 = vmatmul.f32.gmra.mxu0 %v1843
      %v1937 = vpop.f32.mrf.mxu0
      %v1938 = vadd.f32 0.0, %v1937
      %1939 = vmatmul.f32.gmra.mxu0 %v1844
      %v1940 = vpop.f32.mrf.mxu0
      %v1941 = vadd.f32 0.0, %v1940
      %1942 = vmatmul.f32.gmra.mxu0 %v1845
      %v1943 = vpop.f32.mrf.mxu0
      %v1944 = vadd.f32 0.0, %v1943
      %1945 = vmatmul.f32.gmra.mxu0 %v1846
      %v1946 = vpop.f32.mrf.mxu0
      %v1947 = vadd.f32 0.0, %v1946
      %1948 = vmatmul.f32.gmra.mxu0 %v1847
      %v1949 = vpop.f32.mrf.mxu0
      %v1950 = vadd.f32 0.0, %v1949
      %1951 = vmatmul.f32.gmra.mxu0 %v1848
      %v1952 = vpop.f32.mrf.mxu0
      %v1953 = vadd.f32 0.0, %v1952
      %1954 = vmatmul.f32.gmra.mxu0 %v1849
      %v1955 = vpop.f32.mrf.mxu0
      %v1956 = vadd.f32 0.0, %v1955
      %1957 = vmatmul.f32.gmra.mxu0 %v1850
      %v1958 = vpop.f32.mrf.mxu0
      %v1959 = vadd.f32 0.0, %v1958
      %1960 = vmatmul.f32.gmra.mxu0 %v1851
      %v1961 = vpop.f32.mrf.mxu0
      %v1962 = vadd.f32 0.0, %v1961
      %1963 = vmatmul.f32.gmra.mxu0 %v1852
      %v1964 = vpop.f32.mrf.mxu0
      %v1965 = vadd.f32 0.0, %v1964
      %1966 = vmatmul.f32.gmra.mxu0 %v1853
      %v1967 = vpop.f32.mrf.mxu0
      %v1968 = vadd.f32 0.0, %v1967
      %1969 = vmatmul.f32.gmra.mxu0 %v1854
      %v1970 = vpop.f32.mrf.mxu0
      %v1971 = vadd.f32 0.0, %v1970
      %1972 = vmatmul.f32.gmra.mxu0 %v1855
      %v1973 = vpop.f32.mrf.mxu0
      %v1974 = vadd.f32 0.0, %v1973
      %1975 = vmatmul.f32.gmra.mxu0 %v1856
      %v1976 = vpop.f32.mrf.mxu0
      %v1977 = vadd.f32 0.0, %v1976
      %1978 = vmatmul.f32.gmra.mxu0 %v1857
      %v1979 = vpop.f32.mrf.mxu0
      %v1980 = vadd.f32 0.0, %v1979
      %1981 = vdwg.mxu0
      %v1982 = vadd.f32 %v1798, %v1893
      %v1983 = vadd.f32 %v1799, %v1896
      %v1984 = vadd.f32 %v1800, %v1899
      %v1985 = vadd.f32 %v1801, %v1902
      %v1986 = vadd.f32 %v1802, %v1905
      %v1987 = vadd.f32 %v1803, %v1908
      %v1988 = vadd.f32 %v1804, %v1911
      %v1989 = vadd.f32 %v1805, %v1914
      %v1990 = vadd.f32 %v1806, %v1917
      %v1991 = vadd.f32 %v1807, %v1920
      %v1992 = vadd.f32 %v1808, %v1923
      %v1993 = vadd.f32 %v1809, %v1926
      %v1994 = vadd.f32 %v1810, %v1929
      %v1995 = vadd.f32 %v1811, %v1932
      %v1996 = vadd.f32 %v1812, %v1935
      %v1997 = vadd.f32 %v1813, %v1938
      %v1998 = vadd.f32 %v1814, %v1941
      %v1999 = vadd.f32 %v1815, %v1944
      %v2000 = vadd.f32 %v1816, %v1947
      %v2001 = vadd.f32 %v1817, %v1950
      %v2002 = vadd.f32 %v1818, %v1953
      %v2003 = vadd.f32 %v1819, %v1956
      %v2004 = vadd.f32 %v1820, %v1959
      %v2005 = vadd.f32 %v1821, %v1962
      %v2006 = vadd.f32 %v1822, %v1965
      %v2007 = vadd.f32 %v1823, %v1968
      %v2008 = vadd.f32 %v1824, %v1971
      %v2009 = vadd.f32 %v1825, %v1974
      %v2010 = vadd.f32 %v1826, %v1977
      %v2011 = vadd.f32 %v1827, %v1980
      %v2012 = vld [vmem:[#allocation2 + $0x47] sm:$0xff]
      %v2013 = vld [vmem:[#allocation2 + $0x4f] sm:$0xff]
      %v2014 = vld [vmem:[#allocation2 + $0x57] sm:$0xff]
      %v2015 = vld [vmem:[#allocation2 + $0x5f] sm:$0xff]
      %v2016 = vld [vmem:[#allocation2 + $0x67] sm:$0xff]
      %v2017 = vld [vmem:[#allocation2 + $0x6f] sm:$0xff]
      %v2018 = vld [vmem:[#allocation2 + $0x77] sm:$0xff]
      %v2019 = vld [vmem:[#allocation2 + $0x7f] sm:$0xff]
      %v2020 = vld [vmem:[#allocation2 + $0x87] sm:$0xff]
      %v2021 = vld [vmem:[#allocation2 + $0x8f] sm:$0xff]
      %v2022 = vld [vmem:[#allocation2 + $0x97] sm:$0xff]
      %v2023 = vld [vmem:[#allocation2 + $0x9f] sm:$0xff]
      %v2024 = vld [vmem:[#allocation2 + $0xa7] sm:$0xff]
      %v2025 = vld [vmem:[#allocation2 + $0xaf] sm:$0xff]
      %v2026 = vld [vmem:[#allocation2 + $0xb7] sm:$0xff]
      %v2027 = vld [vmem:[#allocation2 + $0xbf] sm:$0xff]
      %v2028 = vld [vmem:[#allocation2 + $0xc7] sm:$0xff]
      %v2029 = vld [vmem:[#allocation2 + $0xcf] sm:$0xff]
      %v2030 = vld [vmem:[#allocation2 + $0xd7] sm:$0xff]
      %v2031 = vld [vmem:[#allocation2 + $0xdf] sm:$0xff]
      %v2032 = vld [vmem:[#allocation2 + $0xe7] sm:$0xff]
      %v2033 = vld [vmem:[#allocation2 + $0xef] sm:$0xff]
      %v2034 = vld [vmem:[#allocation2 + $0xf7] sm:$0xff]
      %v2035 = vld [vmem:[#allocation2 + $0xff] sm:$0xff]
      %v2036 = vld [vmem:[#allocation2 + $0x107] sm:$0xff]
      %v2037 = vld [vmem:[#allocation2 + $0x10f] sm:$0xff]
      %v2038 = vld [vmem:[#allocation2 + $0x117] sm:$0xff]
      %v2039 = vld [vmem:[#allocation2 + $0x11f] sm:$0xff]
      %v2040 = vld [vmem:[#allocation2 + $0x127] sm:$0xff]
      %v2041 = vld [vmem:[#allocation2 + $0x12f] sm:$0xff]
      %s2042 = scalar_lea.vmem %s4, 768
      %v2043 = vld [vmem:[%s2042] sm:$0xff]
      %v2044 = vld [vmem:[%s2042 + $0x8] sm:$0xff]
      %v2045 = vld [vmem:[%s2042 + $0x10] sm:$0xff]
      %v2046 = vld [vmem:[%s2042 + $0x18] sm:$0xff]
      %v2047 = vld [vmem:[%s2042 + $0x20] sm:$0xff]
      %v2048 = vld [vmem:[%s2042 + $0x28] sm:$0xff]
      %v2049 = vld [vmem:[%s2042 + $0x30] sm:$0xff]
      %v2050 = vld [vmem:[%s2042 + $0x38] sm:$0xff]
      %v2051 = vld [vmem:[%s2042 + $0x40] sm:$0xff]
      %v2052 = vld [vmem:[%s2042 + $0x48] sm:$0xff]
      %v2053 = vld [vmem:[%s2042 + $0x50] sm:$0xff]
      %v2054 = vld [vmem:[%s2042 + $0x58] sm:$0xff]
      %v2055 = vld [vmem:[%s2042 + $0x60] sm:$0xff]
      %v2056 = vld [vmem:[%s2042 + $0x68] sm:$0xff]
      %v2057 = vld [vmem:[%s2042 + $0x70] sm:$0xff]
      %v2058 = vld [vmem:[%s2042 + $0x78] sm:$0xff]
      %2059 = vmatpush.msra.mxu0 %v2058
      %2060 = vmatpush.msra.mxu0 %v2057
      %2061 = vmatpush.msra.mxu0 %v2056
      %2062 = vmatpush.msra.mxu0 %v2055
      %2063 = vmatpush.msra.mxu0 %v2054
      %2064 = vmatpush.msra.mxu0 %v2053
      %2065 = vmatpush.msra.mxu0 %v2052
      %2066 = vmatpush.msra.mxu0 %v2051
      %2067 = vmatpush.msra.mxu0 %v2050
      %2068 = vmatpush.msra.mxu0 %v2049
      %2069 = vmatpush.msra.mxu0 %v2048
      %2070 = vmatpush.msra.mxu0 %v2047
      %2071 = vmatpush.msra.mxu0 %v2046
      %2072 = vmatpush.msra.mxu0 %v2045
      %2073 = vmatpush.msra.mxu0 %v2044
      %2074 = vmatpush.msra.mxu0 %v2043
      %2075 = vmatmul.f32.gmra.mxu0 %v2012
      %v2076 = vpop.f32.mrf.mxu0
      %v2077 = vadd.f32 0.0, %v2076
      %2078 = vmatmul.f32.gmra.mxu0 %v2013
      %v2079 = vpop.f32.mrf.mxu0
      %v2080 = vadd.f32 0.0, %v2079
      %2081 = vmatmul.f32.gmra.mxu0 %v2014
      %v2082 = vpop.f32.mrf.mxu0
      %v2083 = vadd.f32 0.0, %v2082
      %2084 = vmatmul.f32.gmra.mxu0 %v2015
      %v2085 = vpop.f32.mrf.mxu0
      %v2086 = vadd.f32 0.0, %v2085
      %2087 = vmatmul.f32.gmra.mxu0 %v2016
      %v2088 = vpop.f32.mrf.mxu0
      %v2089 = vadd.f32 0.0, %v2088
      %2090 = vmatmul.f32.gmra.mxu0 %v2017
      %v2091 = vpop.f32.mrf.mxu0
      %v2092 = vadd.f32 0.0, %v2091
      %2093 = vmatmul.f32.gmra.mxu0 %v2018
      %v2094 = vpop.f32.mrf.mxu0
      %v2095 = vadd.f32 0.0, %v2094
      %2096 = vmatmul.f32.gmra.mxu0 %v2019
      %v2097 = vpop.f32.mrf.mxu0
      %v2098 = vadd.f32 0.0, %v2097
      %2099 = vmatmul.f32.gmra.mxu0 %v2020
      %v2100 = vpop.f32.mrf.mxu0
      %v2101 = vadd.f32 0.0, %v2100
      %2102 = vmatmul.f32.gmra.mxu0 %v2021
      %v2103 = vpop.f32.mrf.mxu0
      %v2104 = vadd.f32 0.0, %v2103
      %2105 = vmatmul.f32.gmra.mxu0 %v2022
      %v2106 = vpop.f32.mrf.mxu0
      %v2107 = vadd.f32 0.0, %v2106
      %2108 = vmatmul.f32.gmra.mxu0 %v2023
      %v2109 = vpop.f32.mrf.mxu0
      %v2110 = vadd.f32 0.0, %v2109
      %2111 = vmatmul.f32.gmra.mxu0 %v2024
      %v2112 = vpop.f32.mrf.mxu0
      %v2113 = vadd.f32 0.0, %v2112
      %2114 = vmatmul.f32.gmra.mxu0 %v2025
      %v2115 = vpop.f32.mrf.mxu0
      %v2116 = vadd.f32 0.0, %v2115
      %2117 = vmatmul.f32.gmra.mxu0 %v2026
      %v2118 = vpop.f32.mrf.mxu0
      %v2119 = vadd.f32 0.0, %v2118
      %2120 = vmatmul.f32.gmra.mxu0 %v2027
      %v2121 = vpop.f32.mrf.mxu0
      %v2122 = vadd.f32 0.0, %v2121
      %2123 = vmatmul.f32.gmra.mxu0 %v2028
      %v2124 = vpop.f32.mrf.mxu0
      %v2125 = vadd.f32 0.0, %v2124
      %2126 = vmatmul.f32.gmra.mxu0 %v2029
      %v2127 = vpop.f32.mrf.mxu0
      %v2128 = vadd.f32 0.0, %v2127
      %2129 = vmatmul.f32.gmra.mxu0 %v2030
      %v2130 = vpop.f32.mrf.mxu0
      %v2131 = vadd.f32 0.0, %v2130
      %2132 = vmatmul.f32.gmra.mxu0 %v2031
      %v2133 = vpop.f32.mrf.mxu0
      %v2134 = vadd.f32 0.0, %v2133
      %2135 = vmatmul.f32.gmra.mxu0 %v2032
      %v2136 = vpop.f32.mrf.mxu0
      %v2137 = vadd.f32 0.0, %v2136
      %2138 = vmatmul.f32.gmra.mxu0 %v2033
      %v2139 = vpop.f32.mrf.mxu0
      %v2140 = vadd.f32 0.0, %v2139
      %2141 = vmatmul.f32.gmra.mxu0 %v2034
      %v2142 = vpop.f32.mrf.mxu0
      %v2143 = vadd.f32 0.0, %v2142
      %2144 = vmatmul.f32.gmra.mxu0 %v2035
      %v2145 = vpop.f32.mrf.mxu0
      %v2146 = vadd.f32 0.0, %v2145
      %2147 = vmatmul.f32.gmra.mxu0 %v2036
      %v2148 = vpop.f32.mrf.mxu0
      %v2149 = vadd.f32 0.0, %v2148
      %2150 = vmatmul.f32.gmra.mxu0 %v2037
      %v2151 = vpop.f32.mrf.mxu0
      %v2152 = vadd.f32 0.0, %v2151
      %2153 = vmatmul.f32.gmra.mxu0 %v2038
      %v2154 = vpop.f32.mrf.mxu0
      %v2155 = vadd.f32 0.0, %v2154
      %2156 = vmatmul.f32.gmra.mxu0 %v2039
      %v2157 = vpop.f32.mrf.mxu0
      %v2158 = vadd.f32 0.0, %v2157
      %2159 = vmatmul.f32.gmra.mxu0 %v2040
      %v2160 = vpop.f32.mrf.mxu0
      %v2161 = vadd.f32 0.0, %v2160
      %2162 = vmatmul.f32.gmra.mxu0 %v2041
      %v2163 = vpop.f32.mrf.mxu0
      %v2164 = vadd.f32 0.0, %v2163
      %2165 = vdwg.mxu0
      %v2166 = vadd.f32 %v1982, %v2077
      %v2167 = vadd.f32 %v1983, %v2080
      %v2168 = vadd.f32 %v1984, %v2083
      %v2169 = vadd.f32 %v1985, %v2086
      %v2170 = vadd.f32 %v1986, %v2089
      %v2171 = vadd.f32 %v1987, %v2092
      %v2172 = vadd.f32 %v1988, %v2095
      %v2173 = vadd.f32 %v1989, %v2098
      %v2174 = vadd.f32 %v1990, %v2101
      %v2175 = vadd.f32 %v1991, %v2104
      %v2176 = vadd.f32 %v1992, %v2107
      %v2177 = vadd.f32 %v1993, %v2110
      %v2178 = vadd.f32 %v1994, %v2113
      %v2179 = vadd.f32 %v1995, %v2116
      %v2180 = vadd.f32 %v1996, %v2119
      %v2181 = vadd.f32 %v1997, %v2122
      %v2182 = vadd.f32 %v1998, %v2125
      %v2183 = vadd.f32 %v1999, %v2128
      %v2184 = vadd.f32 %v2000, %v2131
      %v2185 = vadd.f32 %v2001, %v2134
      %v2186 = vadd.f32 %v2002, %v2137
      %v2187 = vadd.f32 %v2003, %v2140
      %v2188 = vadd.f32 %v2004, %v2143
      %v2189 = vadd.f32 %v2005, %v2146
      %v2190 = vadd.f32 %v2006, %v2149
      %v2191 = vadd.f32 %v2007, %v2152
      %v2192 = vadd.f32 %v2008, %v2155
      %v2193 = vadd.f32 %v2009, %v2158
      %v2194 = vadd.f32 %v2010, %v2161
      %v2195 = vadd.f32 %v2011, %v2164
      %v2196 = vld [vmem:[#allocation2 + $0x48] sm:$0xff]
      %v2197 = vld [vmem:[#allocation2 + $0x50] sm:$0xff]
      %v2198 = vld [vmem:[#allocation2 + $0x58] sm:$0xff]
      %v2199 = vld [vmem:[#allocation2 + $0x60] sm:$0xff]
      %v2200 = vld [vmem:[#allocation2 + $0x68] sm:$0xff]
      %v2201 = vld [vmem:[#allocation2 + $0x70] sm:$0xff]
      %v2202 = vld [vmem:[#allocation2 + $0x78] sm:$0xff]
      %v2203 = vld [vmem:[#allocation2 + $0x80] sm:$0xff]
      %v2204 = vld [vmem:[#allocation2 + $0x88] sm:$0xff]
      %v2205 = vld [vmem:[#allocation2 + $0x90] sm:$0xff]
      %v2206 = vld [vmem:[#allocation2 + $0x98] sm:$0xff]
      %v2207 = vld [vmem:[#allocation2 + $0xa0] sm:$0xff]
      %v2208 = vld [vmem:[#allocation2 + $0xa8] sm:$0xff]
      %v2209 = vld [vmem:[#allocation2 + $0xb0] sm:$0xff]
      %v2210 = vld [vmem:[#allocation2 + $0xb8] sm:$0xff]
      %v2211 = vld [vmem:[#allocation2 + $0xc0] sm:$0xff]
      %v2212 = vld [vmem:[#allocation2 + $0xc8] sm:$0xff]
      %v2213 = vld [vmem:[#allocation2 + $0xd0] sm:$0xff]
      %v2214 = vld [vmem:[#allocation2 + $0xd8] sm:$0xff]
      %v2215 = vld [vmem:[#allocation2 + $0xe0] sm:$0xff]
      %v2216 = vld [vmem:[#allocation2 + $0xe8] sm:$0xff]
      %v2217 = vld [vmem:[#allocation2 + $0xf0] sm:$0xff]
      %v2218 = vld [vmem:[#allocation2 + $0xf8] sm:$0xff]
      %v2219 = vld [vmem:[#allocation2 + $0x100] sm:$0xff]
      %v2220 = vld [vmem:[#allocation2 + $0x108] sm:$0xff]
      %v2221 = vld [vmem:[#allocation2 + $0x110] sm:$0xff]
      %v2222 = vld [vmem:[#allocation2 + $0x118] sm:$0xff]
      %v2223 = vld [vmem:[#allocation2 + $0x120] sm:$0xff]
      %v2224 = vld [vmem:[#allocation2 + $0x128] sm:$0xff]
      %v2225 = vld [vmem:[#allocation2 + $0x130] sm:$0xff]
      %s2226 = scalar_lea.vmem %s4, 896
      %v2227 = vld [vmem:[%s2226] sm:$0xff]
      %v2228 = vld [vmem:[%s2226 + $0x8] sm:$0xff]
      %v2229 = vld [vmem:[%s2226 + $0x10] sm:$0xff]
      %v2230 = vld [vmem:[%s2226 + $0x18] sm:$0xff]
      %v2231 = vld [vmem:[%s2226 + $0x20] sm:$0xff]
      %v2232 = vld [vmem:[%s2226 + $0x28] sm:$0xff]
      %v2233 = vld [vmem:[%s2226 + $0x30] sm:$0xff]
      %v2234 = vld [vmem:[%s2226 + $0x38] sm:$0xff]
      %v2235 = vld [vmem:[%s2226 + $0x40] sm:$0xff]
      %v2236 = vld [vmem:[%s2226 + $0x48] sm:$0xff]
      %v2237 = vld [vmem:[%s2226 + $0x50] sm:$0xff]
      %v2238 = vld [vmem:[%s2226 + $0x58] sm:$0xff]
      %v2239 = vld [vmem:[%s2226 + $0x60] sm:$0xff]
      %v2240 = vld [vmem:[%s2226 + $0x68] sm:$0xff]
      %v2241 = vld [vmem:[%s2226 + $0x70] sm:$0xff]
      %v2242 = vld [vmem:[%s2226 + $0x78] sm:$0xff]
      %2243 = vmatpush.msra.mxu0 %v2242
      %2244 = vmatpush.msra.mxu0 %v2241
      %2245 = vmatpush.msra.mxu0 %v2240
      %2246 = vmatpush.msra.mxu0 %v2239
      %2247 = vmatpush.msra.mxu0 %v2238
      %2248 = vmatpush.msra.mxu0 %v2237
      %2249 = vmatpush.msra.mxu0 %v2236
      %2250 = vmatpush.msra.mxu0 %v2235
      %2251 = vmatpush.msra.mxu0 %v2234
      %2252 = vmatpush.msra.mxu0 %v2233
      %2253 = vmatpush.msra.mxu0 %v2232
      %2254 = vmatpush.msra.mxu0 %v2231
      %2255 = vmatpush.msra.mxu0 %v2230
      %2256 = vmatpush.msra.mxu0 %v2229
      %2257 = vmatpush.msra.mxu0 %v2228
      %2258 = vmatpush.msra.mxu0 %v2227
      %2259 = vmatmul.f32.gmra.mxu0 %v2196
      %v2260 = vpop.f32.mrf.mxu0
      %v2261 = vadd.f32 0.0, %v2260
      %2262 = vmatmul.f32.gmra.mxu0 %v2197
      %v2263 = vpop.f32.mrf.mxu0
      %v2264 = vadd.f32 0.0, %v2263
      %2265 = vmatmul.f32.gmra.mxu0 %v2198
      %v2266 = vpop.f32.mrf.mxu0
      %v2267 = vadd.f32 0.0, %v2266
      %2268 = vmatmul.f32.gmra.mxu0 %v2199
      %v2269 = vpop.f32.mrf.mxu0
      %v2270 = vadd.f32 0.0, %v2269
      %2271 = vmatmul.f32.gmra.mxu0 %v2200
      %v2272 = vpop.f32.mrf.mxu0
      %v2273 = vadd.f32 0.0, %v2272
      %2274 = vmatmul.f32.gmra.mxu0 %v2201
      %v2275 = vpop.f32.mrf.mxu0
      %v2276 = vadd.f32 0.0, %v2275
      %2277 = vmatmul.f32.gmra.mxu0 %v2202
      %v2278 = vpop.f32.mrf.mxu0
      %v2279 = vadd.f32 0.0, %v2278
      %2280 = vmatmul.f32.gmra.mxu0 %v2203
      %v2281 = vpop.f32.mrf.mxu0
      %v2282 = vadd.f32 0.0, %v2281
      %2283 = vmatmul.f32.gmra.mxu0 %v2204
      %v2284 = vpop.f32.mrf.mxu0
      %v2285 = vadd.f32 0.0, %v2284
      %2286 = vmatmul.f32.gmra.mxu0 %v2205
      %v2287 = vpop.f32.mrf.mxu0
      %v2288 = vadd.f32 0.0, %v2287
      %2289 = vmatmul.f32.gmra.mxu0 %v2206
      %v2290 = vpop.f32.mrf.mxu0
      %v2291 = vadd.f32 0.0, %v2290
      %2292 = vmatmul.f32.gmra.mxu0 %v2207
      %v2293 = vpop.f32.mrf.mxu0
      %v2294 = vadd.f32 0.0, %v2293
      %2295 = vmatmul.f32.gmra.mxu0 %v2208
      %v2296 = vpop.f32.mrf.mxu0
      %v2297 = vadd.f32 0.0, %v2296
      %2298 = vmatmul.f32.gmra.mxu0 %v2209
      %v2299 = vpop.f32.mrf.mxu0
      %v2300 = vadd.f32 0.0, %v2299
      %2301 = vmatmul.f32.gmra.mxu0 %v2210
      %v2302 = vpop.f32.mrf.mxu0
      %v2303 = vadd.f32 0.0, %v2302
      %2304 = vmatmul.f32.gmra.mxu0 %v2211
      %v2305 = vpop.f32.mrf.mxu0
      %v2306 = vadd.f32 0.0, %v2305
      %2307 = vmatmul.f32.gmra.mxu0 %v2212
      %v2308 = vpop.f32.mrf.mxu0
      %v2309 = vadd.f32 0.0, %v2308
      %2310 = vmatmul.f32.gmra.mxu0 %v2213
      %v2311 = vpop.f32.mrf.mxu0
      %v2312 = vadd.f32 0.0, %v2311
      %2313 = vmatmul.f32.gmra.mxu0 %v2214
      %v2314 = vpop.f32.mrf.mxu0
      %v2315 = vadd.f32 0.0, %v2314
      %2316 = vmatmul.f32.gmra.mxu0 %v2215
      %v2317 = vpop.f32.mrf.mxu0
      %v2318 = vadd.f32 0.0, %v2317
      %2319 = vmatmul.f32.gmra.mxu0 %v2216
      %v2320 = vpop.f32.mrf.mxu0
      %v2321 = vadd.f32 0.0, %v2320
      %2322 = vmatmul.f32.gmra.mxu0 %v2217
      %v2323 = vpop.f32.mrf.mxu0
      %v2324 = vadd.f32 0.0, %v2323
      %2325 = vmatmul.f32.gmra.mxu0 %v2218
      %v2326 = vpop.f32.mrf.mxu0
      %v2327 = vadd.f32 0.0, %v2326
      %2328 = vmatmul.f32.gmra.mxu0 %v2219
      %v2329 = vpop.f32.mrf.mxu0
      %v2330 = vadd.f32 0.0, %v2329
      %2331 = vmatmul.f32.gmra.mxu0 %v2220
      %v2332 = vpop.f32.mrf.mxu0
      %v2333 = vadd.f32 0.0, %v2332
      %2334 = vmatmul.f32.gmra.mxu0 %v2221
      %v2335 = vpop.f32.mrf.mxu0
      %v2336 = vadd.f32 0.0, %v2335
      %2337 = vmatmul.f32.gmra.mxu0 %v2222
      %v2338 = vpop.f32.mrf.mxu0
      %v2339 = vadd.f32 0.0, %v2338
      %2340 = vmatmul.f32.gmra.mxu0 %v2223
      %v2341 = vpop.f32.mrf.mxu0
      %v2342 = vadd.f32 0.0, %v2341
      %2343 = vmatmul.f32.gmra.mxu0 %v2224
      %v2344 = vpop.f32.mrf.mxu0
      %v2345 = vadd.f32 0.0, %v2344
      %2346 = vmatmul.f32.gmra.mxu0 %v2225
      %v2347 = vpop.f32.mrf.mxu0
      %v2348 = vadd.f32 0.0, %v2347
      %2349 = vdwg.mxu0
      %v2350 = vadd.f32 %v2166, %v2261
      %v2351 = vadd.f32 %v2167, %v2264
      %v2352 = vadd.f32 %v2168, %v2267
      %v2353 = vadd.f32 %v2169, %v2270
      %v2354 = vadd.f32 %v2170, %v2273
      %v2355 = vadd.f32 %v2171, %v2276
      %v2356 = vadd.f32 %v2172, %v2279
      %v2357 = vadd.f32 %v2173, %v2282
      %v2358 = vadd.f32 %v2174, %v2285
      %v2359 = vadd.f32 %v2175, %v2288
      %v2360 = vadd.f32 %v2176, %v2291
      %v2361 = vadd.f32 %v2177, %v2294
      %v2362 = vadd.f32 %v2178, %v2297
      %v2363 = vadd.f32 %v2179, %v2300
      %v2364 = vadd.f32 %v2180, %v2303
      %v2365 = vadd.f32 %v2181, %v2306
      %v2366 = vadd.f32 %v2182, %v2309
      %v2367 = vadd.f32 %v2183, %v2312
      %v2368 = vadd.f32 %v2184, %v2315
      %v2369 = vadd.f32 %v2185, %v2318
      %v2370 = vadd.f32 %v2186, %v2321
      %v2371 = vadd.f32 %v2187, %v2324
      %v2372 = vadd.f32 %v2188, %v2327
      %v2373 = vadd.f32 %v2189, %v2330
      %v2374 = vadd.f32 %v2190, %v2333
      %v2375 = vadd.f32 %v2191, %v2336
      %v2376 = vadd.f32 %v2192, %v2339
      %v2377 = vadd.f32 %v2193, %v2342
      %v2378 = vadd.f32 %v2194, %v2345
      %v2379 = vadd.f32 %v2195, %v2348
      %v2380 = vld [vmem:[#allocation2 + $0x49] sm:$0xff]
      %v2381 = vld [vmem:[#allocation2 + $0x51] sm:$0xff]
      %v2382 = vld [vmem:[#allocation2 + $0x59] sm:$0xff]
      %v2383 = vld [vmem:[#allocation2 + $0x61] sm:$0xff]
      %v2384 = vld [vmem:[#allocation2 + $0x69] sm:$0xff]
      %v2385 = vld [vmem:[#allocation2 + $0x71] sm:$0xff]
      %v2386 = vld [vmem:[#allocation2 + $0x79] sm:$0xff]
      %v2387 = vld [vmem:[#allocation2 + $0x81] sm:$0xff]
      %v2388 = vld [vmem:[#allocation2 + $0x89] sm:$0xff]
      %v2389 = vld [vmem:[#allocation2 + $0x91] sm:$0xff]
      %v2390 = vld [vmem:[#allocation2 + $0x99] sm:$0xff]
      %v2391 = vld [vmem:[#allocation2 + $0xa1] sm:$0xff]
      %v2392 = vld [vmem:[#allocation2 + $0xa9] sm:$0xff]
      %v2393 = vld [vmem:[#allocation2 + $0xb1] sm:$0xff]
      %v2394 = vld [vmem:[#allocation2 + $0xb9] sm:$0xff]
      %v2395 = vld [vmem:[#allocation2 + $0xc1] sm:$0xff]
      %v2396 = vld [vmem:[#allocation2 + $0xc9] sm:$0xff]
      %v2397 = vld [vmem:[#allocation2 + $0xd1] sm:$0xff]
      %v2398 = vld [vmem:[#allocation2 + $0xd9] sm:$0xff]
      %v2399 = vld [vmem:[#allocation2 + $0xe1] sm:$0xff]
      %v2400 = vld [vmem:[#allocation2 + $0xe9] sm:$0xff]
      %v2401 = vld [vmem:[#allocation2 + $0xf1] sm:$0xff]
      %v2402 = vld [vmem:[#allocation2 + $0xf9] sm:$0xff]
      %v2403 = vld [vmem:[#allocation2 + $0x101] sm:$0xff]
      %v2404 = vld [vmem:[#allocation2 + $0x109] sm:$0xff]
      %v2405 = vld [vmem:[#allocation2 + $0x111] sm:$0xff]
      %v2406 = vld [vmem:[#allocation2 + $0x119] sm:$0xff]
      %v2407 = vld [vmem:[#allocation2 + $0x121] sm:$0xff]
      %v2408 = vld [vmem:[#allocation2 + $0x129] sm:$0xff]
      %v2409 = vld [vmem:[#allocation2 + $0x131] sm:$0xff]
      %s2410 = scalar_lea.vmem %s4, 1024
      %v2411 = vld [vmem:[%s2410] sm:$0xff]
      %v2412 = vld [vmem:[%s2410 + $0x8] sm:$0xff]
      %v2413 = vld [vmem:[%s2410 + $0x10] sm:$0xff]
      %v2414 = vld [vmem:[%s2410 + $0x18] sm:$0xff]
      %v2415 = vld [vmem:[%s2410 + $0x20] sm:$0xff]
      %v2416 = vld [vmem:[%s2410 + $0x28] sm:$0xff]
      %v2417 = vld [vmem:[%s2410 + $0x30] sm:$0xff]
      %v2418 = vld [vmem:[%s2410 + $0x38] sm:$0xff]
      %v2419 = vld [vmem:[%s2410 + $0x40] sm:$0xff]
      %v2420 = vld [vmem:[%s2410 + $0x48] sm:$0xff]
      %v2421 = vld [vmem:[%s2410 + $0x50] sm:$0xff]
      %v2422 = vld [vmem:[%s2410 + $0x58] sm:$0xff]
      %v2423 = vld [vmem:[%s2410 + $0x60] sm:$0xff]
      %v2424 = vld [vmem:[%s2410 + $0x68] sm:$0xff]
      %v2425 = vld [vmem:[%s2410 + $0x70] sm:$0xff]
      %v2426 = vld [vmem:[%s2410 + $0x78] sm:$0xff]
      %2427 = vmatpush.msra.mxu0 %v2426
      %2428 = vmatpush.msra.mxu0 %v2425
      %2429 = vmatpush.msra.mxu0 %v2424
      %2430 = vmatpush.msra.mxu0 %v2423
      %2431 = vmatpush.msra.mxu0 %v2422
      %2432 = vmatpush.msra.mxu0 %v2421
      %2433 = vmatpush.msra.mxu0 %v2420
      %2434 = vmatpush.msra.mxu0 %v2419
      %2435 = vmatpush.msra.mxu0 %v2418
      %2436 = vmatpush.msra.mxu0 %v2417
      %2437 = vmatpush.msra.mxu0 %v2416
      %2438 = vmatpush.msra.mxu0 %v2415
      %2439 = vmatpush.msra.mxu0 %v2414
      %2440 = vmatpush.msra.mxu0 %v2413
      %2441 = vmatpush.msra.mxu0 %v2412
      %2442 = vmatpush.msra.mxu0 %v2411
      %2443 = vmatmul.f32.gmra.mxu0 %v2380
      %v2444 = vpop.f32.mrf.mxu0
      %v2445 = vadd.f32 0.0, %v2444
      %2446 = vmatmul.f32.gmra.mxu0 %v2381
      %v2447 = vpop.f32.mrf.mxu0
      %v2448 = vadd.f32 0.0, %v2447
      %2449 = vmatmul.f32.gmra.mxu0 %v2382
      %v2450 = vpop.f32.mrf.mxu0
      %v2451 = vadd.f32 0.0, %v2450
      %2452 = vmatmul.f32.gmra.mxu0 %v2383
      %v2453 = vpop.f32.mrf.mxu0
      %v2454 = vadd.f32 0.0, %v2453
      %2455 = vmatmul.f32.gmra.mxu0 %v2384
      %v2456 = vpop.f32.mrf.mxu0
      %v2457 = vadd.f32 0.0, %v2456
      %2458 = vmatmul.f32.gmra.mxu0 %v2385
      %v2459 = vpop.f32.mrf.mxu0
      %v2460 = vadd.f32 0.0, %v2459
      %2461 = vmatmul.f32.gmra.mxu0 %v2386
      %v2462 = vpop.f32.mrf.mxu0
      %v2463 = vadd.f32 0.0, %v2462
      %2464 = vmatmul.f32.gmra.mxu0 %v2387
      %v2465 = vpop.f32.mrf.mxu0
      %v2466 = vadd.f32 0.0, %v2465
      %2467 = vmatmul.f32.gmra.mxu0 %v2388
      %v2468 = vpop.f32.mrf.mxu0
      %v2469 = vadd.f32 0.0, %v2468
      %2470 = vmatmul.f32.gmra.mxu0 %v2389
      %v2471 = vpop.f32.mrf.mxu0
      %v2472 = vadd.f32 0.0, %v2471
      %2473 = vmatmul.f32.gmra.mxu0 %v2390
      %v2474 = vpop.f32.mrf.mxu0
      %v2475 = vadd.f32 0.0, %v2474
      %2476 = vmatmul.f32.gmra.mxu0 %v2391
      %v2477 = vpop.f32.mrf.mxu0
      %v2478 = vadd.f32 0.0, %v2477
      %2479 = vmatmul.f32.gmra.mxu0 %v2392
      %v2480 = vpop.f32.mrf.mxu0
      %v2481 = vadd.f32 0.0, %v2480
      %2482 = vmatmul.f32.gmra.mxu0 %v2393
      %v2483 = vpop.f32.mrf.mxu0
      %v2484 = vadd.f32 0.0, %v2483
      %2485 = vmatmul.f32.gmra.mxu0 %v2394
      %v2486 = vpop.f32.mrf.mxu0
      %v2487 = vadd.f32 0.0, %v2486
      %2488 = vmatmul.f32.gmra.mxu0 %v2395
      %v2489 = vpop.f32.mrf.mxu0
      %v2490 = vadd.f32 0.0, %v2489
      %2491 = vmatmul.f32.gmra.mxu0 %v2396
      %v2492 = vpop.f32.mrf.mxu0
      %v2493 = vadd.f32 0.0, %v2492
      %2494 = vmatmul.f32.gmra.mxu0 %v2397
      %v2495 = vpop.f32.mrf.mxu0
      %v2496 = vadd.f32 0.0, %v2495
      %2497 = vmatmul.f32.gmra.mxu0 %v2398
      %v2498 = vpop.f32.mrf.mxu0
      %v2499 = vadd.f32 0.0, %v2498
      %2500 = vmatmul.f32.gmra.mxu0 %v2399
      %v2501 = vpop.f32.mrf.mxu0
      %v2502 = vadd.f32 0.0, %v2501
      %2503 = vmatmul.f32.gmra.mxu0 %v2400
      %v2504 = vpop.f32.mrf.mxu0
      %v2505 = vadd.f32 0.0, %v2504
      %2506 = vmatmul.f32.gmra.mxu0 %v2401
      %v2507 = vpop.f32.mrf.mxu0
      %v2508 = vadd.f32 0.0, %v2507
      %2509 = vmatmul.f32.gmra.mxu0 %v2402
      %v2510 = vpop.f32.mrf.mxu0
      %v2511 = vadd.f32 0.0, %v2510
      %2512 = vmatmul.f32.gmra.mxu0 %v2403
      %v2513 = vpop.f32.mrf.mxu0
      %v2514 = vadd.f32 0.0, %v2513
      %2515 = vmatmul.f32.gmra.mxu0 %v2404
      %v2516 = vpop.f32.mrf.mxu0
      %v2517 = vadd.f32 0.0, %v2516
      %2518 = vmatmul.f32.gmra.mxu0 %v2405
      %v2519 = vpop.f32.mrf.mxu0
      %v2520 = vadd.f32 0.0, %v2519
      %2521 = vmatmul.f32.gmra.mxu0 %v2406
      %v2522 = vpop.f32.mrf.mxu0
      %v2523 = vadd.f32 0.0, %v2522
      %2524 = vmatmul.f32.gmra.mxu0 %v2407
      %v2525 = vpop.f32.mrf.mxu0
      %v2526 = vadd.f32 0.0, %v2525
      %2527 = vmatmul.f32.gmra.mxu0 %v2408
      %v2528 = vpop.f32.mrf.mxu0
      %v2529 = vadd.f32 0.0, %v2528
      %2530 = vmatmul.f32.gmra.mxu0 %v2409
      %v2531 = vpop.f32.mrf.mxu0
      %v2532 = vadd.f32 0.0, %v2531
      %2533 = vdwg.mxu0
      %v2534 = vadd.f32 %v2350, %v2445
      %v2535 = vadd.f32 %v2351, %v2448
      %v2536 = vadd.f32 %v2352, %v2451
      %v2537 = vadd.f32 %v2353, %v2454
      %v2538 = vadd.f32 %v2354, %v2457
      %v2539 = vadd.f32 %v2355, %v2460
      %v2540 = vadd.f32 %v2356, %v2463
      %v2541 = vadd.f32 %v2357, %v2466
      %v2542 = vadd.f32 %v2358, %v2469
      %v2543 = vadd.f32 %v2359, %v2472
      %v2544 = vadd.f32 %v2360, %v2475
      %v2545 = vadd.f32 %v2361, %v2478
      %v2546 = vadd.f32 %v2362, %v2481
      %v2547 = vadd.f32 %v2363, %v2484
      %v2548 = vadd.f32 %v2364, %v2487
      %v2549 = vadd.f32 %v2365, %v2490
      %v2550 = vadd.f32 %v2366, %v2493
      %v2551 = vadd.f32 %v2367, %v2496
      %v2552 = vadd.f32 %v2368, %v2499
      %v2553 = vadd.f32 %v2369, %v2502
      %v2554 = vadd.f32 %v2370, %v2505
      %v2555 = vadd.f32 %v2371, %v2508
      %v2556 = vadd.f32 %v2372, %v2511
      %v2557 = vadd.f32 %v2373, %v2514
      %v2558 = vadd.f32 %v2374, %v2517
      %v2559 = vadd.f32 %v2375, %v2520
      %v2560 = vadd.f32 %v2376, %v2523
      %v2561 = vadd.f32 %v2377, %v2526
      %v2562 = vadd.f32 %v2378, %v2529
      %v2563 = vadd.f32 %v2379, %v2532
      %v2564 = vld [vmem:[%s5] sm:$0x1]
      %v2566 = vperm.slane %v2564, 0
      %v2568 = vadd.f32 %v2534, %v2566
      %v2569 = vadd.f32 %v2535, %v2566
      %v2570 = vadd.f32 %v2536, %v2566
      %v2571 = vadd.f32 %v2537, %v2566
      %v2572 = vadd.f32 %v2538, %v2566
      %v2573 = vadd.f32 %v2539, %v2566
      %v2574 = vadd.f32 %v2540, %v2566
      %v2575 = vadd.f32 %v2541, %v2566
      %v2576 = vadd.f32 %v2542, %v2566
      %v2577 = vadd.f32 %v2543, %v2566
      %v2578 = vadd.f32 %v2544, %v2566
      %v2579 = vadd.f32 %v2545, %v2566
      %v2580 = vadd.f32 %v2546, %v2566
      %v2581 = vadd.f32 %v2547, %v2566
      %v2582 = vadd.f32 %v2548, %v2566
      %v2583 = vadd.f32 %v2549, %v2566
      %v2584 = vadd.f32 %v2550, %v2566
      %v2585 = vadd.f32 %v2551, %v2566
      %v2586 = vadd.f32 %v2552, %v2566
      %v2587 = vadd.f32 %v2553, %v2566
      %v2588 = vadd.f32 %v2554, %v2566
      %v2589 = vadd.f32 %v2555, %v2566
      %v2590 = vadd.f32 %v2556, %v2566
      %v2591 = vadd.f32 %v2557, %v2566
      %v2592 = vadd.f32 %v2558, %v2566
      %v2593 = vadd.f32 %v2559, %v2566
      %v2594 = vadd.f32 %v2560, %v2566
      %v2595 = vadd.f32 %v2561, %v2566
      %v2596 = vadd.f32 %v2562, %v2566
      %v2597 = vadd.f32 %v2563, %v2566
      %v2598 = vmax.f32 %v2568, 0.0
      %v2599 = vmax.f32 %v2569, 0.0
      %v2600 = vmax.f32 %v2570, 0.0
      %v2601 = vmax.f32 %v2571, 0.0
      %v2602 = vmax.f32 %v2572, 0.0
      %v2603 = vmax.f32 %v2573, 0.0
      %v2604 = vmax.f32 %v2574, 0.0
      %v2605 = vmax.f32 %v2575, 0.0
      %v2606 = vmax.f32 %v2576, 0.0
      %v2607 = vmax.f32 %v2577, 0.0
      %v2608 = vmax.f32 %v2578, 0.0
      %v2609 = vmax.f32 %v2579, 0.0
      %v2610 = vmax.f32 %v2580, 0.0
      %v2611 = vmax.f32 %v2581, 0.0
      %v2612 = vmax.f32 %v2582, 0.0
      %v2613 = vmax.f32 %v2583, 0.0
      %v2614 = vmax.f32 %v2584, 0.0
      %v2615 = vmax.f32 %v2585, 0.0
      %v2616 = vmax.f32 %v2586, 0.0
      %v2617 = vmax.f32 %v2587, 0.0
      %v2618 = vmax.f32 %v2588, 0.0
      %v2619 = vmax.f32 %v2589, 0.0
      %v2620 = vmax.f32 %v2590, 0.0
      %v2621 = vmax.f32 %v2591, 0.0
      %v2622 = vmax.f32 %v2592, 0.0
      %v2623 = vmax.f32 %v2593, 0.0
      %v2624 = vmax.f32 %v2594, 0.0
      %v2625 = vmax.f32 %v2595, 0.0
      %v2626 = vmax.f32 %v2596, 0.0
      %v2627 = vmax.f32 %v2597, 0.0
      %v2628 = vld [vmem:[%s6] sm:$0xff]
      %v2629 = vld [vmem:[%s6 + $0x8] sm:$0xff]
      %v2630 = vld [vmem:[%s6 + $0x10] sm:$0xff]
      %v2631 = vld [vmem:[%s6 + $0x18] sm:$0xff]
      %v2632 = vld [vmem:[%s6 + $0x20] sm:$0xff]
      %v2633 = vld [vmem:[%s6 + $0x28] sm:$0xff]
      %v2634 = vld [vmem:[%s6 + $0x30] sm:$0xff]
      %v2635 = vld [vmem:[%s6 + $0x38] sm:$0xff]
      %v2636 = vld [vmem:[%s6 + $0x40] sm:$0xff]
      %v2637 = vld [vmem:[%s6 + $0x48] sm:$0xff]
      %v2638 = vld [vmem:[%s6 + $0x50] sm:$0xff]
      %v2639 = vld [vmem:[%s6 + $0x58] sm:$0xff]
      %v2640 = vld [vmem:[%s6 + $0x60] sm:$0xff]
      %v2641 = vld [vmem:[%s6 + $0x68] sm:$0xff]
      %v2642 = vld [vmem:[%s6 + $0x70] sm:$0xff]
      %v2643 = vld [vmem:[%s6 + $0x78] sm:$0xff]
      %v2644 = vld [vmem:[%s7] sm:$0x1]
      %v2646 = vperm.slane %v2644, 0
      %2648 = vmatpush.msra.mxu0 %v2643
      %2649 = vmatpush.msra.mxu0 %v2642
      %2650 = vmatpush.msra.mxu0 %v2641
      %2651 = vmatpush.msra.mxu0 %v2640
      %2652 = vmatpush.msra.mxu0 %v2639
      %2653 = vmatpush.msra.mxu0 %v2638
      %2654 = vmatpush.msra.mxu0 %v2637
      %2655 = vmatpush.msra.mxu0 %v2636
      %2656 = vmatpush.msra.mxu0 %v2635
      %2657 = vmatpush.msra.mxu0 %v2634
      %2658 = vmatpush.msra.mxu0 %v2633
      %2659 = vmatpush.msra.mxu0 %v2632
      %2660 = vmatpush.msra.mxu0 %v2631
      %2661 = vmatpush.msra.mxu0 %v2630
      %2662 = vmatpush.msra.mxu0 %v2629
      %2663 = vmatpush.msra.mxu0 %v2628
      %2664 = vmatmul.f32.gmra.mxu0 %v2598
      %v2665 = vpop.f32.mrf.mxu0
      %v2666 = vadd.f32 %v2646, %v2665
      %2667 = vmatmul.f32.gmra.mxu0 %v2599
      %v2668 = vpop.f32.mrf.mxu0
      %v2669 = vadd.f32 %v2646, %v2668
      %2670 = vmatmul.f32.gmra.mxu0 %v2600
      %v2671 = vpop.f32.mrf.mxu0
      %v2672 = vadd.f32 %v2646, %v2671
      %2673 = vmatmul.f32.gmra.mxu0 %v2601
      %v2674 = vpop.f32.mrf.mxu0
      %v2675 = vadd.f32 %v2646, %v2674
      %2676 = vmatmul.f32.gmra.mxu0 %v2602
      %v2677 = vpop.f32.mrf.mxu0
      %v2678 = vadd.f32 %v2646, %v2677
      %2679 = vmatmul.f32.gmra.mxu0 %v2603
      %v2680 = vpop.f32.mrf.mxu0
      %v2681 = vadd.f32 %v2646, %v2680
      %2682 = vmatmul.f32.gmra.mxu0 %v2604
      %v2683 = vpop.f32.mrf.mxu0
      %v2684 = vadd.f32 %v2646, %v2683
      %2685 = vmatmul.f32.gmra.mxu0 %v2605
      %v2686 = vpop.f32.mrf.mxu0
      %v2687 = vadd.f32 %v2646, %v2686
      %2688 = vmatmul.f32.gmra.mxu0 %v2606
      %v2689 = vpop.f32.mrf.mxu0
      %v2690 = vadd.f32 %v2646, %v2689
      %2691 = vmatmul.f32.gmra.mxu0 %v2607
      %v2692 = vpop.f32.mrf.mxu0
      %v2693 = vadd.f32 %v2646, %v2692
      %2694 = vmatmul.f32.gmra.mxu0 %v2608
      %v2695 = vpop.f32.mrf.mxu0
      %v2696 = vadd.f32 %v2646, %v2695
      %2697 = vmatmul.f32.gmra.mxu0 %v2609
      %v2698 = vpop.f32.mrf.mxu0
      %v2699 = vadd.f32 %v2646, %v2698
      %2700 = vmatmul.f32.gmra.mxu0 %v2610
      %v2701 = vpop.f32.mrf.mxu0
      %v2702 = vadd.f32 %v2646, %v2701
      %2703 = vmatmul.f32.gmra.mxu0 %v2611
      %v2704 = vpop.f32.mrf.mxu0
      %v2705 = vadd.f32 %v2646, %v2704
      %2706 = vmatmul.f32.gmra.mxu0 %v2612
      %v2707 = vpop.f32.mrf.mxu0
      %v2708 = vadd.f32 %v2646, %v2707
      %2709 = vmatmul.f32.gmra.mxu0 %v2613
      %v2710 = vpop.f32.mrf.mxu0
      %v2711 = vadd.f32 %v2646, %v2710
      %2712 = vmatmul.f32.gmra.mxu0 %v2614
      %v2713 = vpop.f32.mrf.mxu0
      %v2714 = vadd.f32 %v2646, %v2713
      %2715 = vmatmul.f32.gmra.mxu0 %v2615
      %v2716 = vpop.f32.mrf.mxu0
      %v2717 = vadd.f32 %v2646, %v2716
      %2718 = vmatmul.f32.gmra.mxu0 %v2616
      %v2719 = vpop.f32.mrf.mxu0
      %v2720 = vadd.f32 %v2646, %v2719
      %2721 = vmatmul.f32.gmra.mxu0 %v2617
      %v2722 = vpop.f32.mrf.mxu0
      %v2723 = vadd.f32 %v2646, %v2722
      %2724 = vmatmul.f32.gmra.mxu0 %v2618
      %v2725 = vpop.f32.mrf.mxu0
      %v2726 = vadd.f32 %v2646, %v2725
      %2727 = vmatmul.f32.gmra.mxu0 %v2619
      %v2728 = vpop.f32.mrf.mxu0
      %v2729 = vadd.f32 %v2646, %v2728
      %2730 = vmatmul.f32.gmra.mxu0 %v2620
      %v2731 = vpop.f32.mrf.mxu0
      %v2732 = vadd.f32 %v2646, %v2731
      %2733 = vmatmul.f32.gmra.mxu0 %v2621
      %v2734 = vpop.f32.mrf.mxu0
      %v2735 = vadd.f32 %v2646, %v2734
      %2736 = vmatmul.f32.gmra.mxu0 %v2622
      %v2737 = vpop.f32.mrf.mxu0
      %v2738 = vadd.f32 %v2646, %v2737
      %2739 = vmatmul.f32.gmra.mxu0 %v2623
      %v2740 = vpop.f32.mrf.mxu0
      %v2741 = vadd.f32 %v2646, %v2740
      %2742 = vmatmul.f32.gmra.mxu0 %v2624
      %v2743 = vpop.f32.mrf.mxu0
      %v2744 = vadd.f32 %v2646, %v2743
      %2745 = vmatmul.f32.gmra.mxu0 %v2625
      %v2746 = vpop.f32.mrf.mxu0
      %v2747 = vadd.f32 %v2646, %v2746
      %2748 = vmatmul.f32.gmra.mxu0 %v2626
      %v2749 = vpop.f32.mrf.mxu0
      %v2750 = vadd.f32 %v2646, %v2749
      %2751 = vmatmul.f32.gmra.mxu0 %v2627
      %v2752 = vpop.f32.mrf.mxu0
      %v2753 = vadd.f32 %v2646, %v2752
      %2754 = vdwg.mxu0
      %s2755 = sadd.s32 %s383, 48
      %s2756 = scalar_lea.vmem %s372, %s2755
      %v2757 = vld [vmem:[%s2756] sm:$0xff]
      %v2758 = vld [vmem:[%s2756 + $0x8] sm:$0xff]
      %v2759 = vld [vmem:[%s2756 + $0x10] sm:$0xff]
      %v2760 = vld [vmem:[%s2756 + $0x18] sm:$0xff]
      %v2761 = vld [vmem:[%s2756 + $0x20] sm:$0xff]
      %v2762 = vld [vmem:[%s2756 + $0x28] sm:$0xff]
      %v2763 = vld [vmem:[%s2756 + $0x30] sm:$0xff]
      %v2764 = vld [vmem:[%s2756 + $0x38] sm:$0xff]
      %v2765 = vld [vmem:[%s2756 + $0x40] sm:$0xff]
      %v2766 = vld [vmem:[%s2756 + $0x48] sm:$0xff]
      %v2767 = vld [vmem:[%s2756 + $0x50] sm:$0xff]
      %v2768 = vld [vmem:[%s2756 + $0x58] sm:$0xff]
      %v2769 = vld [vmem:[%s2756 + $0x60] sm:$0xff]
      %v2770 = vld [vmem:[%s2756 + $0x68] sm:$0xff]
      %v2771 = vld [vmem:[%s2756 + $0x70] sm:$0xff]
      %v2772 = vld [vmem:[%s2756 + $0x78] sm:$0xff]
      %v2773 = vld [vmem:[%s2756 + $0x80] sm:$0xff]
      %v2774 = vld [vmem:[%s2756 + $0x88] sm:$0xff]
      %v2775 = vld [vmem:[%s2756 + $0x90] sm:$0xff]
      %v2776 = vld [vmem:[%s2756 + $0x98] sm:$0xff]
      %v2777 = vld [vmem:[%s2756 + $0xa0] sm:$0xff]
      %v2778 = vld [vmem:[%s2756 + $0xa8] sm:$0xff]
      %v2779 = vld [vmem:[%s2756 + $0xb0] sm:$0xff]
      %v2780 = vld [vmem:[%s2756 + $0xb8] sm:$0xff]
      %v2781 = vld [vmem:[%s2756 + $0xc0] sm:$0xff]
      %v2782 = vld [vmem:[%s2756 + $0xc8] sm:$0xff]
      %v2783 = vld [vmem:[%s2756 + $0xd0] sm:$0xff]
      %v2784 = vld [vmem:[%s2756 + $0xd8] sm:$0xff]
      %v2785 = vld [vmem:[%s2756 + $0xe0] sm:$0xff]
      %v2786 = vld [vmem:[%s2756 + $0xe8] sm:$0xff]
      %v2787 = vld [vmem:[%s8] sm:$0xff]
      %v2788 = vld [vmem:[%s8 + $0x8] sm:$0xff]
      %v2789 = vld [vmem:[%s8 + $0x10] sm:$0xff]
      %v2790 = vld [vmem:[%s8 + $0x18] sm:$0xff]
      %v2791 = vld [vmem:[%s8 + $0x20] sm:$0xff]
      %v2792 = vld [vmem:[%s8 + $0x28] sm:$0xff]
      %v2793 = vld [vmem:[%s8 + $0x30] sm:$0xff]
      %v2794 = vld [vmem:[%s8 + $0x38] sm:$0xff]
      %v2795 = vld [vmem:[%s8 + $0x40] sm:$0xff]
      %v2796 = vld [vmem:[%s8 + $0x48] sm:$0xff]
      %v2797 = vld [vmem:[%s8 + $0x50] sm:$0xff]
      %v2798 = vld [vmem:[%s8 + $0x58] sm:$0xff]
      %v2799 = vld [vmem:[%s8 + $0x60] sm:$0xff]
      %v2800 = vld [vmem:[%s8 + $0x68] sm:$0xff]
      %v2801 = vld [vmem:[%s8 + $0x70] sm:$0xff]
      %v2802 = vld [vmem:[%s8 + $0x78] sm:$0xff]
      %v2803 = vld [vmem:[%s9] sm:$0x1]
      %v2805 = vperm.slane %v2803, 0
      %2807 = vmatpush.msra.mxu0 %v2802
      %2808 = vmatpush.msra.mxu0 %v2801
      %2809 = vmatpush.msra.mxu0 %v2800
      %2810 = vmatpush.msra.mxu0 %v2799
      %2811 = vmatpush.msra.mxu0 %v2798
      %2812 = vmatpush.msra.mxu0 %v2797
      %2813 = vmatpush.msra.mxu0 %v2796
      %2814 = vmatpush.msra.mxu0 %v2795
      %2815 = vmatpush.msra.mxu0 %v2794
      %2816 = vmatpush.msra.mxu0 %v2793
      %2817 = vmatpush.msra.mxu0 %v2792
      %2818 = vmatpush.msra.mxu0 %v2791
      %2819 = vmatpush.msra.mxu0 %v2790
      %2820 = vmatpush.msra.mxu0 %v2789
      %2821 = vmatpush.msra.mxu0 %v2788
      %2822 = vmatpush.msra.mxu0 %v2787
      %2823 = vmatmul.f32.gmra.mxu0 %v2757
      %v2824 = vpop.f32.mrf.mxu0
      %v2825 = vadd.f32 %v2805, %v2824
      %2826 = vmatmul.f32.gmra.mxu0 %v2758
      %v2827 = vpop.f32.mrf.mxu0
      %v2828 = vadd.f32 %v2805, %v2827
      %2829 = vmatmul.f32.gmra.mxu0 %v2759
      %v2830 = vpop.f32.mrf.mxu0
      %v2831 = vadd.f32 %v2805, %v2830
      %2832 = vmatmul.f32.gmra.mxu0 %v2760
      %v2833 = vpop.f32.mrf.mxu0
      %v2834 = vadd.f32 %v2805, %v2833
      %2835 = vmatmul.f32.gmra.mxu0 %v2761
      %v2836 = vpop.f32.mrf.mxu0
      %v2837 = vadd.f32 %v2805, %v2836
      %2838 = vmatmul.f32.gmra.mxu0 %v2762
      %v2839 = vpop.f32.mrf.mxu0
      %v2840 = vadd.f32 %v2805, %v2839
      %2841 = vmatmul.f32.gmra.mxu0 %v2763
      %v2842 = vpop.f32.mrf.mxu0
      %v2843 = vadd.f32 %v2805, %v2842
      %2844 = vmatmul.f32.gmra.mxu0 %v2764
      %v2845 = vpop.f32.mrf.mxu0
      %v2846 = vadd.f32 %v2805, %v2845
      %2847 = vmatmul.f32.gmra.mxu0 %v2765
      %v2848 = vpop.f32.mrf.mxu0
      %v2849 = vadd.f32 %v2805, %v2848
      %2850 = vmatmul.f32.gmra.mxu0 %v2766
      %v2851 = vpop.f32.mrf.mxu0
      %v2852 = vadd.f32 %v2805, %v2851
      %2853 = vmatmul.f32.gmra.mxu0 %v2767
      %v2854 = vpop.f32.mrf.mxu0
      %v2855 = vadd.f32 %v2805, %v2854
      %2856 = vmatmul.f32.gmra.mxu0 %v2768
      %v2857 = vpop.f32.mrf.mxu0
      %v2858 = vadd.f32 %v2805, %v2857
      %2859 = vmatmul.f32.gmra.mxu0 %v2769
      %v2860 = vpop.f32.mrf.mxu0
      %v2861 = vadd.f32 %v2805, %v2860
      %2862 = vmatmul.f32.gmra.mxu0 %v2770
      %v2863 = vpop.f32.mrf.mxu0
      %v2864 = vadd.f32 %v2805, %v2863
      %2865 = vmatmul.f32.gmra.mxu0 %v2771
      %v2866 = vpop.f32.mrf.mxu0
      %v2867 = vadd.f32 %v2805, %v2866
      %2868 = vmatmul.f32.gmra.mxu0 %v2772
      %v2869 = vpop.f32.mrf.mxu0
      %v2870 = vadd.f32 %v2805, %v2869
      %2871 = vmatmul.f32.gmra.mxu0 %v2773
      %v2872 = vpop.f32.mrf.mxu0
      %v2873 = vadd.f32 %v2805, %v2872
      %2874 = vmatmul.f32.gmra.mxu0 %v2774
      %v2875 = vpop.f32.mrf.mxu0
      %v2876 = vadd.f32 %v2805, %v2875
      %2877 = vmatmul.f32.gmra.mxu0 %v2775
      %v2878 = vpop.f32.mrf.mxu0
      %v2879 = vadd.f32 %v2805, %v2878
      %2880 = vmatmul.f32.gmra.mxu0 %v2776
      %v2881 = vpop.f32.mrf.mxu0
      %v2882 = vadd.f32 %v2805, %v2881
      %2883 = vmatmul.f32.gmra.mxu0 %v2777
      %v2884 = vpop.f32.mrf.mxu0
      %v2885 = vadd.f32 %v2805, %v2884
      %2886 = vmatmul.f32.gmra.mxu0 %v2778
      %v2887 = vpop.f32.mrf.mxu0
      %v2888 = vadd.f32 %v2805, %v2887
      %2889 = vmatmul.f32.gmra.mxu0 %v2779
      %v2890 = vpop.f32.mrf.mxu0
      %v2891 = vadd.f32 %v2805, %v2890
      %2892 = vmatmul.f32.gmra.mxu0 %v2780
      %v2893 = vpop.f32.mrf.mxu0
      %v2894 = vadd.f32 %v2805, %v2893
      %2895 = vmatmul.f32.gmra.mxu0 %v2781
      %v2896 = vpop.f32.mrf.mxu0
      %v2897 = vadd.f32 %v2805, %v2896
      %2898 = vmatmul.f32.gmra.mxu0 %v2782
      %v2899 = vpop.f32.mrf.mxu0
      %v2900 = vadd.f32 %v2805, %v2899
      %2901 = vmatmul.f32.gmra.mxu0 %v2783
      %v2902 = vpop.f32.mrf.mxu0
      %v2903 = vadd.f32 %v2805, %v2902
      %2904 = vmatmul.f32.gmra.mxu0 %v2784
      %v2905 = vpop.f32.mrf.mxu0
      %v2906 = vadd.f32 %v2805, %v2905
      %2907 = vmatmul.f32.gmra.mxu0 %v2785
      %v2908 = vpop.f32.mrf.mxu0
      %v2909 = vadd.f32 %v2805, %v2908
      %2910 = vmatmul.f32.gmra.mxu0 %v2786
      %v2911 = vpop.f32.mrf.mxu0
      %v2912 = vadd.f32 %v2805, %v2911
      %2913 = vdwg.mxu0
      %v2914 = vadd.f32 %v2666, %v2825
      %v2915 = vadd.f32 %v2669, %v2828
      %v2916 = vadd.f32 %v2672, %v2831
      %v2917 = vadd.f32 %v2675, %v2834
      %v2918 = vadd.f32 %v2678, %v2837
      %v2919 = vadd.f32 %v2681, %v2840
      %v2920 = vadd.f32 %v2684, %v2843
      %v2921 = vadd.f32 %v2687, %v2846
      %v2922 = vadd.f32 %v2690, %v2849
      %v2923 = vadd.f32 %v2693, %v2852
      %v2924 = vadd.f32 %v2696, %v2855
      %v2925 = vadd.f32 %v2699, %v2858
      %v2926 = vadd.f32 %v2702, %v2861
      %v2927 = vadd.f32 %v2705, %v2864
      %v2928 = vadd.f32 %v2708, %v2867
      %v2929 = vadd.f32 %v2711, %v2870
      %v2930 = vadd.f32 %v2714, %v2873
      %v2931 = vadd.f32 %v2717, %v2876
      %v2932 = vadd.f32 %v2720, %v2879
      %v2933 = vadd.f32 %v2723, %v2882
      %v2934 = vadd.f32 %v2726, %v2885
      %v2935 = vadd.f32 %v2729, %v2888
      %v2936 = vadd.f32 %v2732, %v2891
      %v2937 = vadd.f32 %v2735, %v2894
      %v2938 = vadd.f32 %v2738, %v2897
      %v2939 = vadd.f32 %v2741, %v2900
      %v2940 = vadd.f32 %v2744, %v2903
      %v2941 = vadd.f32 %v2747, %v2906
      %v2942 = vadd.f32 %v2750, %v2909
      %v2943 = vadd.f32 %v2753, %v2912
      %v2944 = vmax.f32 %v2914, 0.0
      %v2945 = vmax.f32 %v2915, 0.0
      %v2946 = vmax.f32 %v2916, 0.0
      %v2947 = vmax.f32 %v2917, 0.0
      %v2948 = vmax.f32 %v2918, 0.0
      %v2949 = vmax.f32 %v2919, 0.0
      %v2950 = vmax.f32 %v2920, 0.0
      %v2951 = vmax.f32 %v2921, 0.0
      %v2952 = vmax.f32 %v2922, 0.0
      %v2953 = vmax.f32 %v2923, 0.0
      %v2954 = vmax.f32 %v2924, 0.0
      %v2955 = vmax.f32 %v2925, 0.0
      %v2956 = vmax.f32 %v2926, 0.0
      %v2957 = vmax.f32 %v2927, 0.0
      %v2958 = vmax.f32 %v2928, 0.0
      %v2959 = vmax.f32 %v2929, 0.0
      %v2960 = vmax.f32 %v2930, 0.0
      %v2961 = vmax.f32 %v2931, 0.0
      %v2962 = vmax.f32 %v2932, 0.0
      %v2963 = vmax.f32 %v2933, 0.0
      %v2964 = vmax.f32 %v2934, 0.0
      %v2965 = vmax.f32 %v2935, 0.0
      %v2966 = vmax.f32 %v2936, 0.0
      %v2967 = vmax.f32 %v2937, 0.0
      %v2968 = vmax.f32 %v2938, 0.0
      %v2969 = vmax.f32 %v2939, 0.0
      %v2970 = vmax.f32 %v2940, 0.0
      %v2971 = vmax.f32 %v2941, 0.0
      %v2972 = vmax.f32 %v2942, 0.0
      %v2973 = vmax.f32 %v2943, 0.0
      %2974 = vst [vmem:[%s381] sm:$0xff] %v2944
      %2975 = vst [vmem:[%s381 + $0x8] sm:$0xff] %v2945
      %2976 = vst [vmem:[%s381 + $0x10] sm:$0xff] %v2946
      %2977 = vst [vmem:[%s381 + $0x18] sm:$0xff] %v2947
      %2978 = vst [vmem:[%s381 + $0x20] sm:$0xff] %v2948
      %2979 = vst [vmem:[%s381 + $0x28] sm:$0xff] %v2949
      %2980 = vst [vmem:[%s381 + $0x30] sm:$0xff] %v2950
      %2981 = vst [vmem:[%s381 + $0x38] sm:$0xff] %v2951
      %2982 = vst [vmem:[%s381 + $0x40] sm:$0xff] %v2952
      %2983 = vst [vmem:[%s381 + $0x48] sm:$0xff] %v2953
      %2984 = vst [vmem:[%s381 + $0x50] sm:$0xff] %v2954
      %2985 = vst [vmem:[%s381 + $0x58] sm:$0xff] %v2955
      %2986 = vst [vmem:[%s381 + $0x60] sm:$0xff] %v2956
      %2987 = vst [vmem:[%s381 + $0x68] sm:$0xff] %v2957
      %2988 = vst [vmem:[%s381 + $0x70] sm:$0xff] %v2958
      %2989 = vst [vmem:[%s381 + $0x78] sm:$0xff] %v2959
      %2990 = vst [vmem:[%s381 + $0x80] sm:$0xff] %v2960
      %2991 = vst [vmem:[%s381 + $0x88] sm:$0xff] %v2961
      %2992 = vst [vmem:[%s381 + $0x90] sm:$0xff] %v2962
      %2993 = vst [vmem:[%s381 + $0x98] sm:$0xff] %v2963
      %2994 = vst [vmem:[%s381 + $0xa0] sm:$0xff] %v2964
      %2995 = vst [vmem:[%s381 + $0xa8] sm:$0xff] %v2965
      %2996 = vst [vmem:[%s381 + $0xb0] sm:$0xff] %v2966
      %2997 = vst [vmem:[%s381 + $0xb8] sm:$0xff] %v2967
      %2998 = vst [vmem:[%s381 + $0xc0] sm:$0xff] %v2968
      %2999 = vst [vmem:[%s381 + $0xc8] sm:$0xff] %v2969
      %3000 = vst [vmem:[%s381 + $0xd0] sm:$0xff] %v2970
      %3001 = vst [vmem:[%s381 + $0xd8] sm:$0xff] %v2971
      %3002 = vst [vmem:[%s381 + $0xe0] sm:$0xff] %v2972
      %3003 = vst [vmem:[%s381 + $0xe8] sm:$0xff] %v2973
      %s3004 = smul.u32 30, %s26
      %p3005 = scmp.lt.s32.totalorder %s25, 1
      %s3006 = scalar_select %p3005, %s25, 1
      %p3007 = scmp.lt.s32.totalorder %s3004, 59
      %s3008 = scalar_select %p3007, %s3004, 59
      %s3009 = smul.addr %s3006, 60
      %s3010 = sadd.s32 %s3008, %s3009
      %s3011 = smul.addr %s3010, 8
      %s3012 = scalar_lea.vmem %s10, %s3011
      // Predicated region
      $region61: #{res_bottleneck_forward.1} parent=59 // pred_check
        %p3013 = pneg %p268
      $region62: #{res_bottleneck_forward.1} parent=59 // pred_check_branch
        %3015 = sbr.rel (%p3013) target = $region64
      $region63: #{res_bottleneck_forward.1} parent=59 // pred_region
        %s3016 = smul.u32 30, %s26
      $region64: #{res_bottleneck_forward.1} parent=59 // pred_fallthru
        _
    $region60: #{res_bottleneck_forward.1} parent=5 // pred_fallthru
      _
    %p3017 = scmp.le.s32.totalorder 2, %s16
    // Predicated region
    $region65: #{res_bottleneck_forward.1} parent=5 // pred_check
      %p3018 = pneg %p3017
    $region66: #{res_bottleneck_forward.1} parent=5 // pred_check_branch
      %3020 = sbr.rel (%p3018) target = $region68
    $region67: #{res_bottleneck_forward.1} parent=5 // pred_region
      %s3021 = ssub.s32 %s16, 2
      // Predicated region
      $region69: #{res_bottleneck_forward.1} parent=67 // pred_check
        %p3022 = pneg %p274
      $region70: #{res_bottleneck_forward.1} parent=67 // pred_check_branch
        %3024 = sbr.rel (%p3022) target = $region72
      $region71: #{res_bottleneck_forward.1} parent=67 // pred_region
        %s3025 = smul.u32 30, %s28
        %p3026 = scmp.lt.s32.totalorder %s27, 1
        %s3027 = scalar_select %p3026, %s27, 1
        %p3028 = scmp.lt.s32.totalorder %s3025, 59
        %s3029 = scalar_select %p3028, %s3025, 59
        %s3030 = smul.addr %s3027, 60
        %s3031 = sadd.s32 %s3029, %s3030
        %s3032 = smul.addr %s3031, 8
        %s3033 = scalar_lea.vmem %s10, %s3032
      $region72: #{res_bottleneck_forward.1} parent=67 // pred_fallthru
        _
    $region68: #{res_bottleneck_forward.1} parent=5 // pred_fallthru
      _
  $region6: #{res_bottleneck_forward.1} parent=0 // loop_footer
    %s20 = sadd.s32 1, %s16
  $region7: #{res_bottleneck_forward.1} parent=0 // loop_footer_branch
    %15 = sbr.rel target = $region3
  $region8: #{res_bottleneck_forward.1} parent=0 // loop_exit
    _

</llo_original>
